<compile_context>
chip_gen: v6e
topology: v6e:2x2x1
jax: 0.10.0
libtpu: 0.0.40
codegen_flags: <defaults>
</compile_context>

<pallas_src>
import jax
import jax.numpy as jnp
from jax import lax
from jax.experimental import pallas as pl
from jax.experimental.pallas import tpu as pltpu


def lstm_fc_kernel(len_ref, x_ref,
                   wih0_ref, whh0_ref, b0_ref,
                   w1_ref, b1_ref,
                   wfc_ref, bfc_ref,
                   out_ref,
                   xg_ref):
    T, B, D = x_ref.shape
    H = whh0_ref.shape[0]
    G = 4 * H

    # ---- hoisted, time-independent input projection of layer 0 ----
    # One large (T*B, D) x (D, 4H) matmul; b0 folded in once here.
    xg = (jnp.dot(x_ref[...].reshape(T * B, D), wih0_ref[...],
                  preferred_element_type=jnp.float32)
          + b0_ref[...])
    xg_ref[...] = xg.reshape(T, B, G)

    lengths = len_ref[...]                              # (B, 1) int32
    b1_full = jnp.broadcast_to(b1_ref[...], (B, G))     # hoist broadcast out of loop

    def gates_to_hc(gates, c_prev):
        i = jax.nn.sigmoid(gates[:, 0 * H:1 * H])
        f = jax.nn.sigmoid(gates[:, 1 * H:2 * H])
        g = jnp.tanh(gates[:, 2 * H:3 * H])
        o = jax.nn.sigmoid(gates[:, 3 * H:4 * H])
        c_new = f * c_prev + i * g
        h_new = o * jnp.tanh(c_new)
        return h_new, c_new

    def step(t, carry):
        h0, c0, h1, c1 = carry
        mask = t < lengths                              # (B, 1) valid-step mask

        # ---- LSTM layer 0: only the recurrent matmul remains per step ----
        g0 = xg_ref[t] + jnp.dot(h0, whh0_ref[...],
                                 preferred_element_type=jnp.float32)
        h0n, c0n = gates_to_hc(g0, c0)
        c0 = jnp.where(mask, c0n, c0)
        h0 = jnp.where(mask, h0n, h0)

        # ---- LSTM layer 1: fused [h0 | h1] @ [W_ih1 ; W_hh1], K = 2H ----
        # (inter-layer dropout is identity in eval mode)
        hcat = jnp.concatenate([h0, h1], axis=-1)       # (B, 2H)
        g1 = (jnp.dot(hcat, w1_ref[...], preferred_element_type=jnp.float32)
              + b1_full)
        h1n, c1n = gates_to_hc(g1, c1)
        c1 = jnp.where(mask, c1n, c1)
        h1 = jnp.where(mask, h1n, h1)
        return (h0, c0, h1, c1)

    z = jnp.zeros((B, H), jnp.float32)
    h0, c0, h1, c1 = lax.fori_loop(0, T, step, (z, z, z, z), unroll=True)

    # ---- fc(hidden[-1])  (dropout before fc is identity in eval) ----
    out_ref[...] = (jnp.dot(h1, wfc_ref[...], preferred_element_type=jnp.float32)
                    + bfc_ref[...]).astype(out_ref.dtype)


def playlist_lstm_forward(x, lengths, params):
    """x: (B, T, D) batch-first, lengths: (B,) int32. Returns (B, output_dim)."""
    B, T, D = x.shape
    H = params["whh0"].shape[0]
    O = params["wfc"].shape[1]

    x_tm = jnp.transpose(x, (1, 0, 2))                  # time-major (T, B, D)
    len2d = lengths.astype(jnp.int32).reshape(B, 1)
    # Fuse layer-1 input & recurrent weights along K once, outside the kernel.
    w1 = jnp.concatenate([params["wih1"], params["whh1"]], axis=0)   # (2H, 4H)

    vmem_spec = lambda: pl.BlockSpec(memory_space=pltpu.MemorySpace.VMEM)

    return pl.pallas_call(
        lstm_fc_kernel,
        out_shape=jax.ShapeDtypeStruct((B, O), jnp.float32),
        in_specs=[vmem_spec() for _ in range(9)],
        out_specs=vmem_spec(),
        scratch_shapes=[pltpu.VMEM((T, B, 4 * H), jnp.float32)],   # hoisted x-projection
    )(len2d, x_tm,
      params["wih0"], params["whh0"], params["b0"],
      w1, params["b1"],
      params["wfc"], params["bfc"])


def reference_forward(x, lengths, params):
    """Pure-JAX reference of the masked 2-layer LSTM + fc."""
    B, T, D = x.shape
    H = params["whh0"].shape[0]
    h0 = jnp.zeros((B, H)); c0 = jnp.zeros((B, H))
    h1 = jnp.zeros((B, H)); c1 = jnp.zeros((B, H))

    def step(gates, c, H):
        i = jax.nn.sigmoid(gates[:, 0 * H:1 * H])
        f = jax.nn.sigmoid(gates[:, 1 * H:2 * H])
        g = jnp.tanh(gates[:, 2 * H:3 * H])
        o = jax.nn.sigmoid(gates[:, 3 * H:4 * H])
        cn = f * c + i * g
        return o * jnp.tanh(cn), cn

    for t in range(T):
        m = (t < lengths)[:, None]
        g0 = x[:, t] @ params["wih0"] + h0 @ params["whh0"] + params["b0"]
        hn0, cn0 = step(g0, c0, H)
        h0 = jnp.where(m, hn0, h0); c0 = jnp.where(m, cn0, c0)
        g1 = h0 @ params["wih1"] + h1 @ params["whh1"] + params["b1"]
        hn1, cn1 = step(g1, c1, H)
        h1 = jnp.where(m, hn1, h1); c1 = jnp.where(m, cn1, c1)
    return h1 @ params["wfc"] + params["bfc"]


def init_params(key, D, H, O):
    ks = jax.random.split(key, 8)
    s = 0.05
    return {
        "wih0": s * jax.random.normal(ks[0], (D, 4 * H), jnp.float32),
        "whh0": s * jax.random.normal(ks[1], (H, 4 * H), jnp.float32),
        "b0":   s * jax.random.normal(ks[2], (1, 4 * H), jnp.float32),
        "wih1": s * jax.random.normal(ks[3], (H, 4 * H), jnp.float32),
        "whh1": s * jax.random.normal(ks[4], (H, 4 * H), jnp.float32),
        "b1":   s * jax.random.normal(ks[5], (1, 4 * H), jnp.float32),
        "wfc":  s * jax.random.normal(ks[6], (H, O), jnp.float32),
        "bfc":  s * jax.random.normal(ks[7], (1, O), jnp.float32),
    }


if __name__ == "__main__":
    # Small shapes consistent with the module: (batch, seq, input_dim)
    B, T, D, H, O = 8, 6, 128, 128, 128
    key = jax.random.PRNGKey(0)
    kx, kp = jax.random.split(key)

    x = jax.random.normal(kx, (B, T, D), jnp.float32)
    lengths = jnp.array([6, 4, 2, 5, 1, 3, 6, 2], dtype=jnp.int32)
    params = init_params(kp, D, H, O)

    out = playlist_lstm_forward(x, lengths, params)
    out = jax.block_until_ready(out)

    ref = reference_forward(x, lengths, params)
    assert out.shape == (B, O)
    assert jnp.allclose(out, ref, atol=2e-4, rtol=2e-4), "mismatch vs reference"

    print("KERNEL_OK")
</pallas_src>

<mosaic_0001>
module attributes {stable_mosaic.version = 11 : i64} {
  func.func @lstm_fc_kernel(%arg0: memref<8x1xi32, #tpu.memory_space<vmem>>, %arg1: memref<6x8x128xf32, #tpu.memory_space<vmem>>, %arg2: memref<128x512xf32, #tpu.memory_space<vmem>>, %arg3: memref<128x512xf32, #tpu.memory_space<vmem>>, %arg4: memref<1x512xf32, #tpu.memory_space<vmem>>, %arg5: memref<256x512xf32, #tpu.memory_space<vmem>>, %arg6: memref<1x512xf32, #tpu.memory_space<vmem>>, %arg7: memref<128x128xf32, #tpu.memory_space<vmem>>, %arg8: memref<1x128xf32, #tpu.memory_space<vmem>>, %arg9: memref<8x128xf32, #tpu.memory_space<vmem>>, %arg10: memref<6x8x512xf32, #tpu.memory_space<vmem>>) attributes {dimension_semantics = [], scalar_prefetch = 0 : i64, scratch_operands = 1 : i64, tpu.core_type = #tpu.core_type<tc>} {
    %c0 = arith.constant 0 : index
    %c0_0 = arith.constant 0 : index
    %c0_1 = arith.constant 0 : index
    %0 = vector.load %arg1[%c0, %c0_0, %c0_1] : memref<6x8x128xf32, #tpu.memory_space<vmem>>, vector<6x8x128xf32>
    %1 = vector.shape_cast %0 : vector<6x8x128xf32> to vector<48x128xf32>
    %c0_2 = arith.constant 0 : index
    %c0_3 = arith.constant 0 : index
    %2 = vector.load %arg2[%c0_2, %c0_3] : memref<128x512xf32, #tpu.memory_space<vmem>>, vector<128x512xf32>
    %cst = arith.constant dense<0.000000e+00> : vector<48x512xf32>
    %3 = tpu.matmul %1, %2, %cst {dimension_numbers = #tpu.dot_dimension_numbers<[1], [0], [0], [1], [0, 0, 1, 1], [], []>} : vector<48x128xf32>, vector<128x512xf32>, vector<48x512xf32> -> vector<48x512xf32>
    %c0_4 = arith.constant 0 : index
    %c0_5 = arith.constant 0 : index
    %4 = vector.load %arg4[%c0_4, %c0_5] : memref<1x512xf32, #tpu.memory_space<vmem>>, vector<1x512xf32>
    %5 = vector.broadcast %4 : vector<1x512xf32> to vector<48x512xf32>
    %6 = arith.addf %3, %5 : vector<48x512xf32>
    %7 = vector.shape_cast %6 : vector<48x512xf32> to vector<6x8x512xf32>
    %c0_6 = arith.constant 0 : index
    %c0_7 = arith.constant 0 : index
    %c0_8 = arith.constant 0 : index
    %8 = vector.load %arg10[%c0_6, %c0_7, %c0_8] : memref<6x8x512xf32, #tpu.memory_space<vmem>>, vector<6x8x512xf32>
    tpu.vector_store %arg10[%c0_6, %c0_7, %c0_8], %7 {strides = array<i32>} : memref<6x8x512xf32, #tpu.memory_space<vmem>>, vector<6x8x512xf32>,
    %c0_9 = arith.constant 0 : index
    %c0_10 = arith.constant 0 : index
    %9 = vector.load %arg0[%c0_9, %c0_10] : memref<8x1xi32, #tpu.memory_space<vmem>>, vector<8x1xi32>
    %c0_11 = arith.constant 0 : index
    %c0_12 = arith.constant 0 : index
    %10 = vector.load %arg6[%c0_11, %c0_12] : memref<1x512xf32, #tpu.memory_space<vmem>>, vector<1x512xf32>
    %11 = vector.shape_cast %10 : vector<1x512xf32> to vector<1x512xf32>
    %12 = vector.broadcast %11 : vector<1x512xf32> to vector<8x512xf32>
    %cst_13 = arith.constant 0.000000e+00 : f32
    %13 = vector.broadcast %cst_13 : f32 to vector<8x128xf32>
    %c0_i32 = arith.constant 0 : i32
    %14 = vector.broadcast %c0_i32 : i32 to vector<8x1xi32>
    %15 = arith.cmpi slt, %14, %9 : vector<8x1xi32>
    %16 = arith.index_cast %c0_i32 : i32 to index
    %c0_14 = arith.constant 0 : index
    %c0_15 = arith.constant 0 : index
    %17 = vector.load %arg10[%16, %c0_14, %c0_15] : memref<6x8x512xf32, #tpu.memory_space<vmem>>, vector<1x8x512xf32>
    %18 = vector.shape_cast %17 : vector<1x8x512xf32> to vector<8x512xf32>
    %c0_16 = arith.constant 0 : index
    %c0_17 = arith.constant 0 : index
    %19 = vector.load %arg3[%c0_16, %c0_17] : memref<128x512xf32, #tpu.memory_space<vmem>>, vector<128x512xf32>
    %cst_18 = arith.constant dense<0.000000e+00> : vector<8x512xf32>
    %20 = tpu.matmul %13, %19, %cst_18 {dimension_numbers = #tpu.dot_dimension_numbers<[1], [0], [0], [1], [0, 0, 1, 1], [], []>} : vector<8x128xf32>, vector<128x512xf32>, vector<8x512xf32> -> vector<8x512xf32>
    %21 = arith.addf %18, %20 : vector<8x512xf32>
    %22 = vector.extract_strided_slice %21 {offsets = [0, 0], sizes = [8, 128], strides = [1, 1]} : vector<8x512xf32> to vector<8x128xf32>
    %23 = arith.negf %22 : vector<8x128xf32>
    %24 = math.exp %23 : vector<8x128xf32>
    %cst_19 = arith.constant 1.000000e+00 : f32
    %25 = vector.broadcast %cst_19 : f32 to vector<8x128xf32>
    %26 = arith.addf %25, %24 : vector<8x128xf32>
    %27 = arith.divf %25, %26 : vector<8x128xf32>
    %28 = vector.extract_strided_slice %21 {offsets = [0, 128], sizes = [8, 128], strides = [1, 1]} : vector<8x512xf32> to vector<8x128xf32>
    %29 = arith.negf %28 : vector<8x128xf32>
    %30 = math.exp %29 : vector<8x128xf32>
    %cst_20 = arith.constant 1.000000e+00 : f32
    %31 = vector.broadcast %cst_20 : f32 to vector<8x128xf32>
    %32 = arith.addf %31, %30 : vector<8x128xf32>
    %33 = arith.divf %31, %32 : vector<8x128xf32>
    %34 = vector.extract_strided_slice %21 {offsets = [0, 256], sizes = [8, 128], strides = [1, 1]} : vector<8x512xf32> to vector<8x128xf32>
    %35 = math.tanh %34 : vector<8x128xf32>
    %36 = vector.extract_strided_slice %21 {offsets = [0, 384], sizes = [8, 128], strides = [1, 1]} : vector<8x512xf32> to vector<8x128xf32>
    %37 = arith.negf %36 : vector<8x128xf32>
    %38 = math.exp %37 : vector<8x128xf32>
    %cst_21 = arith.constant 1.000000e+00 : f32
    %39 = vector.broadcast %cst_21 : f32 to vector<8x128xf32>
    %40 = arith.addf %39, %38 : vector<8x128xf32>
    %41 = arith.divf %39, %40 : vector<8x128xf32>
    %42 = arith.mulf %33, %13 : vector<8x128xf32>
    %43 = arith.mulf %27, %35 : vector<8x128xf32>
    %44 = arith.addf %42, %43 : vector<8x128xf32>
    %45 = math.tanh %44 : vector<8x128xf32>
    %46 = arith.mulf %41, %45 : vector<8x128xf32>
    %47 = vector.shape_cast %15 : vector<8x1xi1> to vector<8x1xi1>
    %48 = vector.broadcast %47 : vector<8x1xi1> to vector<8x128xi1>
    %49 = arith.select %48, %44, %13 : vector<8x128xi1>, vector<8x128xf32>
    %50 = vector.shape_cast %15 : vector<8x1xi1> to vector<8x1xi1>
    %51 = vector.broadcast %50 : vector<8x1xi1> to vector<8x128xi1>
    %52 = arith.select %51, %46, %13 : vector<8x128xi1>, vector<8x128xf32>
    %53 = tpu.concatenate %52, %13 in 1 : vector<8x128xf32>, vector<8x128xf32> -> vector<8x256xf32>
    %c0_22 = arith.constant 0 : index
    %c0_23 = arith.constant 0 : index
    %54 = vector.load %arg5[%c0_22, %c0_23] : memref<256x512xf32, #tpu.memory_space<vmem>>, vector<256x512xf32>
    %cst_24 = arith.constant dense<0.000000e+00> : vector<8x512xf32>
    %55 = tpu.matmul %53, %54, %cst_24 {dimension_numbers = #tpu.dot_dimension_numbers<[1], [0], [0], [1], [0, 0, 1, 1], [], []>} : vector<8x256xf32>, vector<256x512xf32>, vector<8x512xf32> -> vector<8x512xf32>
    %56 = arith.addf %55, %12 : vector<8x512xf32>
    %57 = vector.extract_strided_slice %56 {offsets = [0, 0], sizes = [8, 128], strides = [1, 1]} : vector<8x512xf32> to vector<8x128xf32>
    %58 = arith.negf %57 : vector<8x128xf32>
    %59 = math.exp %58 : vector<8x128xf32>
    %cst_25 = arith.constant 1.000000e+00 : f32
    %60 = vector.broadcast %cst_25 : f32 to vector<8x128xf32>
    %61 = arith.addf %60, %59 : vector<8x128xf32>
    %62 = arith.divf %60, %61 : vector<8x128xf32>
    %63 = vector.extract_strided_slice %56 {offsets = [0, 128], sizes = [8, 128], strides = [1, 1]} : vector<8x512xf32> to vector<8x128xf32>
    %64 = arith.negf %63 : vector<8x128xf32>
    %65 = math.exp %64 : vector<8x128xf32>
    %cst_26 = arith.constant 1.000000e+00 : f32
    %66 = vector.broadcast %cst_26 : f32 to vector<8x128xf32>
    %67 = arith.addf %66, %65 : vector<8x128xf32>
    %68 = arith.divf %66, %67 : vector<8x128xf32>
    %69 = vector.extract_strided_slice %56 {offsets = [0, 256], sizes = [8, 128], strides = [1, 1]} : vector<8x512xf32> to vector<8x128xf32>
    %70 = math.tanh %69 : vector<8x128xf32>
    %71 = vector.extract_strided_slice %56 {offsets = [0, 384], sizes = [8, 128], strides = [1, 1]} : vector<8x512xf32> to vector<8x128xf32>
    %72 = arith.negf %71 : vector<8x128xf32>
    %73 = math.exp %72 : vector<8x128xf32>
    %cst_27 = arith.constant 1.000000e+00 : f32
    %74 = vector.broadcast %cst_27 : f32 to vector<8x128xf32>
    %75 = arith.addf %74, %73 : vector<8x128xf32>
    %76 = arith.divf %74, %75 : vector<8x128xf32>
    %77 = arith.mulf %68, %13 : vector<8x128xf32>
    %78 = arith.mulf %62, %70 : vector<8x128xf32>
    %79 = arith.addf %77, %78 : vector<8x128xf32>
    %80 = math.tanh %79 : vector<8x128xf32>
    %81 = arith.mulf %76, %80 : vector<8x128xf32>
    %82 = vector.shape_cast %15 : vector<8x1xi1> to vector<8x1xi1>
    %83 = vector.broadcast %82 : vector<8x1xi1> to vector<8x128xi1>
    %84 = arith.select %83, %79, %13 : vector<8x128xi1>, vector<8x128xf32>
    %85 = vector.shape_cast %15 : vector<8x1xi1> to vector<8x1xi1>
    %86 = vector.broadcast %85 : vector<8x1xi1> to vector<8x128xi1>
    %87 = arith.select %86, %81, %13 : vector<8x128xi1>, vector<8x128xf32>
    %c1_i32 = arith.constant 1 : i32
    %88 = vector.broadcast %c1_i32 : i32 to vector<8x1xi32>
    %89 = arith.cmpi slt, %88, %9 : vector<8x1xi32>
    %90 = arith.index_cast %c1_i32 : i32 to index
    %c0_28 = arith.constant 0 : index
    %c0_29 = arith.constant 0 : index
    %91 = vector.load %arg10[%90, %c0_28, %c0_29] : memref<6x8x512xf32, #tpu.memory_space<vmem>>, vector<1x8x512xf32>
    %92 = vector.shape_cast %91 : vector<1x8x512xf32> to vector<8x512xf32>
    %c0_30 = arith.constant 0 : index
    %c0_31 = arith.constant 0 : index
    %93 = vector.load %arg3[%c0_30, %c0_31] : memref<128x512xf32, #tpu.memory_space<vmem>>, vector<128x512xf32>
    %cst_32 = arith.constant dense<0.000000e+00> : vector<8x512xf32>
    %94 = tpu.matmul %52, %93, %cst_32 {dimension_numbers = #tpu.dot_dimension_numbers<[1], [0], [0], [1], [0, 0, 1, 1], [], []>} : vector<8x128xf32>, vector<128x512xf32>, vector<8x512xf32> -> vector<8x512xf32>
    %95 = arith.addf %92, %94 : vector<8x512xf32>
    %96 = vector.extract_strided_slice %95 {offsets = [0, 0], sizes = [8, 128], strides = [1, 1]} : vector<8x512xf32> to vector<8x128xf32>
    %97 = arith.negf %96 : vector<8x128xf32>
    %98 = math.exp %97 : vector<8x128xf32>
    %cst_33 = arith.constant 1.000000e+00 : f32
    %99 = vector.broadcast %cst_33 : f32 to vector<8x128xf32>
    %100 = arith.addf %99, %98 : vector<8x128xf32>
    %101 = arith.divf %99, %100 : vector<8x128xf32>
    %102 = vector.extract_strided_slice %95 {offsets = [0, 128], sizes = [8, 128], strides = [1, 1]} : vector<8x512xf32> to vector<8x128xf32>
    %103 = arith.negf %102 : vector<8x128xf32>
    %104 = math.exp %103 : vector<8x128xf32>
    %cst_34 = arith.constant 1.000000e+00 : f32
    %105 = vector.broadcast %cst_34 : f32 to vector<8x128xf32>
    %106 = arith.addf %105, %104 : vector<8x128xf32>
    %107 = arith.divf %105, %106 : vector<8x128xf32>
    %108 = vector.extract_strided_slice %95 {offsets = [0, 256], sizes = [8, 128], strides = [1, 1]} : vector<8x512xf32> to vector<8x128xf32>
    %109 = math.tanh %108 : vector<8x128xf32>
    %110 = vector.extract_strided_slice %95 {offsets = [0, 384], sizes = [8, 128], strides = [1, 1]} : vector<8x512xf32> to vector<8x128xf32>
    %111 = arith.negf %110 : vector<8x128xf32>
    %112 = math.exp %111 : vector<8x128xf32>
    %cst_35 = arith.constant 1.000000e+00 : f32
    %113 = vector.broadcast %cst_35 : f32 to vector<8x128xf32>
    %114 = arith.addf %113, %112 : vector<8x128xf32>
    %115 = arith.divf %113, %114 : vector<8x128xf32>
    %116 = arith.mulf %107, %49 : vector<8x128xf32>
    %117 = arith.mulf %101, %109 : vector<8x128xf32>
    %118 = arith.addf %116, %117 : vector<8x128xf32>
    %119 = math.tanh %118 : vector<8x128xf32>
    %120 = arith.mulf %115, %119 : vector<8x128xf32>
    %121 = vector.shape_cast %89 : vector<8x1xi1> to vector<8x1xi1>
    %122 = vector.broadcast %121 : vector<8x1xi1> to vector<8x128xi1>
    %123 = arith.select %122, %118, %49 : vector<8x128xi1>, vector<8x128xf32>
    %124 = vector.shape_cast %89 : vector<8x1xi1> to vector<8x1xi1>
    %125 = vector.broadcast %124 : vector<8x1xi1> to vector<8x128xi1>
    %126 = arith.select %125, %120, %52 : vector<8x128xi1>, vector<8x128xf32>
    %127 = tpu.concatenate %126, %87 in 1 : vector<8x128xf32>, vector<8x128xf32> -> vector<8x256xf32>
    %c0_36 = arith.constant 0 : index
    %c0_37 = arith.constant 0 : index
    %128 = vector.load %arg5[%c0_36, %c0_37] : memref<256x512xf32, #tpu.memory_space<vmem>>, vector<256x512xf32>
    %cst_38 = arith.constant dense<0.000000e+00> : vector<8x512xf32>
    %129 = tpu.matmul %127, %128, %cst_38 {dimension_numbers = #tpu.dot_dimension_numbers<[1], [0], [0], [1], [0, 0, 1, 1], [], []>} : vector<8x256xf32>, vector<256x512xf32>, vector<8x512xf32> -> vector<8x512xf32>
    %130 = arith.addf %129, %12 : vector<8x512xf32>
    %131 = vector.extract_strided_slice %130 {offsets = [0, 0], sizes = [8, 128], strides = [1, 1]} : vector<8x512xf32> to vector<8x128xf32>
    %132 = arith.negf %131 : vector<8x128xf32>
    %133 = math.exp %132 : vector<8x128xf32>
    %cst_39 = arith.constant 1.000000e+00 : f32
    %134 = vector.broadcast %cst_39 : f32 to vector<8x128xf32>
    %135 = arith.addf %134, %133 : vector<8x128xf32>
    %136 = arith.divf %134, %135 : vector<8x128xf32>
    %137 = vector.extract_strided_slice %130 {offsets = [0, 128], sizes = [8, 128], strides = [1, 1]} : vector<8x512xf32> to vector<8x128xf32>
    %138 = arith.negf %137 : vector<8x128xf32>
    %139 = math.exp %138 : vector<8x128xf32>
    %cst_40 = arith.constant 1.000000e+00 : f32
    %140 = vector.broadcast %cst_40 : f32 to vector<8x128xf32>
    %141 = arith.addf %140, %139 : vector<8x128xf32>
    %142 = arith.divf %140, %141 : vector<8x128xf32>
    %143 = vector.extract_strided_slice %130 {offsets = [0, 256], sizes = [8, 128], strides = [1, 1]} : vector<8x512xf32> to vector<8x128xf32>
    %144 = math.tanh %143 : vector<8x128xf32>
    %145 = vector.extract_strided_slice %130 {offsets = [0, 384], sizes = [8, 128], strides = [1, 1]} : vector<8x512xf32> to vector<8x128xf32>
    %146 = arith.negf %145 : vector<8x128xf32>
    %147 = math.exp %146 : vector<8x128xf32>
    %cst_41 = arith.constant 1.000000e+00 : f32
    %148 = vector.broadcast %cst_41 : f32 to vector<8x128xf32>
    %149 = arith.addf %148, %147 : vector<8x128xf32>
    %150 = arith.divf %148, %149 : vector<8x128xf32>
    %151 = arith.mulf %142, %84 : vector<8x128xf32>
    %152 = arith.mulf %136, %144 : vector<8x128xf32>
    %153 = arith.addf %151, %152 : vector<8x128xf32>
    %154 = math.tanh %153 : vector<8x128xf32>
    %155 = arith.mulf %150, %154 : vector<8x128xf32>
    %156 = vector.shape_cast %89 : vector<8x1xi1> to vector<8x1xi1>
    %157 = vector.broadcast %156 : vector<8x1xi1> to vector<8x128xi1>
    %158 = arith.select %157, %153, %84 : vector<8x128xi1>, vector<8x128xf32>
    %159 = vector.shape_cast %89 : vector<8x1xi1> to vector<8x1xi1>
    %160 = vector.broadcast %159 : vector<8x1xi1> to vector<8x128xi1>
    %161 = arith.select %160, %155, %87 : vector<8x128xi1>, vector<8x128xf32>
    %c2_i32 = arith.constant 2 : i32
    %162 = vector.broadcast %c2_i32 : i32 to vector<8x1xi32>
    %163 = arith.cmpi slt, %162, %9 : vector<8x1xi32>
    %164 = arith.index_cast %c2_i32 : i32 to index
    %c0_42 = arith.constant 0 : index
    %c0_43 = arith.constant 0 : index
    %165 = vector.load %arg10[%164, %c0_42, %c0_43] : memref<6x8x512xf32, #tpu.memory_space<vmem>>, vector<1x8x512xf32>
    %166 = vector.shape_cast %165 : vector<1x8x512xf32> to vector<8x512xf32>
    %c0_44 = arith.constant 0 : index
    %c0_45 = arith.constant 0 : index
    %167 = vector.load %arg3[%c0_44, %c0_45] : memref<128x512xf32, #tpu.memory_space<vmem>>, vector<128x512xf32>
    %cst_46 = arith.constant dense<0.000000e+00> : vector<8x512xf32>
    %168 = tpu.matmul %126, %167, %cst_46 {dimension_numbers = #tpu.dot_dimension_numbers<[1], [0], [0], [1], [0, 0, 1, 1], [], []>} : vector<8x128xf32>, vector<128x512xf32>, vector<8x512xf32> -> vector<8x512xf32>
    %169 = arith.addf %166, %168 : vector<8x512xf32>
    %170 = vector.extract_strided_slice %169 {offsets = [0, 0], sizes = [8, 128], strides = [1, 1]} : vector<8x512xf32> to vector<8x128xf32>
    %171 = arith.negf %170 : vector<8x128xf32>
    %172 = math.exp %171 : vector<8x128xf32>
    %cst_47 = arith.constant 1.000000e+00 : f32
    %173 = vector.broadcast %cst_47 : f32 to vector<8x128xf32>
    %174 = arith.addf %173, %172 : vector<8x128xf32>
    %175 = arith.divf %173, %174 : vector<8x128xf32>
    %176 = vector.extract_strided_slice %169 {offsets = [0, 128], sizes = [8, 128], strides = [1, 1]} : vector<8x512xf32> to vector<8x128xf32>
    %177 = arith.negf %176 : vector<8x128xf32>
    %178 = math.exp %177 : vector<8x128xf32>
    %cst_48 = arith.constant 1.000000e+00 : f32
    %179 = vector.broadcast %cst_48 : f32 to vector<8x128xf32>
    %180 = arith.addf %179, %178 : vector<8x128xf32>
    %181 = arith.divf %179, %180 : vector<8x128xf32>
    %182 = vector.extract_strided_slice %169 {offsets = [0, 256], sizes = [8, 128], strides = [1, 1]} : vector<8x512xf32> to vector<8x128xf32>
    %183 = math.tanh %182 : vector<8x128xf32>
    %184 = vector.extract_strided_slice %169 {offsets = [0, 384], sizes = [8, 128], strides = [1, 1]} : vector<8x512xf32> to vector<8x128xf32>
    %185 = arith.negf %184 : vector<8x128xf32>
    %186 = math.exp %185 : vector<8x128xf32>
    %cst_49 = arith.constant 1.000000e+00 : f32
    %187 = vector.broadcast %cst_49 : f32 to vector<8x128xf32>
    %188 = arith.addf %187, %186 : vector<8x128xf32>
    %189 = arith.divf %187, %188 : vector<8x128xf32>
    %190 = arith.mulf %181, %123 : vector<8x128xf32>
    %191 = arith.mulf %175, %183 : vector<8x128xf32>
    %192 = arith.addf %190, %191 : vector<8x128xf32>
    %193 = math.tanh %192 : vector<8x128xf32>
    %194 = arith.mulf %189, %193 : vector<8x128xf32>
    %195 = vector.shape_cast %163 : vector<8x1xi1> to vector<8x1xi1>
    %196 = vector.broadcast %195 : vector<8x1xi1> to vector<8x128xi1>
    %197 = arith.select %196, %192, %123 : vector<8x128xi1>, vector<8x128xf32>
    %198 = vector.shape_cast %163 : vector<8x1xi1> to vector<8x1xi1>
    %199 = vector.broadcast %198 : vector<8x1xi1> to vector<8x128xi1>
    %200 = arith.select %199, %194, %126 : vector<8x128xi1>, vector<8x128xf32>
    %201 = tpu.concatenate %200, %161 in 1 : vector<8x128xf32>, vector<8x128xf32> -> vector<8x256xf32>
    %c0_50 = arith.constant 0 : index
    %c0_51 = arith.constant 0 : index
    %202 = vector.load %arg5[%c0_50, %c0_51] : memref<256x512xf32, #tpu.memory_space<vmem>>, vector<256x512xf32>
    %cst_52 = arith.constant dense<0.000000e+00> : vector<8x512xf32>
    %203 = tpu.matmul %201, %202, %cst_52 {dimension_numbers = #tpu.dot_dimension_numbers<[1], [0], [0], [1], [0, 0, 1, 1], [], []>} : vector<8x256xf32>, vector<256x512xf32>, vector<8x512xf32> -> vector<8x512xf32>
    %204 = arith.addf %203, %12 : vector<8x512xf32>
    %205 = vector.extract_strided_slice %204 {offsets = [0, 0], sizes = [8, 128], strides = [1, 1]} : vector<8x512xf32> to vector<8x128xf32>
    %206 = arith.negf %205 : vector<8x128xf32>
    %207 = math.exp %206 : vector<8x128xf32>
    %cst_53 = arith.constant 1.000000e+00 : f32
    %208 = vector.broadcast %cst_53 : f32 to vector<8x128xf32>
    %209 = arith.addf %208, %207 : vector<8x128xf32>
    %210 = arith.divf %208, %209 : vector<8x128xf32>
    %211 = vector.extract_strided_slice %204 {offsets = [0, 128], sizes = [8, 128], strides = [1, 1]} : vector<8x512xf32> to vector<8x128xf32>
    %212 = arith.negf %211 : vector<8x128xf32>
    %213 = math.exp %212 : vector<8x128xf32>
    %cst_54 = arith.constant 1.000000e+00 : f32
    %214 = vector.broadcast %cst_54 : f32 to vector<8x128xf32>
    %215 = arith.addf %214, %213 : vector<8x128xf32>
    %216 = arith.divf %214, %215 : vector<8x128xf32>
    %217 = vector.extract_strided_slice %204 {offsets = [0, 256], sizes = [8, 128], strides = [1, 1]} : vector<8x512xf32> to vector<8x128xf32>
    %218 = math.tanh %217 : vector<8x128xf32>
    %219 = vector.extract_strided_slice %204 {offsets = [0, 384], sizes = [8, 128], strides = [1, 1]} : vector<8x512xf32> to vector<8x128xf32>
    %220 = arith.negf %219 : vector<8x128xf32>
    %221 = math.exp %220 : vector<8x128xf32>
    %cst_55 = arith.constant 1.000000e+00 : f32
    %222 = vector.broadcast %cst_55 : f32 to vector<8x128xf32>
    %223 = arith.addf %222, %221 : vector<8x128xf32>
    %224 = arith.divf %222, %223 : vector<8x128xf32>
    %225 = arith.mulf %216, %158 : vector<8x128xf32>
    %226 = arith.mulf %210, %218 : vector<8x128xf32>
    %227 = arith.addf %225, %226 : vector<8x128xf32>
    %228 = math.tanh %227 : vector<8x128xf32>
    %229 = arith.mulf %224, %228 : vector<8x128xf32>
    %230 = vector.shape_cast %163 : vector<8x1xi1> to vector<8x1xi1>
    %231 = vector.broadcast %230 : vector<8x1xi1> to vector<8x128xi1>
    %232 = arith.select %231, %227, %158 : vector<8x128xi1>, vector<8x128xf32>
    %233 = vector.shape_cast %163 : vector<8x1xi1> to vector<8x1xi1>
    %234 = vector.broadcast %233 : vector<8x1xi1> to vector<8x128xi1>
    %235 = arith.select %234, %229, %161 : vector<8x128xi1>, vector<8x128xf32>
    %c3_i32 = arith.constant 3 : i32
    %236 = vector.broadcast %c3_i32 : i32 to vector<8x1xi32>
    %237 = arith.cmpi slt, %236, %9 : vector<8x1xi32>
    %238 = arith.index_cast %c3_i32 : i32 to index
    %c0_56 = arith.constant 0 : index
    %c0_57 = arith.constant 0 : index
    %239 = vector.load %arg10[%238, %c0_56, %c0_57] : memref<6x8x512xf32, #tpu.memory_space<vmem>>, vector<1x8x512xf32>
    %240 = vector.shape_cast %239 : vector<1x8x512xf32> to vector<8x512xf32>
    %c0_58 = arith.constant 0 : index
    %c0_59 = arith.constant 0 : index
    %241 = vector.load %arg3[%c0_58, %c0_59] : memref<128x512xf32, #tpu.memory_space<vmem>>, vector<128x512xf32>
    %cst_60 = arith.constant dense<0.000000e+00> : vector<8x512xf32>
    %242 = tpu.matmul %200, %241, %cst_60 {dimension_numbers = #tpu.dot_dimension_numbers<[1], [0], [0], [1], [0, 0, 1, 1], [], []>} : vector<8x128xf32>, vector<128x512xf32>, vector<8x512xf32> -> vector<8x512xf32>
    %243 = arith.addf %240, %242 : vector<8x512xf32>
    %244 = vector.extract_strided_slice %243 {offsets = [0, 0], sizes = [8, 128], strides = [1, 1]} : vector<8x512xf32> to vector<8x128xf32>
    %245 = arith.negf %244 : vector<8x128xf32>
    %246 = math.exp %245 : vector<8x128xf32>
    %cst_61 = arith.constant 1.000000e+00 : f32
    %247 = vector.broadcast %cst_61 : f32 to vector<8x128xf32>
    %248 = arith.addf %247, %246 : vector<8x128xf32>
    %249 = arith.divf %247, %248 : vector<8x128xf32>
    %250 = vector.extract_strided_slice %243 {offsets = [0, 128], sizes = [8, 128], strides = [1, 1]} : vector<8x512xf32> to vector<8x128xf32>
    %251 = arith.negf %250 : vector<8x128xf32>
    %252 = math.exp %251 : vector<8x128xf32>
    %cst_62 = arith.constant 1.000000e+00 : f32
    %253 = vector.broadcast %cst_62 : f32 to vector<8x128xf32>
    %254 = arith.addf %253, %252 : vector<8x128xf32>
    %255 = arith.divf %253, %254 : vector<8x128xf32>
    %256 = vector.extract_strided_slice %243 {offsets = [0, 256], sizes = [8, 128], strides = [1, 1]} : vector<8x512xf32> to vector<8x128xf32>
    %257 = math.tanh %256 : vector<8x128xf32>
    %258 = vector.extract_strided_slice %243 {offsets = [0, 384], sizes = [8, 128], strides = [1, 1]} : vector<8x512xf32> to vector<8x128xf32>
    %259 = arith.negf %258 : vector<8x128xf32>
    %260 = math.exp %259 : vector<8x128xf32>
    %cst_63 = arith.constant 1.000000e+00 : f32
    %261 = vector.broadcast %cst_63 : f32 to vector<8x128xf32>
    %262 = arith.addf %261, %260 : vector<8x128xf32>
    %263 = arith.divf %261, %262 : vector<8x128xf32>
    %264 = arith.mulf %255, %197 : vector<8x128xf32>
    %265 = arith.mulf %249, %257 : vector<8x128xf32>
    %266 = arith.addf %264, %265 : vector<8x128xf32>
    %267 = math.tanh %266 : vector<8x128xf32>
    %268 = arith.mulf %263, %267 : vector<8x128xf32>
    %269 = vector.shape_cast %237 : vector<8x1xi1> to vector<8x1xi1>
    %270 = vector.broadcast %269 : vector<8x1xi1> to vector<8x128xi1>
    %271 = arith.select %270, %266, %197 : vector<8x128xi1>, vector<8x128xf32>
    %272 = vector.shape_cast %237 : vector<8x1xi1> to vector<8x1xi1>
    %273 = vector.broadcast %272 : vector<8x1xi1> to vector<8x128xi1>
    %274 = arith.select %273, %268, %200 : vector<8x128xi1>, vector<8x128xf32>
    %275 = tpu.concatenate %274, %235 in 1 : vector<8x128xf32>, vector<8x128xf32> -> vector<8x256xf32>
    %c0_64 = arith.constant 0 : index
    %c0_65 = arith.constant 0 : index
    %276 = vector.load %arg5[%c0_64, %c0_65] : memref<256x512xf32, #tpu.memory_space<vmem>>, vector<256x512xf32>
    %cst_66 = arith.constant dense<0.000000e+00> : vector<8x512xf32>
    %277 = tpu.matmul %275, %276, %cst_66 {dimension_numbers = #tpu.dot_dimension_numbers<[1], [0], [0], [1], [0, 0, 1, 1], [], []>} : vector<8x256xf32>, vector<256x512xf32>, vector<8x512xf32> -> vector<8x512xf32>
    %278 = arith.addf %277, %12 : vector<8x512xf32>
    %279 = vector.extract_strided_slice %278 {offsets = [0, 0], sizes = [8, 128], strides = [1, 1]} : vector<8x512xf32> to vector<8x128xf32>
    %280 = arith.negf %279 : vector<8x128xf32>
    %281 = math.exp %280 : vector<8x128xf32>
    %cst_67 = arith.constant 1.000000e+00 : f32
    %282 = vector.broadcast %cst_67 : f32 to vector<8x128xf32>
    %283 = arith.addf %282, %281 : vector<8x128xf32>
    %284 = arith.divf %282, %283 : vector<8x128xf32>
    %285 = vector.extract_strided_slice %278 {offsets = [0, 128], sizes = [8, 128], strides = [1, 1]} : vector<8x512xf32> to vector<8x128xf32>
    %286 = arith.negf %285 : vector<8x128xf32>
    %287 = math.exp %286 : vector<8x128xf32>
    %cst_68 = arith.constant 1.000000e+00 : f32
    %288 = vector.broadcast %cst_68 : f32 to vector<8x128xf32>
    %289 = arith.addf %288, %287 : vector<8x128xf32>
    %290 = arith.divf %288, %289 : vector<8x128xf32>
    %291 = vector.extract_strided_slice %278 {offsets = [0, 256], sizes = [8, 128], strides = [1, 1]} : vector<8x512xf32> to vector<8x128xf32>
    %292 = math.tanh %291 : vector<8x128xf32>
    %293 = vector.extract_strided_slice %278 {offsets = [0, 384], sizes = [8, 128], strides = [1, 1]} : vector<8x512xf32> to vector<8x128xf32>
    %294 = arith.negf %293 : vector<8x128xf32>
    %295 = math.exp %294 : vector<8x128xf32>
    %cst_69 = arith.constant 1.000000e+00 : f32
    %296 = vector.broadcast %cst_69 : f32 to vector<8x128xf32>
    %297 = arith.addf %296, %295 : vector<8x128xf32>
    %298 = arith.divf %296, %297 : vector<8x128xf32>
    %299 = arith.mulf %290, %232 : vector<8x128xf32>
    %300 = arith.mulf %284, %292 : vector<8x128xf32>
    %301 = arith.addf %299, %300 : vector<8x128xf32>
    %302 = math.tanh %301 : vector<8x128xf32>
    %303 = arith.mulf %298, %302 : vector<8x128xf32>
    %304 = vector.shape_cast %237 : vector<8x1xi1> to vector<8x1xi1>
    %305 = vector.broadcast %304 : vector<8x1xi1> to vector<8x128xi1>
    %306 = arith.select %305, %301, %232 : vector<8x128xi1>, vector<8x128xf32>
    %307 = vector.shape_cast %237 : vector<8x1xi1> to vector<8x1xi1>
    %308 = vector.broadcast %307 : vector<8x1xi1> to vector<8x128xi1>
    %309 = arith.select %308, %303, %235 : vector<8x128xi1>, vector<8x128xf32>
    %c4_i32 = arith.constant 4 : i32
    %310 = vector.broadcast %c4_i32 : i32 to vector<8x1xi32>
    %311 = arith.cmpi slt, %310, %9 : vector<8x1xi32>
    %312 = arith.index_cast %c4_i32 : i32 to index
    %c0_70 = arith.constant 0 : index
    %c0_71 = arith.constant 0 : index
    %313 = vector.load %arg10[%312, %c0_70, %c0_71] : memref<6x8x512xf32, #tpu.memory_space<vmem>>, vector<1x8x512xf32>
    %314 = vector.shape_cast %313 : vector<1x8x512xf32> to vector<8x512xf32>
    %c0_72 = arith.constant 0 : index
    %c0_73 = arith.constant 0 : index
    %315 = vector.load %arg3[%c0_72, %c0_73] : memref<128x512xf32, #tpu.memory_space<vmem>>, vector<128x512xf32>
    %cst_74 = arith.constant dense<0.000000e+00> : vector<8x512xf32>
    %316 = tpu.matmul %274, %315, %cst_74 {dimension_numbers = #tpu.dot_dimension_numbers<[1], [0], [0], [1], [0, 0, 1, 1], [], []>} : vector<8x128xf32>, vector<128x512xf32>, vector<8x512xf32> -> vector<8x512xf32>
    %317 = arith.addf %314, %316 : vector<8x512xf32>
    %318 = vector.extract_strided_slice %317 {offsets = [0, 0], sizes = [8, 128], strides = [1, 1]} : vector<8x512xf32> to vector<8x128xf32>
    %319 = arith.negf %318 : vector<8x128xf32>
    %320 = math.exp %319 : vector<8x128xf32>
    %cst_75 = arith.constant 1.000000e+00 : f32
    %321 = vector.broadcast %cst_75 : f32 to vector<8x128xf32>
    %322 = arith.addf %321, %320 : vector<8x128xf32>
    %323 = arith.divf %321, %322 : vector<8x128xf32>
    %324 = vector.extract_strided_slice %317 {offsets = [0, 128], sizes = [8, 128], strides = [1, 1]} : vector<8x512xf32> to vector<8x128xf32>
    %325 = arith.negf %324 : vector<8x128xf32>
    %326 = math.exp %325 : vector<8x128xf32>
    %cst_76 = arith.constant 1.000000e+00 : f32
    %327 = vector.broadcast %cst_76 : f32 to vector<8x128xf32>
    %328 = arith.addf %327, %326 : vector<8x128xf32>
    %329 = arith.divf %327, %328 : vector<8x128xf32>
    %330 = vector.extract_strided_slice %317 {offsets = [0, 256], sizes = [8, 128], strides = [1, 1]} : vector<8x512xf32> to vector<8x128xf32>
    %331 = math.tanh %330 : vector<8x128xf32>
    %332 = vector.extract_strided_slice %317 {offsets = [0, 384], sizes = [8, 128], strides = [1, 1]} : vector<8x512xf32> to vector<8x128xf32>
    %333 = arith.negf %332 : vector<8x128xf32>
    %334 = math.exp %333 : vector<8x128xf32>
    %cst_77 = arith.constant 1.000000e+00 : f32
    %335 = vector.broadcast %cst_77 : f32 to vector<8x128xf32>
    %336 = arith.addf %335, %334 : vector<8x128xf32>
    %337 = arith.divf %335, %336 : vector<8x128xf32>
    %338 = arith.mulf %329, %271 : vector<8x128xf32>
    %339 = arith.mulf %323, %331 : vector<8x128xf32>
    %340 = arith.addf %338, %339 : vector<8x128xf32>
    %341 = math.tanh %340 : vector<8x128xf32>
    %342 = arith.mulf %337, %341 : vector<8x128xf32>
    %343 = vector.shape_cast %311 : vector<8x1xi1> to vector<8x1xi1>
    %344 = vector.broadcast %343 : vector<8x1xi1> to vector<8x128xi1>
    %345 = arith.select %344, %340, %271 : vector<8x128xi1>, vector<8x128xf32>
    %346 = vector.shape_cast %311 : vector<8x1xi1> to vector<8x1xi1>
    %347 = vector.broadcast %346 : vector<8x1xi1> to vector<8x128xi1>
    %348 = arith.select %347, %342, %274 : vector<8x128xi1>, vector<8x128xf32>
    %349 = tpu.concatenate %348, %309 in 1 : vector<8x128xf32>, vector<8x128xf32> -> vector<8x256xf32>
    %c0_78 = arith.constant 0 : index
    %c0_79 = arith.constant 0 : index
    %350 = vector.load %arg5[%c0_78, %c0_79] : memref<256x512xf32, #tpu.memory_space<vmem>>, vector<256x512xf32>
    %cst_80 = arith.constant dense<0.000000e+00> : vector<8x512xf32>
    %351 = tpu.matmul %349, %350, %cst_80 {dimension_numbers = #tpu.dot_dimension_numbers<[1], [0], [0], [1], [0, 0, 1, 1], [], []>} : vector<8x256xf32>, vector<256x512xf32>, vector<8x512xf32> -> vector<8x512xf32>
    %352 = arith.addf %351, %12 : vector<8x512xf32>
    %353 = vector.extract_strided_slice %352 {offsets = [0, 0], sizes = [8, 128], strides = [1, 1]} : vector<8x512xf32> to vector<8x128xf32>
    %354 = arith.negf %353 : vector<8x128xf32>
    %355 = math.exp %354 : vector<8x128xf32>
    %cst_81 = arith.constant 1.000000e+00 : f32
    %356 = vector.broadcast %cst_81 : f32 to vector<8x128xf32>
    %357 = arith.addf %356, %355 : vector<8x128xf32>
    %358 = arith.divf %356, %357 : vector<8x128xf32>
    %359 = vector.extract_strided_slice %352 {offsets = [0, 128], sizes = [8, 128], strides = [1, 1]} : vector<8x512xf32> to vector<8x128xf32>
    %360 = arith.negf %359 : vector<8x128xf32>
    %361 = math.exp %360 : vector<8x128xf32>
    %cst_82 = arith.constant 1.000000e+00 : f32
    %362 = vector.broadcast %cst_82 : f32 to vector<8x128xf32>
    %363 = arith.addf %362, %361 : vector<8x128xf32>
    %364 = arith.divf %362, %363 : vector<8x128xf32>
    %365 = vector.extract_strided_slice %352 {offsets = [0, 256], sizes = [8, 128], strides = [1, 1]} : vector<8x512xf32> to vector<8x128xf32>
    %366 = math.tanh %365 : vector<8x128xf32>
    %367 = vector.extract_strided_slice %352 {offsets = [0, 384], sizes = [8, 128], strides = [1, 1]} : vector<8x512xf32> to vector<8x128xf32>
    %368 = arith.negf %367 : vector<8x128xf32>
    %369 = math.exp %368 : vector<8x128xf32>
    %cst_83 = arith.constant 1.000000e+00 : f32
    %370 = vector.broadcast %cst_83 : f32 to vector<8x128xf32>
    %371 = arith.addf %370, %369 : vector<8x128xf32>
    %372 = arith.divf %370, %371 : vector<8x128xf32>
    %373 = arith.mulf %364, %306 : vector<8x128xf32>
    %374 = arith.mulf %358, %366 : vector<8x128xf32>
    %375 = arith.addf %373, %374 : vector<8x128xf32>
    %376 = math.tanh %375 : vector<8x128xf32>
    %377 = arith.mulf %372, %376 : vector<8x128xf32>
    %378 = vector.shape_cast %311 : vector<8x1xi1> to vector<8x1xi1>
    %379 = vector.broadcast %378 : vector<8x1xi1> to vector<8x128xi1>
    %380 = arith.select %379, %375, %306 : vector<8x128xi1>, vector<8x128xf32>
    %381 = vector.shape_cast %311 : vector<8x1xi1> to vector<8x1xi1>
    %382 = vector.broadcast %381 : vector<8x1xi1> to vector<8x128xi1>
    %383 = arith.select %382, %377, %309 : vector<8x128xi1>, vector<8x128xf32>
    %c5_i32 = arith.constant 5 : i32
    %384 = vector.broadcast %c5_i32 : i32 to vector<8x1xi32>
    %385 = arith.cmpi slt, %384, %9 : vector<8x1xi32>
    %386 = arith.index_cast %c5_i32 : i32 to index
    %c0_84 = arith.constant 0 : index
    %c0_85 = arith.constant 0 : index
    %387 = vector.load %arg10[%386, %c0_84, %c0_85] : memref<6x8x512xf32, #tpu.memory_space<vmem>>, vector<1x8x512xf32>
    %388 = vector.shape_cast %387 : vector<1x8x512xf32> to vector<8x512xf32>
    %c0_86 = arith.constant 0 : index
    %c0_87 = arith.constant 0 : index
    %389 = vector.load %arg3[%c0_86, %c0_87] : memref<128x512xf32, #tpu.memory_space<vmem>>, vector<128x512xf32>
    %cst_88 = arith.constant dense<0.000000e+00> : vector<8x512xf32>
    %390 = tpu.matmul %348, %389, %cst_88 {dimension_numbers = #tpu.dot_dimension_numbers<[1], [0], [0], [1], [0, 0, 1, 1], [], []>} : vector<8x128xf32>, vector<128x512xf32>, vector<8x512xf32> -> vector<8x512xf32>
    %391 = arith.addf %388, %390 : vector<8x512xf32>
    %392 = vector.extract_strided_slice %391 {offsets = [0, 0], sizes = [8, 128], strides = [1, 1]} : vector<8x512xf32> to vector<8x128xf32>
    %393 = arith.negf %392 : vector<8x128xf32>
    %394 = math.exp %393 : vector<8x128xf32>
    %cst_89 = arith.constant 1.000000e+00 : f32
    %395 = vector.broadcast %cst_89 : f32 to vector<8x128xf32>
    %396 = arith.addf %395, %394 : vector<8x128xf32>
    %397 = arith.divf %395, %396 : vector<8x128xf32>
    %398 = vector.extract_strided_slice %391 {offsets = [0, 128], sizes = [8, 128], strides = [1, 1]} : vector<8x512xf32> to vector<8x128xf32>
    %399 = arith.negf %398 : vector<8x128xf32>
    %400 = math.exp %399 : vector<8x128xf32>
    %cst_90 = arith.constant 1.000000e+00 : f32
    %401 = vector.broadcast %cst_90 : f32 to vector<8x128xf32>
    %402 = arith.addf %401, %400 : vector<8x128xf32>
    %403 = arith.divf %401, %402 : vector<8x128xf32>
    %404 = vector.extract_strided_slice %391 {offsets = [0, 256], sizes = [8, 128], strides = [1, 1]} : vector<8x512xf32> to vector<8x128xf32>
    %405 = math.tanh %404 : vector<8x128xf32>
    %406 = vector.extract_strided_slice %391 {offsets = [0, 384], sizes = [8, 128], strides = [1, 1]} : vector<8x512xf32> to vector<8x128xf32>
    %407 = arith.negf %406 : vector<8x128xf32>
    %408 = math.exp %407 : vector<8x128xf32>
    %cst_91 = arith.constant 1.000000e+00 : f32
    %409 = vector.broadcast %cst_91 : f32 to vector<8x128xf32>
    %410 = arith.addf %409, %408 : vector<8x128xf32>
    %411 = arith.divf %409, %410 : vector<8x128xf32>
    %412 = arith.mulf %403, %345 : vector<8x128xf32>
    %413 = arith.mulf %397, %405 : vector<8x128xf32>
    %414 = arith.addf %412, %413 : vector<8x128xf32>
    %415 = math.tanh %414 : vector<8x128xf32>
    %416 = arith.mulf %411, %415 : vector<8x128xf32>
    %417 = vector.shape_cast %385 : vector<8x1xi1> to vector<8x1xi1>
    %418 = vector.broadcast %417 : vector<8x1xi1> to vector<8x128xi1>
    %419 = arith.select %418, %414, %345 : vector<8x128xi1>, vector<8x128xf32>
    %420 = vector.shape_cast %385 : vector<8x1xi1> to vector<8x1xi1>
    %421 = vector.broadcast %420 : vector<8x1xi1> to vector<8x128xi1>
    %422 = arith.select %421, %416, %348 : vector<8x128xi1>, vector<8x128xf32>
    %423 = tpu.concatenate %422, %383 in 1 : vector<8x128xf32>, vector<8x128xf32> -> vector<8x256xf32>
    %c0_92 = arith.constant 0 : index
    %c0_93 = arith.constant 0 : index
    %424 = vector.load %arg5[%c0_92, %c0_93] : memref<256x512xf32, #tpu.memory_space<vmem>>, vector<256x512xf32>
    %cst_94 = arith.constant dense<0.000000e+00> : vector<8x512xf32>
    %425 = tpu.matmul %423, %424, %cst_94 {dimension_numbers = #tpu.dot_dimension_numbers<[1], [0], [0], [1], [0, 0, 1, 1], [], []>} : vector<8x256xf32>, vector<256x512xf32>, vector<8x512xf32> -> vector<8x512xf32>
    %426 = arith.addf %425, %12 : vector<8x512xf32>
    %427 = vector.extract_strided_slice %426 {offsets = [0, 0], sizes = [8, 128], strides = [1, 1]} : vector<8x512xf32> to vector<8x128xf32>
    %428 = arith.negf %427 : vector<8x128xf32>
    %429 = math.exp %428 : vector<8x128xf32>
    %cst_95 = arith.constant 1.000000e+00 : f32
    %430 = vector.broadcast %cst_95 : f32 to vector<8x128xf32>
    %431 = arith.addf %430, %429 : vector<8x128xf32>
    %432 = arith.divf %430, %431 : vector<8x128xf32>
    %433 = vector.extract_strided_slice %426 {offsets = [0, 128], sizes = [8, 128], strides = [1, 1]} : vector<8x512xf32> to vector<8x128xf32>
    %434 = arith.negf %433 : vector<8x128xf32>
    %435 = math.exp %434 : vector<8x128xf32>
    %cst_96 = arith.constant 1.000000e+00 : f32
    %436 = vector.broadcast %cst_96 : f32 to vector<8x128xf32>
    %437 = arith.addf %436, %435 : vector<8x128xf32>
    %438 = arith.divf %436, %437 : vector<8x128xf32>
    %439 = vector.extract_strided_slice %426 {offsets = [0, 256], sizes = [8, 128], strides = [1, 1]} : vector<8x512xf32> to vector<8x128xf32>
    %440 = math.tanh %439 : vector<8x128xf32>
    %441 = vector.extract_strided_slice %426 {offsets = [0, 384], sizes = [8, 128], strides = [1, 1]} : vector<8x512xf32> to vector<8x128xf32>
    %442 = arith.negf %441 : vector<8x128xf32>
    %443 = math.exp %442 : vector<8x128xf32>
    %cst_97 = arith.constant 1.000000e+00 : f32
    %444 = vector.broadcast %cst_97 : f32 to vector<8x128xf32>
    %445 = arith.addf %444, %443 : vector<8x128xf32>
    %446 = arith.divf %444, %445 : vector<8x128xf32>
    %447 = arith.mulf %438, %380 : vector<8x128xf32>
    %448 = arith.mulf %432, %440 : vector<8x128xf32>
    %449 = arith.addf %447, %448 : vector<8x128xf32>
    %450 = math.tanh %449 : vector<8x128xf32>
    %451 = arith.mulf %446, %450 : vector<8x128xf32>
    %452 = vector.shape_cast %385 : vector<8x1xi1> to vector<8x1xi1>
    %453 = vector.broadcast %452 : vector<8x1xi1> to vector<8x128xi1>
    %454 = arith.select %453, %449, %380 : vector<8x128xi1>, vector<8x128xf32>
    %455 = vector.shape_cast %385 : vector<8x1xi1> to vector<8x1xi1>
    %456 = vector.broadcast %455 : vector<8x1xi1> to vector<8x128xi1>
    %457 = arith.select %456, %451, %383 : vector<8x128xi1>, vector<8x128xf32>
    %c6_i32 = arith.constant 6 : i32
    %c0_98 = arith.constant 0 : index
    %c0_99 = arith.constant 0 : index
    %458 = vector.load %arg7[%c0_98, %c0_99] : memref<128x128xf32, #tpu.memory_space<vmem>>, vector<128x128xf32>
    %cst_100 = arith.constant dense<0.000000e+00> : vector<8x128xf32>
    %459 = tpu.matmul %457, %458, %cst_100 {dimension_numbers = #tpu.dot_dimension_numbers<[1], [0], [0], [1], [0, 0, 1, 1], [], []>} : vector<8x128xf32>, vector<128x128xf32>, vector<8x128xf32> -> vector<8x128xf32>
    %c0_101 = arith.constant 0 : index
    %c0_102 = arith.constant 0 : index
    %460 = vector.load %arg8[%c0_101, %c0_102] : memref<1x128xf32, #tpu.memory_space<vmem>>, vector<1x128xf32>
    %461 = vector.broadcast %460 : vector<1x128xf32> to vector<8x128xf32>
    %462 = arith.addf %459, %461 : vector<8x128xf32>
    %c0_103 = arith.constant 0 : index
    %c0_104 = arith.constant 0 : index
    %463 = vector.load %arg9[%c0_103, %c0_104] : memref<8x128xf32, #tpu.memory_space<vmem>>, vector<8x128xf32>
    tpu.vector_store %arg9[%c0_103, %c0_104], %462 {strides = array<i32>} : memref<8x128xf32, #tpu.memory_space<vmem>>, vector<8x128xf32>,
    return
  }
}

</mosaic_0001>

<llo_original>
// kernel: tpu_custom_call.1
$region0: #{tpu_custom_call.1}
  #allocation0 [shape = 'u32[]', space=smem, size = 0x4, offset = 0x4, fixed_abs, tag = 'smem constant byte address 0x4 - core index']
  #allocation1 [shape = 'u32[144,128]{1,0:T(1,128)}', space=vmem, size = 0x12000, scoped, tag = 'internal scratch']
  #allocation2 [shape = 'f32[6,8,512]{2,1,0:T(8,128)}', space=vmem, size = 0x18000, scoped, tag = 'scratch operand']
  %s0 = inlined_call_operand.vmem [shape: s32[8,1], index: 0, kind: input, shape index: {}]
  %s1 = inlined_call_operand.hbm [shape: f32[6,8,128], index: 1, kind: input, shape index: {}]
  %s2 = inlined_call_operand.hbm [shape: f32[128,512], index: 2, kind: input, shape index: {}]
  %s3 = inlined_call_operand.hbm [shape: f32[128,512], index: 3, kind: input, shape index: {}]
  %s4 = inlined_call_operand.vmem [shape: f32[1,512], index: 4, kind: input, shape index: {}]
  %s5 = inlined_call_operand.hbm [shape: f32[256,512], index: 5, kind: input, shape index: {}]
  %s6 = inlined_call_operand.vmem [shape: f32[1,512], index: 6, kind: input, shape index: {}]
  %s7 = inlined_call_operand.hbm [shape: f32[128,128], index: 7, kind: input, shape index: {}]
  %s8 = inlined_call_operand.vmem [shape: f32[1,128], index: 8, kind: input, shape index: {}]
  %s9 = inlined_call_operand.hbm [shape: f32[8,128], index: 9, kind: output, shape index: {}]
  %s10 = sld [smem:[#allocation0]]
  $region66: #{tpu_custom_call.1} parent=0
    _
  %s12 = ssub.s32 1, %s10
  %s13 = scalar_select 0, %s12, %s10
  $region1: #{tpu_custom_call.1} parent=0
    #allocation3 [shape = 'u8[24576]{0}', space=vmem, size = 0x6000, scoped, tag = 'input window, operand 1, single buffered']
    #allocation4 [shape = 's32[1]{0}', space=sflag, size = 0x4, scoped, tag = 'scoped memory for tpu_custom_call.1']
    #allocation5 [shape = 's32[1]{0}', space=sflag, size = 0x4, scoped, tag = 'scoped memory for tpu_custom_call.1']
    #allocation6 [shape = 'u8[262144]{0}', space=vmem, size = 0x40000, scoped, tag = 'input window, operand 2, single buffered']
    #allocation7 [shape = 's32[1]{0}', space=sflag, size = 0x4, scoped, tag = 'scoped memory for tpu_custom_call.1']
    #allocation8 [shape = 'u8[262144]{0}', space=vmem, size = 0x40000, scoped, tag = 'input window, operand 3, single buffered']
    #allocation9 [shape = 'u8[524288]{0}', space=vmem, size = 0x80000, scoped, tag = 'input window, operand 5, single buffered']
    #allocation10 [shape = 's32[1]{0}', space=sflag, size = 0x4, scoped, tag = 'scoped memory for tpu_custom_call.1']
    #allocation11 [shape = 'u8[65536]{0}', space=vmem, size = 0x10000, scoped, tag = 'input window, operand 7, single buffered']
    #allocation12 [shape = 'u8[4096]{0}', space=vmem, size = 0x1000, scoped, tag = 'output window, operand 0, single buffered']
    %14 = vsyncpa [#allocation4], 0
    %15 = vsyncpa [#allocation7], 0
    %16 = vsyncpa [#allocation10], 0
    %17 = vsyncpa [#allocation5], 0
    // Predicated region
    $region2: #{tpu_custom_call.1} parent=1 // pred_check
      _
    $region3: #{tpu_custom_call.1} parent=1 // pred_check_branch
      %19 = sbr.rel (0) target = $region5
    $region4: #{tpu_custom_call.1} parent=1 // pred_region
      _
    $region5: #{tpu_custom_call.1} parent=1 // pred_fallthru
      _
    // Predicated region
    $region6: #{tpu_custom_call.1} parent=1 // pred_check
      _
    $region7: #{tpu_custom_call.1} parent=1 // pred_check_branch
      %21 = sbr.rel (0) target = $region9
    $region8: #{tpu_custom_call.1} parent=1 // pred_region
      %s23 = ssub.s32 768, 768
      %24 = vsyncadd [#allocation4], %s23
      %s25 = sshll.u32 [#allocation3], 4
      %s26 = int_to_ptr.vmem [resolvable:$true] %s25
      %31 = dma.hbm_to_vmem [thread:$0]  %s1, 768, %s26, [#allocation4], 128, 128, 8
    $region9: #{tpu_custom_call.1} parent=1 // pred_fallthru
      _
    // Predicated region
    $region10: #{tpu_custom_call.1} parent=1 // pred_check
      _
    $region11: #{tpu_custom_call.1} parent=1 // pred_check_branch
      %33 = sbr.rel (0) target = $region13
    $region12: #{tpu_custom_call.1} parent=1 // pred_region
      %s35 = ssub.s32 8192, 8192
      %36 = vsyncadd [#allocation7], %s35
      %s37 = sshll.u32 [#allocation6], 4
      %s38 = int_to_ptr.vmem [resolvable:$true] %s37
      %43 = dma.hbm_to_vmem [thread:$0]  %s2, 8192, %s38, [#allocation7], 512, 512, 32
    $region13: #{tpu_custom_call.1} parent=1 // pred_fallthru
      _
    // Predicated region
    $region14: #{tpu_custom_call.1} parent=1 // pred_check
      _
    $region15: #{tpu_custom_call.1} parent=1 // pred_check_branch
      %45 = sbr.rel (0) target = $region17
    $region16: #{tpu_custom_call.1} parent=1 // pred_region
      %s47 = ssub.s32 8192, 8192
      %48 = vsyncadd [#allocation7], %s47
      %s49 = sshll.u32 [#allocation8], 4
      %s50 = int_to_ptr.vmem [resolvable:$true] %s49
      %55 = dma.hbm_to_vmem [thread:$0]  %s3, 8192, %s50, [#allocation7], 512, 512, 32
    $region17: #{tpu_custom_call.1} parent=1 // pred_fallthru
      _
    // Predicated region
    $region18: #{tpu_custom_call.1} parent=1 // pred_check
      _
    $region19: #{tpu_custom_call.1} parent=1 // pred_check_branch
      %57 = sbr.rel (0) target = $region21
    $region20: #{tpu_custom_call.1} parent=1 // pred_region
      _
    $region21: #{tpu_custom_call.1} parent=1 // pred_fallthru
      _
    // Predicated region
    $region22: #{tpu_custom_call.1} parent=1 // pred_check
      _
    $region23: #{tpu_custom_call.1} parent=1 // pred_check_branch
      %59 = sbr.rel (0) target = $region25
    $region24: #{tpu_custom_call.1} parent=1 // pred_region
      %s61 = ssub.s32 16384, 16384
      %62 = vsyncadd [#allocation10], %s61
      %s63 = sshll.u32 [#allocation9], 4
      %s64 = int_to_ptr.vmem [resolvable:$true] %s63
      %69 = dma.hbm_to_vmem [thread:$0]  %s5, 16384, %s64, [#allocation10], 512, 512, 32
    $region25: #{tpu_custom_call.1} parent=1 // pred_fallthru
      _
    // Predicated region
    $region26: #{tpu_custom_call.1} parent=1 // pred_check
      _
    $region27: #{tpu_custom_call.1} parent=1 // pred_check_branch
      %71 = sbr.rel (0) target = $region29
    $region28: #{tpu_custom_call.1} parent=1 // pred_region
      _
    $region29: #{tpu_custom_call.1} parent=1 // pred_fallthru
      _
    // Predicated region
    $region30: #{tpu_custom_call.1} parent=1 // pred_check
      _
    $region31: #{tpu_custom_call.1} parent=1 // pred_check_branch
      %73 = sbr.rel (0) target = $region33
    $region32: #{tpu_custom_call.1} parent=1 // pred_region
      %s75 = ssub.s32 2048, 2048
      %76 = vsyncadd [#allocation10], %s75
      %s77 = sshll.u32 [#allocation11], 4
      %s78 = int_to_ptr.vmem [resolvable:$true] %s77
      %83 = dma.hbm_to_vmem [thread:$0]  %s7, 2048, %s78, [#allocation10], 128, 128, 8
    $region33: #{tpu_custom_call.1} parent=1 // pred_fallthru
      _
    // Predicated region
    $region34: #{tpu_custom_call.1} parent=1 // pred_check
      _
    $region35: #{tpu_custom_call.1} parent=1 // pred_check_branch
      %85 = sbr.rel (0) target = $region37
    $region36: #{tpu_custom_call.1} parent=1 // pred_region
      _
    $region37: #{tpu_custom_call.1} parent=1 // pred_fallthru
      _
    // Predicated region
    $region38: #{tpu_custom_call.1} parent=1 // pred_check
      _
    $region39: #{tpu_custom_call.1} parent=1 // pred_check_branch
      %87 = sbr.rel (0) target = $region41
    $region40: #{tpu_custom_call.1} parent=1 // pred_region
      %88 = dma.done [#allocation4], 768
    $region41: #{tpu_custom_call.1} parent=1 // pred_fallthru
      _
    // Predicated region
    $region42: #{tpu_custom_call.1} parent=1 // pred_check
      _
    $region43: #{tpu_custom_call.1} parent=1 // pred_check_branch
      %90 = sbr.rel (0) target = $region45
    $region44: #{tpu_custom_call.1} parent=1 // pred_region
      %91 = dma.done [#allocation7], 8192
    $region45: #{tpu_custom_call.1} parent=1 // pred_fallthru
      _
    // Predicated region
    $region46: #{tpu_custom_call.1} parent=1 // pred_check
      _
    $region47: #{tpu_custom_call.1} parent=1 // pred_check_branch
      %93 = sbr.rel (0) target = $region49
    $region48: #{tpu_custom_call.1} parent=1 // pred_region
      %94 = dma.done [#allocation7], 8192
    $region49: #{tpu_custom_call.1} parent=1 // pred_fallthru
      _
    // Predicated region
    $region50: #{tpu_custom_call.1} parent=1 // pred_check
      _
    $region51: #{tpu_custom_call.1} parent=1 // pred_check_branch
      %96 = sbr.rel (0) target = $region53
    $region52: #{tpu_custom_call.1} parent=1 // pred_region
      %97 = dma.done [#allocation10], 16384
    $region53: #{tpu_custom_call.1} parent=1 // pred_fallthru
      _
    // Predicated region
    $region54: #{tpu_custom_call.1} parent=1 // pred_check
      _
    $region55: #{tpu_custom_call.1} parent=1 // pred_check_branch
      %99 = sbr.rel (0) target = $region57
    $region56: #{tpu_custom_call.1} parent=1 // pred_region
      %100 = dma.done [#allocation10], 2048
    $region57: #{tpu_custom_call.1} parent=1 // pred_fallthru
      _
    %v101 = vld [vmem:[#allocation3] sm:$0xff]
    %v102 = vld [vmem:[#allocation3 + $0x8] sm:$0xff]
    %v103 = vld [vmem:[#allocation3 + $0x10] sm:$0xff]
    %v104 = vld [vmem:[#allocation3 + $0x18] sm:$0xff]
    %v105 = vld [vmem:[#allocation3 + $0x20] sm:$0xff]
    %v106 = vld [vmem:[#allocation3 + $0x28] sm:$0xff]
    %v107 = vld [vmem:[#allocation6] sm:$0xff]
    %v108 = vld [vmem:[#allocation6 + $0x8] sm:$0xff]
    %v109 = vld [vmem:[#allocation6 + $0x10] sm:$0xff]
    %v110 = vld [vmem:[#allocation6 + $0x18] sm:$0xff]
    %v111 = vld [vmem:[#allocation6 + $0x20] sm:$0xff]
    %v112 = vld [vmem:[#allocation6 + $0x28] sm:$0xff]
    %v113 = vld [vmem:[#allocation6 + $0x30] sm:$0xff]
    %v114 = vld [vmem:[#allocation6 + $0x38] sm:$0xff]
    %v115 = vld [vmem:[#allocation6 + $0x40] sm:$0xff]
    %v116 = vld [vmem:[#allocation6 + $0x48] sm:$0xff]
    %v117 = vld [vmem:[#allocation6 + $0x50] sm:$0xff]
    %v118 = vld [vmem:[#allocation6 + $0x58] sm:$0xff]
    %v119 = vld [vmem:[#allocation6 + $0x60] sm:$0xff]
    %v120 = vld [vmem:[#allocation6 + $0x68] sm:$0xff]
    %v121 = vld [vmem:[#allocation6 + $0x70] sm:$0xff]
    %v122 = vld [vmem:[#allocation6 + $0x78] sm:$0xff]
    %v123 = vld [vmem:[#allocation6 + $0x80] sm:$0xff]
    %v124 = vld [vmem:[#allocation6 + $0x88] sm:$0xff]
    %v125 = vld [vmem:[#allocation6 + $0x90] sm:$0xff]
    %v126 = vld [vmem:[#allocation6 + $0x98] sm:$0xff]
    %v127 = vld [vmem:[#allocation6 + $0xa0] sm:$0xff]
    %v128 = vld [vmem:[#allocation6 + $0xa8] sm:$0xff]
    %v129 = vld [vmem:[#allocation6 + $0xb0] sm:$0xff]
    %v130 = vld [vmem:[#allocation6 + $0xb8] sm:$0xff]
    %v131 = vld [vmem:[#allocation6 + $0xc0] sm:$0xff]
    %v132 = vld [vmem:[#allocation6 + $0xc8] sm:$0xff]
    %v133 = vld [vmem:[#allocation6 + $0xd0] sm:$0xff]
    %v134 = vld [vmem:[#allocation6 + $0xd8] sm:$0xff]
    %v135 = vld [vmem:[#allocation6 + $0xe0] sm:$0xff]
    %v136 = vld [vmem:[#allocation6 + $0xe8] sm:$0xff]
    %v137 = vld [vmem:[#allocation6 + $0xf0] sm:$0xff]
    %v138 = vld [vmem:[#allocation6 + $0xf8] sm:$0xff]
    %v139 = vld [vmem:[#allocation6 + $0x100] sm:$0xff]
    %v140 = vld [vmem:[#allocation6 + $0x108] sm:$0xff]
    %v141 = vld [vmem:[#allocation6 + $0x110] sm:$0xff]
    %v142 = vld [vmem:[#allocation6 + $0x118] sm:$0xff]
    %v143 = vld [vmem:[#allocation6 + $0x120] sm:$0xff]
    %v144 = vld [vmem:[#allocation6 + $0x128] sm:$0xff]
    %v145 = vld [vmem:[#allocation6 + $0x130] sm:$0xff]
    %v146 = vld [vmem:[#allocation6 + $0x138] sm:$0xff]
    %v147 = vld [vmem:[#allocation6 + $0x140] sm:$0xff]
    %v148 = vld [vmem:[#allocation6 + $0x148] sm:$0xff]
    %v149 = vld [vmem:[#allocation6 + $0x150] sm:$0xff]
    %v150 = vld [vmem:[#allocation6 + $0x158] sm:$0xff]
    %v151 = vld [vmem:[#allocation6 + $0x160] sm:$0xff]
    %v152 = vld [vmem:[#allocation6 + $0x168] sm:$0xff]
    %v153 = vld [vmem:[#allocation6 + $0x170] sm:$0xff]
    %v154 = vld [vmem:[#allocation6 + $0x178] sm:$0xff]
    %v155 = vld [vmem:[#allocation6 + $0x180] sm:$0xff]
    %v156 = vld [vmem:[#allocation6 + $0x188] sm:$0xff]
    %v157 = vld [vmem:[#allocation6 + $0x190] sm:$0xff]
    %v158 = vld [vmem:[#allocation6 + $0x198] sm:$0xff]
    %v159 = vld [vmem:[#allocation6 + $0x1a0] sm:$0xff]
    %v160 = vld [vmem:[#allocation6 + $0x1a8] sm:$0xff]
    %v161 = vld [vmem:[#allocation6 + $0x1b0] sm:$0xff]
    %v162 = vld [vmem:[#allocation6 + $0x1b8] sm:$0xff]
    %v163 = vld [vmem:[#allocation6 + $0x1c0] sm:$0xff]
    %v164 = vld [vmem:[#allocation6 + $0x1c8] sm:$0xff]
    %v165 = vld [vmem:[#allocation6 + $0x1d0] sm:$0xff]
    %v166 = vld [vmem:[#allocation6 + $0x1d8] sm:$0xff]
    %v167 = vld [vmem:[#allocation6 + $0x1e0] sm:$0xff]
    %v168 = vld [vmem:[#allocation6 + $0x1e8] sm:$0xff]
    %v169 = vld [vmem:[#allocation6 + $0x1f0] sm:$0xff]
    %v170 = vld [vmem:[#allocation6 + $0x1f8] sm:$0xff]
    %v171 = vld [vmem:[%s4] sm:$0xf]
    %v173 = vlaneseq
    %v174 = vshrl.u32 %v173, 7
    %v175 = vsub.s32 0, %v174
    %v176 = vrot.slane %v171, %v175
    %v177 = vlaneseq
    %v178 = vshrl.u32 %v177, 7
    %v179 = vsub.s32 1, %v178
    %v180 = vrot.slane %v171, %v179
    %v181 = vlaneseq
    %v182 = vshrl.u32 %v181, 7
    %v183 = vsub.s32 2, %v182
    %v184 = vrot.slane %v171, %v183
    %v185 = vlaneseq
    %v186 = vshrl.u32 %v185, 7
    %v187 = vsub.s32 3, %v186
    %v188 = vrot.slane %v171, %v187
    %193 = vmatprep.subr.mxu0 %v168
    %194 = vmatpush1.msra.mxu0 %v167
    %195 = vmatprep.subr.mxu0 %v164
    %196 = vmatpush1.msra.mxu0 %v163
    %197 = vmatprep.subr.mxu0 %v160
    %198 = vmatpush1.msra.mxu0 %v159
    %199 = vmatprep.subr.mxu0 %v156
    %200 = vmatpush1.msra.mxu0 %v155
    %201 = vmatprep.subr.mxu0 %v152
    %202 = vmatpush1.msra.mxu0 %v151
    %203 = vmatprep.subr.mxu0 %v148
    %204 = vmatpush1.msra.mxu0 %v147
    %205 = vmatprep.subr.mxu0 %v144
    %206 = vmatpush1.msra.mxu0 %v143
    %207 = vmatprep.subr.mxu0 %v140
    %208 = vmatpush1.msra.mxu0 %v139
    %209 = vmatprep.subr.mxu0 %v136
    %210 = vmatpush1.msra.mxu0 %v135
    %211 = vmatprep.subr.mxu0 %v132
    %212 = vmatpush1.msra.mxu0 %v131
    %213 = vmatprep.subr.mxu0 %v128
    %214 = vmatpush1.msra.mxu0 %v127
    %215 = vmatprep.subr.mxu0 %v124
    %216 = vmatpush1.msra.mxu0 %v123
    %217 = vmatprep.subr.mxu0 %v120
    %218 = vmatpush1.msra.mxu0 %v119
    %219 = vmatprep.subr.mxu0 %v116
    %220 = vmatpush1.msra.mxu0 %v115
    %221 = vmatprep.subr.mxu0 %v112
    %222 = vmatpush1.msra.mxu0 %v111
    %223 = vmatprep.subr.mxu0 %v108
    %224 = vmatpush1.msra.mxu0 %v107
    %225 = vmatprep.subr.mxu0 0.0
    %226 = vmatpush2.msra.mxu0 0.0
    %227 = vmatprep.subr.mxu0 0.0
    %228 = vmatpush2.msra.mxu0 0.0
    %229 = vmatprep.subr.mxu0 0.0
    %230 = vmatpush2.msra.mxu0 0.0
    %231 = vmatprep.subr.mxu0 0.0
    %232 = vmatpush2.msra.mxu0 0.0
    %233 = vmatprep.subr.mxu0 0.0
    %234 = vmatpush2.msra.mxu0 0.0
    %235 = vmatprep.subr.mxu0 0.0
    %236 = vmatpush2.msra.mxu0 0.0
    %237 = vmatprep.subr.mxu0 0.0
    %238 = vmatpush2.msra.mxu0 0.0
    %239 = vmatprep.subr.mxu0 0.0
    %240 = vmatpush2.msra.mxu0 0.0
    %241 = vmatprep.subr.mxu0 0.0
    %242 = vmatpush2.msra.mxu0 0.0
    %243 = vmatprep.subr.mxu0 0.0
    %244 = vmatpush2.msra.mxu0 0.0
    %245 = vmatprep.subr.mxu0 0.0
    %246 = vmatpush2.msra.mxu0 0.0
    %247 = vmatprep.subr.mxu0 0.0
    %248 = vmatpush2.msra.mxu0 0.0
    %249 = vmatprep.subr.mxu0 0.0
    %250 = vmatpush2.msra.mxu0 0.0
    %251 = vmatprep.subr.mxu0 0.0
    %252 = vmatpush2.msra.mxu0 0.0
    %253 = vmatprep.subr.mxu0 0.0
    %254 = vmatpush2.msra.mxu0 0.0
    %255 = vmatprep.subr.mxu0 0.0
    %256 = vmatpush2.msra.mxu0 0.0
    %257 = vmatprep.mubr.f32.mxu0 0.0
    %258 = vmatmul.mubr.f32.gmra.mxu0 %v101
    %v259 = vpop.f32.mrf.mxu0
    %v260 = vadd.f32 %v176, %v259
    %v261 = vpop.f32.mrf.mxu0
    %v262 = vadd.f32 %v180, %v261
    %263 = vmatprep.mubr.f32.mxu0 0.0
    %264 = vmatmul.mubr.f32.gmra.mxu0 %v102
    %v265 = vpop.f32.mrf.mxu0
    %v266 = vadd.f32 %v176, %v265
    %v267 = vpop.f32.mrf.mxu0
    %v268 = vadd.f32 %v180, %v267
    %269 = vmatprep.mubr.f32.mxu0 0.0
    %270 = vmatmul.mubr.f32.gmra.mxu0 %v103
    %v271 = vpop.f32.mrf.mxu0
    %v272 = vadd.f32 %v176, %v271
    %v273 = vpop.f32.mrf.mxu0
    %v274 = vadd.f32 %v180, %v273
    %275 = vmatprep.mubr.f32.mxu0 0.0
    %276 = vmatmul.mubr.f32.gmra.mxu0 %v104
    %v277 = vpop.f32.mrf.mxu0
    %v278 = vadd.f32 %v176, %v277
    %v279 = vpop.f32.mrf.mxu0
    %v280 = vadd.f32 %v180, %v279
    %281 = vmatprep.mubr.f32.mxu0 0.0
    %282 = vmatmul.mubr.f32.gmra.mxu0 %v105
    %v283 = vpop.f32.mrf.mxu0
    %v284 = vadd.f32 %v176, %v283
    %v285 = vpop.f32.mrf.mxu0
    %v286 = vadd.f32 %v180, %v285
    %287 = vmatprep.mubr.f32.mxu0 0.0
    %288 = vmatmul.mubr.f32.gmra.mxu0 %v106
    %v289 = vpop.f32.mrf.mxu0
    %v290 = vadd.f32 %v176, %v289
    %v291 = vpop.f32.mrf.mxu0
    %v292 = vadd.f32 %v180, %v291
    %293 = vdwg.mxu0
    %294 = vmatprep.subr.mxu0 %v170
    %295 = vmatpush1.msra.mxu0 %v169
    %296 = vmatprep.subr.mxu0 %v166
    %297 = vmatpush1.msra.mxu0 %v165
    %298 = vmatprep.subr.mxu0 %v162
    %299 = vmatpush1.msra.mxu0 %v161
    %300 = vmatprep.subr.mxu0 %v158
    %301 = vmatpush1.msra.mxu0 %v157
    %302 = vmatprep.subr.mxu0 %v154
    %303 = vmatpush1.msra.mxu0 %v153
    %304 = vmatprep.subr.mxu0 %v150
    %305 = vmatpush1.msra.mxu0 %v149
    %306 = vmatprep.subr.mxu0 %v146
    %307 = vmatpush1.msra.mxu0 %v145
    %308 = vmatprep.subr.mxu0 %v142
    %309 = vmatpush1.msra.mxu0 %v141
    %310 = vmatprep.subr.mxu0 %v138
    %311 = vmatpush1.msra.mxu0 %v137
    %312 = vmatprep.subr.mxu0 %v134
    %313 = vmatpush1.msra.mxu0 %v133
    %314 = vmatprep.subr.mxu0 %v130
    %315 = vmatpush1.msra.mxu0 %v129
    %316 = vmatprep.subr.mxu0 %v126
    %317 = vmatpush1.msra.mxu0 %v125
    %318 = vmatprep.subr.mxu0 %v122
    %319 = vmatpush1.msra.mxu0 %v121
    %320 = vmatprep.subr.mxu0 %v118
    %321 = vmatpush1.msra.mxu0 %v117
    %322 = vmatprep.subr.mxu0 %v114
    %323 = vmatpush1.msra.mxu0 %v113
    %324 = vmatprep.subr.mxu0 %v110
    %325 = vmatpush1.msra.mxu0 %v109
    %326 = vmatprep.subr.mxu0 0.0
    %327 = vmatpush2.msra.mxu0 0.0
    %328 = vmatprep.subr.mxu0 0.0
    %329 = vmatpush2.msra.mxu0 0.0
    %330 = vmatprep.subr.mxu0 0.0
    %331 = vmatpush2.msra.mxu0 0.0
    %332 = vmatprep.subr.mxu0 0.0
    %333 = vmatpush2.msra.mxu0 0.0
    %334 = vmatprep.subr.mxu0 0.0
    %335 = vmatpush2.msra.mxu0 0.0
    %336 = vmatprep.subr.mxu0 0.0
    %337 = vmatpush2.msra.mxu0 0.0
    %338 = vmatprep.subr.mxu0 0.0
    %339 = vmatpush2.msra.mxu0 0.0
    %340 = vmatprep.subr.mxu0 0.0
    %341 = vmatpush2.msra.mxu0 0.0
    %342 = vmatprep.subr.mxu0 0.0
    %343 = vmatpush2.msra.mxu0 0.0
    %344 = vmatprep.subr.mxu0 0.0
    %345 = vmatpush2.msra.mxu0 0.0
    %346 = vmatprep.subr.mxu0 0.0
    %347 = vmatpush2.msra.mxu0 0.0
    %348 = vmatprep.subr.mxu0 0.0
    %349 = vmatpush2.msra.mxu0 0.0
    %350 = vmatprep.subr.mxu0 0.0
    %351 = vmatpush2.msra.mxu0 0.0
    %352 = vmatprep.subr.mxu0 0.0
    %353 = vmatpush2.msra.mxu0 0.0
    %354 = vmatprep.subr.mxu0 0.0
    %355 = vmatpush2.msra.mxu0 0.0
    %356 = vmatprep.subr.mxu0 0.0
    %357 = vmatpush2.msra.mxu0 0.0
    %358 = vmatprep.mubr.f32.mxu0 0.0
    %359 = vmatmul.mubr.f32.gmra.mxu0 %v101
    %v360 = vpop.f32.mrf.mxu0
    %v361 = vadd.f32 %v184, %v360
    %v362 = vpop.f32.mrf.mxu0
    %v363 = vadd.f32 %v188, %v362
    %364 = vmatprep.mubr.f32.mxu0 0.0
    %365 = vmatmul.mubr.f32.gmra.mxu0 %v102
    %v366 = vpop.f32.mrf.mxu0
    %v367 = vadd.f32 %v184, %v366
    %v368 = vpop.f32.mrf.mxu0
    %v369 = vadd.f32 %v188, %v368
    %370 = vmatprep.mubr.f32.mxu0 0.0
    %371 = vmatmul.mubr.f32.gmra.mxu0 %v103
    %v372 = vpop.f32.mrf.mxu0
    %v373 = vadd.f32 %v184, %v372
    %v374 = vpop.f32.mrf.mxu0
    %v375 = vadd.f32 %v188, %v374
    %376 = vmatprep.mubr.f32.mxu0 0.0
    %377 = vmatmul.mubr.f32.gmra.mxu0 %v104
    %v378 = vpop.f32.mrf.mxu0
    %v379 = vadd.f32 %v184, %v378
    %v380 = vpop.f32.mrf.mxu0
    %v381 = vadd.f32 %v188, %v380
    %382 = vmatprep.mubr.f32.mxu0 0.0
    %383 = vmatmul.mubr.f32.gmra.mxu0 %v105
    %v384 = vpop.f32.mrf.mxu0
    %v385 = vadd.f32 %v184, %v384
    %v386 = vpop.f32.mrf.mxu0
    %v387 = vadd.f32 %v188, %v386
    %388 = vmatprep.mubr.f32.mxu0 0.0
    %389 = vmatmul.mubr.f32.gmra.mxu0 %v106
    %v390 = vpop.f32.mrf.mxu0
    %v391 = vadd.f32 %v184, %v390
    %v392 = vpop.f32.mrf.mxu0
    %v393 = vadd.f32 %v188, %v392
    %394 = vdwg.mxu0
    %395 = vst [vmem:[#allocation2] sm:$0xff] %v260
    %396 = vst [vmem:[#allocation2 + $0x8] sm:$0xff] %v262
    %397 = vst [vmem:[#allocation2 + $0x10] sm:$0xff] %v361
    %398 = vst [vmem:[#allocation2 + $0x18] sm:$0xff] %v363
    %399 = vst [vmem:[#allocation2 + $0x20] sm:$0xff] %v266
    %400 = vst [vmem:[#allocation2 + $0x28] sm:$0xff] %v268
    %401 = vst [vmem:[#allocation2 + $0x30] sm:$0xff] %v367
    %402 = vst [vmem:[#allocation2 + $0x38] sm:$0xff] %v369
    %403 = vst [vmem:[#allocation2 + $0x40] sm:$0xff] %v272
    %404 = vst [vmem:[#allocation2 + $0x48] sm:$0xff] %v274
    %405 = vst [vmem:[#allocation2 + $0x50] sm:$0xff] %v373
    %406 = vst [vmem:[#allocation2 + $0x58] sm:$0xff] %v375
    %407 = vst [vmem:[#allocation2 + $0x60] sm:$0xff] %v278
    %408 = vst [vmem:[#allocation2 + $0x68] sm:$0xff] %v280
    %409 = vst [vmem:[#allocation2 + $0x70] sm:$0xff] %v379
    %410 = vst [vmem:[#allocation2 + $0x78] sm:$0xff] %v381
    %411 = vst [vmem:[#allocation2 + $0x80] sm:$0xff] %v284
    %412 = vst [vmem:[#allocation2 + $0x88] sm:$0xff] %v286
    %413 = vst [vmem:[#allocation2 + $0x90] sm:$0xff] %v385
    %414 = vst [vmem:[#allocation2 + $0x98] sm:$0xff] %v387
    %415 = vst [vmem:[#allocation2 + $0xa0] sm:$0xff] %v290
    %416 = vst [vmem:[#allocation2 + $0xa8] sm:$0xff] %v292
    %417 = vst [vmem:[#allocation2 + $0xb0] sm:$0xff] %v391
    %418 = vst [vmem:[#allocation2 + $0xb8] sm:$0xff] %v393
    %v419 = vld [vmem:[%s0] sm:$0xff]
    %v420 = vld [vmem:[%s6] sm:$0xf]
    %v422 = vlaneseq
    %v423 = vshrl.u32 %v422, 7
    %v424 = vsub.s32 0, %v423
    %v425 = vrot.slane %v420, %v424
    %v426 = vlaneseq
    %v427 = vshrl.u32 %v426, 7
    %v428 = vsub.s32 1, %v427
    %v429 = vrot.slane %v420, %v428
    %v430 = vlaneseq
    %v431 = vshrl.u32 %v430, 7
    %v432 = vsub.s32 2, %v431
    %v433 = vrot.slane %v420, %v432
    %v434 = vlaneseq
    %v435 = vshrl.u32 %v434, 7
    %v436 = vsub.s32 3, %v435
    %v437 = vrot.slane %v420, %v436
    %vm442 = vcmp.gt.s32.totalorder %v419, 0
    %v443 = vld [vmem:[#allocation2] sm:$0xff]
    %v444 = vld [vmem:[#allocation2 + $0x8] sm:$0xff]
    %v445 = vld [vmem:[#allocation2 + $0x10] sm:$0xff]
    %v446 = vld [vmem:[#allocation2 + $0x18] sm:$0xff]
    %v447 = vld [vmem:[#allocation8] sm:$0xff]
    %v448 = vld [vmem:[#allocation8 + $0x8] sm:$0xff]
    %v449 = vld [vmem:[#allocation8 + $0x10] sm:$0xff]
    %v450 = vld [vmem:[#allocation8 + $0x18] sm:$0xff]
    %v451 = vld [vmem:[#allocation8 + $0x20] sm:$0xff]
    %v452 = vld [vmem:[#allocation8 + $0x28] sm:$0xff]
    %v453 = vld [vmem:[#allocation8 + $0x30] sm:$0xff]
    %v454 = vld [vmem:[#allocation8 + $0x38] sm:$0xff]
    %v455 = vld [vmem:[#allocation8 + $0x40] sm:$0xff]
    %v456 = vld [vmem:[#allocation8 + $0x48] sm:$0xff]
    %v457 = vld [vmem:[#allocation8 + $0x50] sm:$0xff]
    %v458 = vld [vmem:[#allocation8 + $0x58] sm:$0xff]
    %v459 = vld [vmem:[#allocation8 + $0x60] sm:$0xff]
    %v460 = vld [vmem:[#allocation8 + $0x68] sm:$0xff]
    %v461 = vld [vmem:[#allocation8 + $0x70] sm:$0xff]
    %v462 = vld [vmem:[#allocation8 + $0x78] sm:$0xff]
    %v463 = vld [vmem:[#allocation8 + $0x80] sm:$0xff]
    %v464 = vld [vmem:[#allocation8 + $0x88] sm:$0xff]
    %v465 = vld [vmem:[#allocation8 + $0x90] sm:$0xff]
    %v466 = vld [vmem:[#allocation8 + $0x98] sm:$0xff]
    %v467 = vld [vmem:[#allocation8 + $0xa0] sm:$0xff]
    %v468 = vld [vmem:[#allocation8 + $0xa8] sm:$0xff]
    %v469 = vld [vmem:[#allocation8 + $0xb0] sm:$0xff]
    %v470 = vld [vmem:[#allocation8 + $0xb8] sm:$0xff]
    %v471 = vld [vmem:[#allocation8 + $0xc0] sm:$0xff]
    %v472 = vld [vmem:[#allocation8 + $0xc8] sm:$0xff]
    %v473 = vld [vmem:[#allocation8 + $0xd0] sm:$0xff]
    %v474 = vld [vmem:[#allocation8 + $0xd8] sm:$0xff]
    %v475 = vld [vmem:[#allocation8 + $0xe0] sm:$0xff]
    %v476 = vld [vmem:[#allocation8 + $0xe8] sm:$0xff]
    %v477 = vld [vmem:[#allocation8 + $0xf0] sm:$0xff]
    %v478 = vld [vmem:[#allocation8 + $0xf8] sm:$0xff]
    %v479 = vld [vmem:[#allocation8 + $0x100] sm:$0xff]
    %v480 = vld [vmem:[#allocation8 + $0x108] sm:$0xff]
    %v481 = vld [vmem:[#allocation8 + $0x110] sm:$0xff]
    %v482 = vld [vmem:[#allocation8 + $0x118] sm:$0xff]
    %v483 = vld [vmem:[#allocation8 + $0x120] sm:$0xff]
    %v484 = vld [vmem:[#allocation8 + $0x128] sm:$0xff]
    %v485 = vld [vmem:[#allocation8 + $0x130] sm:$0xff]
    %v486 = vld [vmem:[#allocation8 + $0x138] sm:$0xff]
    %v487 = vld [vmem:[#allocation8 + $0x140] sm:$0xff]
    %v488 = vld [vmem:[#allocation8 + $0x148] sm:$0xff]
    %v489 = vld [vmem:[#allocation8 + $0x150] sm:$0xff]
    %v490 = vld [vmem:[#allocation8 + $0x158] sm:$0xff]
    %v491 = vld [vmem:[#allocation8 + $0x160] sm:$0xff]
    %v492 = vld [vmem:[#allocation8 + $0x168] sm:$0xff]
    %v493 = vld [vmem:[#allocation8 + $0x170] sm:$0xff]
    %v494 = vld [vmem:[#allocation8 + $0x178] sm:$0xff]
    %v495 = vld [vmem:[#allocation8 + $0x180] sm:$0xff]
    %v496 = vld [vmem:[#allocation8 + $0x188] sm:$0xff]
    %v497 = vld [vmem:[#allocation8 + $0x190] sm:$0xff]
    %v498 = vld [vmem:[#allocation8 + $0x198] sm:$0xff]
    %v499 = vld [vmem:[#allocation8 + $0x1a0] sm:$0xff]
    %v500 = vld [vmem:[#allocation8 + $0x1a8] sm:$0xff]
    %v501 = vld [vmem:[#allocation8 + $0x1b0] sm:$0xff]
    %v502 = vld [vmem:[#allocation8 + $0x1b8] sm:$0xff]
    %v503 = vld [vmem:[#allocation8 + $0x1c0] sm:$0xff]
    %v504 = vld [vmem:[#allocation8 + $0x1c8] sm:$0xff]
    %v505 = vld [vmem:[#allocation8 + $0x1d0] sm:$0xff]
    %v506 = vld [vmem:[#allocation8 + $0x1d8] sm:$0xff]
    %v507 = vld [vmem:[#allocation8 + $0x1e0] sm:$0xff]
    %v508 = vld [vmem:[#allocation8 + $0x1e8] sm:$0xff]
    %v509 = vld [vmem:[#allocation8 + $0x1f0] sm:$0xff]
    %v510 = vld [vmem:[#allocation8 + $0x1f8] sm:$0xff]
    %511 = vmatprep.subr.mxu0 %v508
    %512 = vmatpush1.msra.mxu0 %v507
    %513 = vmatprep.subr.mxu0 %v504
    %514 = vmatpush1.msra.mxu0 %v503
    %515 = vmatprep.subr.mxu0 %v500
    %516 = vmatpush1.msra.mxu0 %v499
    %517 = vmatprep.subr.mxu0 %v496
    %518 = vmatpush1.msra.mxu0 %v495
    %519 = vmatprep.subr.mxu0 %v492
    %520 = vmatpush1.msra.mxu0 %v491
    %521 = vmatprep.subr.mxu0 %v488
    %522 = vmatpush1.msra.mxu0 %v487
    %523 = vmatprep.subr.mxu0 %v484
    %524 = vmatpush1.msra.mxu0 %v483
    %525 = vmatprep.subr.mxu0 %v480
    %526 = vmatpush1.msra.mxu0 %v479
    %527 = vmatprep.subr.mxu0 %v476
    %528 = vmatpush1.msra.mxu0 %v475
    %529 = vmatprep.subr.mxu0 %v472
    %530 = vmatpush1.msra.mxu0 %v471
    %531 = vmatprep.subr.mxu0 %v468
    %532 = vmatpush1.msra.mxu0 %v467
    %533 = vmatprep.subr.mxu0 %v464
    %534 = vmatpush1.msra.mxu0 %v463
    %535 = vmatprep.subr.mxu0 %v460
    %536 = vmatpush1.msra.mxu0 %v459
    %537 = vmatprep.subr.mxu0 %v456
    %538 = vmatpush1.msra.mxu0 %v455
    %539 = vmatprep.subr.mxu0 %v452
    %540 = vmatpush1.msra.mxu0 %v451
    %541 = vmatprep.subr.mxu0 %v448
    %542 = vmatpush1.msra.mxu0 %v447
    %543 = vmatprep.subr.mxu0 0.0
    %544 = vmatpush2.msra.mxu0 0.0
    %545 = vmatprep.subr.mxu0 0.0
    %546 = vmatpush2.msra.mxu0 0.0
    %547 = vmatprep.subr.mxu0 0.0
    %548 = vmatpush2.msra.mxu0 0.0
    %549 = vmatprep.subr.mxu0 0.0
    %550 = vmatpush2.msra.mxu0 0.0
    %551 = vmatprep.subr.mxu0 0.0
    %552 = vmatpush2.msra.mxu0 0.0
    %553 = vmatprep.subr.mxu0 0.0
    %554 = vmatpush2.msra.mxu0 0.0
    %555 = vmatprep.subr.mxu0 0.0
    %556 = vmatpush2.msra.mxu0 0.0
    %557 = vmatprep.subr.mxu0 0.0
    %558 = vmatpush2.msra.mxu0 0.0
    %559 = vmatprep.subr.mxu0 0.0
    %560 = vmatpush2.msra.mxu0 0.0
    %561 = vmatprep.subr.mxu0 0.0
    %562 = vmatpush2.msra.mxu0 0.0
    %563 = vmatprep.subr.mxu0 0.0
    %564 = vmatpush2.msra.mxu0 0.0
    %565 = vmatprep.subr.mxu0 0.0
    %566 = vmatpush2.msra.mxu0 0.0
    %567 = vmatprep.subr.mxu0 0.0
    %568 = vmatpush2.msra.mxu0 0.0
    %569 = vmatprep.subr.mxu0 0.0
    %570 = vmatpush2.msra.mxu0 0.0
    %571 = vmatprep.subr.mxu0 0.0
    %572 = vmatpush2.msra.mxu0 0.0
    %573 = vmatprep.subr.mxu0 0.0
    %574 = vmatpush2.msra.mxu0 0.0
    %575 = vmatprep.mubr.f32.mxu0 0.0
    %576 = vmatmul.mubr.f32.gmra.mxu0 0.0
    %v577 = vpop.f32.mrf.mxu0
    %v578 = vadd.f32 0.0, %v577
    %v579 = vpop.f32.mrf.mxu0
    %v580 = vadd.f32 0.0, %v579
    %581 = vdwg.mxu0
    %582 = vmatprep.subr.mxu0 %v510
    %583 = vmatpush1.msra.mxu0 %v509
    %584 = vmatprep.subr.mxu0 %v506
    %585 = vmatpush1.msra.mxu0 %v505
    %586 = vmatprep.subr.mxu0 %v502
    %587 = vmatpush1.msra.mxu0 %v501
    %588 = vmatprep.subr.mxu0 %v498
    %589 = vmatpush1.msra.mxu0 %v497
    %590 = vmatprep.subr.mxu0 %v494
    %591 = vmatpush1.msra.mxu0 %v493
    %592 = vmatprep.subr.mxu0 %v490
    %593 = vmatpush1.msra.mxu0 %v489
    %594 = vmatprep.subr.mxu0 %v486
    %595 = vmatpush1.msra.mxu0 %v485
    %596 = vmatprep.subr.mxu0 %v482
    %597 = vmatpush1.msra.mxu0 %v481
    %598 = vmatprep.subr.mxu0 %v478
    %599 = vmatpush1.msra.mxu0 %v477
    %600 = vmatprep.subr.mxu0 %v474
    %601 = vmatpush1.msra.mxu0 %v473
    %602 = vmatprep.subr.mxu0 %v470
    %603 = vmatpush1.msra.mxu0 %v469
    %604 = vmatprep.subr.mxu0 %v466
    %605 = vmatpush1.msra.mxu0 %v465
    %606 = vmatprep.subr.mxu0 %v462
    %607 = vmatpush1.msra.mxu0 %v461
    %608 = vmatprep.subr.mxu0 %v458
    %609 = vmatpush1.msra.mxu0 %v457
    %610 = vmatprep.subr.mxu0 %v454
    %611 = vmatpush1.msra.mxu0 %v453
    %612 = vmatprep.subr.mxu0 %v450
    %613 = vmatpush1.msra.mxu0 %v449
    %614 = vmatprep.subr.mxu0 0.0
    %615 = vmatpush2.msra.mxu0 0.0
    %616 = vmatprep.subr.mxu0 0.0
    %617 = vmatpush2.msra.mxu0 0.0
    %618 = vmatprep.subr.mxu0 0.0
    %619 = vmatpush2.msra.mxu0 0.0
    %620 = vmatprep.subr.mxu0 0.0
    %621 = vmatpush2.msra.mxu0 0.0
    %622 = vmatprep.subr.mxu0 0.0
    %623 = vmatpush2.msra.mxu0 0.0
    %624 = vmatprep.subr.mxu0 0.0
    %625 = vmatpush2.msra.mxu0 0.0
    %626 = vmatprep.subr.mxu0 0.0
    %627 = vmatpush2.msra.mxu0 0.0
    %628 = vmatprep.subr.mxu0 0.0
    %629 = vmatpush2.msra.mxu0 0.0
    %630 = vmatprep.subr.mxu0 0.0
    %631 = vmatpush2.msra.mxu0 0.0
    %632 = vmatprep.subr.mxu0 0.0
    %633 = vmatpush2.msra.mxu0 0.0
    %634 = vmatprep.subr.mxu0 0.0
    %635 = vmatpush2.msra.mxu0 0.0
    %636 = vmatprep.subr.mxu0 0.0
    %637 = vmatpush2.msra.mxu0 0.0
    %638 = vmatprep.subr.mxu0 0.0
    %639 = vmatpush2.msra.mxu0 0.0
    %640 = vmatprep.subr.mxu0 0.0
    %641 = vmatpush2.msra.mxu0 0.0
    %642 = vmatprep.subr.mxu0 0.0
    %643 = vmatpush2.msra.mxu0 0.0
    %644 = vmatprep.subr.mxu0 0.0
    %645 = vmatpush2.msra.mxu0 0.0
    %646 = vmatprep.mubr.f32.mxu0 0.0
    %647 = vmatmul.mubr.f32.gmra.mxu0 0.0
    %v648 = vpop.f32.mrf.mxu0
    %v649 = vadd.f32 0.0, %v648
    %v650 = vpop.f32.mrf.mxu0
    %v651 = vadd.f32 0.0, %v650
    %652 = vdwg.mxu0
    %v653 = vadd.f32 %v443, %v578
    %v654 = vadd.f32 %v444, %v580
    %v655 = vadd.f32 %v445, %v649
    %v656 = vadd.f32 %v446, %v651
    %v657 = vxor.u32 %v653, 2147483648
    %v658 = vmul.f32 %v657, 1.442695
    %v659 = vpow.pop %v658
    %v660 = vadd.f32 %v659, 1.0
    %v661 = vrcp.pop %v660
    %v662 = vmul.f32 1.0, %v661
    %v663 = vxor.u32 %v654, 2147483648
    %v664 = vmul.f32 %v663, 1.442695
    %v665 = vpow.pop %v664
    %v666 = vadd.f32 %v665, 1.0
    %v667 = vrcp.pop %v666
    %v668 = vmul.f32 1.0, %v667
    %v669 = vtanh.pop %v655
    %v670 = vxor.u32 %v656, 2147483648
    %v671 = vmul.f32 %v670, 1.442695
    %v672 = vpow.pop %v671
    %v673 = vadd.f32 %v672, 1.0
    %v674 = vrcp.pop %v673
    %v675 = vmul.f32 1.0, %v674
    %v676 = vmul.f32 %v668, 0.0
    %v677 = vmul.f32 %v662, %v669
    %v678 = vadd.f32 %v676, %v677
    %v679 = vtanh.pop %v678
    %v680 = vmul.f32 %v675, %v679
    %v681 = vsel %vm442, 1, 0
    %682 = vset.pattern.permute.xlu0 0
    %683 = vperm.xlu0 %682, %v681
    %v684 = vpop.permute.xlu0 %683
    %vm685 = vcmp.eq.s32.totalorder %v684, 1
    %v686 = vsel %vm685, %v678, 0.0
    %v687 = vsel %vm685, %v680, 0.0
    %v688 = vld [vmem:[#allocation9] sm:$0xff]
    %v689 = vld [vmem:[#allocation9 + $0x8] sm:$0xff]
    %v690 = vld [vmem:[#allocation9 + $0x10] sm:$0xff]
    %v691 = vld [vmem:[#allocation9 + $0x18] sm:$0xff]
    %v692 = vld [vmem:[#allocation9 + $0x20] sm:$0xff]
    %v693 = vld [vmem:[#allocation9 + $0x28] sm:$0xff]
    %v694 = vld [vmem:[#allocation9 + $0x30] sm:$0xff]
    %v695 = vld [vmem:[#allocation9 + $0x38] sm:$0xff]
    %v696 = vld [vmem:[#allocation9 + $0x40] sm:$0xff]
    %v697 = vld [vmem:[#allocation9 + $0x48] sm:$0xff]
    %v698 = vld [vmem:[#allocation9 + $0x50] sm:$0xff]
    %v699 = vld [vmem:[#allocation9 + $0x58] sm:$0xff]
    %v700 = vld [vmem:[#allocation9 + $0x60] sm:$0xff]
    %v701 = vld [vmem:[#allocation9 + $0x68] sm:$0xff]
    %v702 = vld [vmem:[#allocation9 + $0x70] sm:$0xff]
    %v703 = vld [vmem:[#allocation9 + $0x78] sm:$0xff]
    %v704 = vld [vmem:[#allocation9 + $0x80] sm:$0xff]
    %v705 = vld [vmem:[#allocation9 + $0x88] sm:$0xff]
    %v706 = vld [vmem:[#allocation9 + $0x90] sm:$0xff]
    %v707 = vld [vmem:[#allocation9 + $0x98] sm:$0xff]
    %v708 = vld [vmem:[#allocation9 + $0xa0] sm:$0xff]
    %v709 = vld [vmem:[#allocation9 + $0xa8] sm:$0xff]
    %v710 = vld [vmem:[#allocation9 + $0xb0] sm:$0xff]
    %v711 = vld [vmem:[#allocation9 + $0xb8] sm:$0xff]
    %v712 = vld [vmem:[#allocation9 + $0xc0] sm:$0xff]
    %v713 = vld [vmem:[#allocation9 + $0xc8] sm:$0xff]
    %v714 = vld [vmem:[#allocation9 + $0xd0] sm:$0xff]
    %v715 = vld [vmem:[#allocation9 + $0xd8] sm:$0xff]
    %v716 = vld [vmem:[#allocation9 + $0xe0] sm:$0xff]
    %v717 = vld [vmem:[#allocation9 + $0xe8] sm:$0xff]
    %v718 = vld [vmem:[#allocation9 + $0xf0] sm:$0xff]
    %v719 = vld [vmem:[#allocation9 + $0xf8] sm:$0xff]
    %v720 = vld [vmem:[#allocation9 + $0x100] sm:$0xff]
    %v721 = vld [vmem:[#allocation9 + $0x108] sm:$0xff]
    %v722 = vld [vmem:[#allocation9 + $0x110] sm:$0xff]
    %v723 = vld [vmem:[#allocation9 + $0x118] sm:$0xff]
    %v724 = vld [vmem:[#allocation9 + $0x120] sm:$0xff]
    %v725 = vld [vmem:[#allocation9 + $0x128] sm:$0xff]
    %v726 = vld [vmem:[#allocation9 + $0x130] sm:$0xff]
    %v727 = vld [vmem:[#allocation9 + $0x138] sm:$0xff]
    %v728 = vld [vmem:[#allocation9 + $0x140] sm:$0xff]
    %v729 = vld [vmem:[#allocation9 + $0x148] sm:$0xff]
    %v730 = vld [vmem:[#allocation9 + $0x150] sm:$0xff]
    %v731 = vld [vmem:[#allocation9 + $0x158] sm:$0xff]
    %v732 = vld [vmem:[#allocation9 + $0x160] sm:$0xff]
    %v733 = vld [vmem:[#allocation9 + $0x168] sm:$0xff]
    %v734 = vld [vmem:[#allocation9 + $0x170] sm:$0xff]
    %v735 = vld [vmem:[#allocation9 + $0x178] sm:$0xff]
    %v736 = vld [vmem:[#allocation9 + $0x180] sm:$0xff]
    %v737 = vld [vmem:[#allocation9 + $0x188] sm:$0xff]
    %v738 = vld [vmem:[#allocation9 + $0x190] sm:$0xff]
    %v739 = vld [vmem:[#allocation9 + $0x198] sm:$0xff]
    %v740 = vld [vmem:[#allocation9 + $0x1a0] sm:$0xff]
    %v741 = vld [vmem:[#allocation9 + $0x1a8] sm:$0xff]
    %v742 = vld [vmem:[#allocation9 + $0x1b0] sm:$0xff]
    %v743 = vld [vmem:[#allocation9 + $0x1b8] sm:$0xff]
    %v744 = vld [vmem:[#allocation9 + $0x1c0] sm:$0xff]
    %v745 = vld [vmem:[#allocation9 + $0x1c8] sm:$0xff]
    %v746 = vld [vmem:[#allocation9 + $0x1d0] sm:$0xff]
    %v747 = vld [vmem:[#allocation9 + $0x1d8] sm:$0xff]
    %v748 = vld [vmem:[#allocation9 + $0x1e0] sm:$0xff]
    %v749 = vld [vmem:[#allocation9 + $0x1e8] sm:$0xff]
    %v750 = vld [vmem:[#allocation9 + $0x1f0] sm:$0xff]
    %v751 = vld [vmem:[#allocation9 + $0x1f8] sm:$0xff]
    %v752 = vld [vmem:[#allocation9 + $0x200] sm:$0xff]
    %v753 = vld [vmem:[#allocation9 + $0x208] sm:$0xff]
    %v754 = vld [vmem:[#allocation9 + $0x210] sm:$0xff]
    %v755 = vld [vmem:[#allocation9 + $0x218] sm:$0xff]
    %v756 = vld [vmem:[#allocation9 + $0x220] sm:$0xff]
    %v757 = vld [vmem:[#allocation9 + $0x228] sm:$0xff]
    %v758 = vld [vmem:[#allocation9 + $0x230] sm:$0xff]
    %v759 = vld [vmem:[#allocation9 + $0x238] sm:$0xff]
    %v760 = vld [vmem:[#allocation9 + $0x240] sm:$0xff]
    %v761 = vld [vmem:[#allocation9 + $0x248] sm:$0xff]
    %v762 = vld [vmem:[#allocation9 + $0x250] sm:$0xff]
    %v763 = vld [vmem:[#allocation9 + $0x258] sm:$0xff]
    %v764 = vld [vmem:[#allocation9 + $0x260] sm:$0xff]
    %v765 = vld [vmem:[#allocation9 + $0x268] sm:$0xff]
    %v766 = vld [vmem:[#allocation9 + $0x270] sm:$0xff]
    %v767 = vld [vmem:[#allocation9 + $0x278] sm:$0xff]
    %v768 = vld [vmem:[#allocation9 + $0x280] sm:$0xff]
    %v769 = vld [vmem:[#allocation9 + $0x288] sm:$0xff]
    %v770 = vld [vmem:[#allocation9 + $0x290] sm:$0xff]
    %v771 = vld [vmem:[#allocation9 + $0x298] sm:$0xff]
    %v772 = vld [vmem:[#allocation9 + $0x2a0] sm:$0xff]
    %v773 = vld [vmem:[#allocation9 + $0x2a8] sm:$0xff]
    %v774 = vld [vmem:[#allocation9 + $0x2b0] sm:$0xff]
    %v775 = vld [vmem:[#allocation9 + $0x2b8] sm:$0xff]
    %v776 = vld [vmem:[#allocation9 + $0x2c0] sm:$0xff]
    %v777 = vld [vmem:[#allocation9 + $0x2c8] sm:$0xff]
    %v778 = vld [vmem:[#allocation9 + $0x2d0] sm:$0xff]
    %v779 = vld [vmem:[#allocation9 + $0x2d8] sm:$0xff]
    %v780 = vld [vmem:[#allocation9 + $0x2e0] sm:$0xff]
    %v781 = vld [vmem:[#allocation9 + $0x2e8] sm:$0xff]
    %v782 = vld [vmem:[#allocation9 + $0x2f0] sm:$0xff]
    %v783 = vld [vmem:[#allocation9 + $0x2f8] sm:$0xff]
    %v784 = vld [vmem:[#allocation9 + $0x300] sm:$0xff]
    %v785 = vld [vmem:[#allocation9 + $0x308] sm:$0xff]
    %v786 = vld [vmem:[#allocation9 + $0x310] sm:$0xff]
    %v787 = vld [vmem:[#allocation9 + $0x318] sm:$0xff]
    %v788 = vld [vmem:[#allocation9 + $0x320] sm:$0xff]
    %v789 = vld [vmem:[#allocation9 + $0x328] sm:$0xff]
    %v790 = vld [vmem:[#allocation9 + $0x330] sm:$0xff]
    %v791 = vld [vmem:[#allocation9 + $0x338] sm:$0xff]
    %v792 = vld [vmem:[#allocation9 + $0x340] sm:$0xff]
    %v793 = vld [vmem:[#allocation9 + $0x348] sm:$0xff]
    %v794 = vld [vmem:[#allocation9 + $0x350] sm:$0xff]
    %v795 = vld [vmem:[#allocation9 + $0x358] sm:$0xff]
    %v796 = vld [vmem:[#allocation9 + $0x360] sm:$0xff]
    %v797 = vld [vmem:[#allocation9 + $0x368] sm:$0xff]
    %v798 = vld [vmem:[#allocation9 + $0x370] sm:$0xff]
    %v799 = vld [vmem:[#allocation9 + $0x378] sm:$0xff]
    %v800 = vld [vmem:[#allocation9 + $0x380] sm:$0xff]
    %v801 = vld [vmem:[#allocation9 + $0x388] sm:$0xff]
    %v802 = vld [vmem:[#allocation9 + $0x390] sm:$0xff]
    %v803 = vld [vmem:[#allocation9 + $0x398] sm:$0xff]
    %v804 = vld [vmem:[#allocation9 + $0x3a0] sm:$0xff]
    %v805 = vld [vmem:[#allocation9 + $0x3a8] sm:$0xff]
    %v806 = vld [vmem:[#allocation9 + $0x3b0] sm:$0xff]
    %v807 = vld [vmem:[#allocation9 + $0x3b8] sm:$0xff]
    %v808 = vld [vmem:[#allocation9 + $0x3c0] sm:$0xff]
    %v809 = vld [vmem:[#allocation9 + $0x3c8] sm:$0xff]
    %v810 = vld [vmem:[#allocation9 + $0x3d0] sm:$0xff]
    %v811 = vld [vmem:[#allocation9 + $0x3d8] sm:$0xff]
    %v812 = vld [vmem:[#allocation9 + $0x3e0] sm:$0xff]
    %v813 = vld [vmem:[#allocation9 + $0x3e8] sm:$0xff]
    %v814 = vld [vmem:[#allocation9 + $0x3f0] sm:$0xff]
    %v815 = vld [vmem:[#allocation9 + $0x3f8] sm:$0xff]
    %816 = vmatprep.subr.mxu0 %v749
    %817 = vmatpush1.msra.mxu0 %v748
    %818 = vmatprep.subr.mxu0 %v745
    %819 = vmatpush1.msra.mxu0 %v744
    %820 = vmatprep.subr.mxu0 %v741
    %821 = vmatpush1.msra.mxu0 %v740
    %822 = vmatprep.subr.mxu0 %v737
    %823 = vmatpush1.msra.mxu0 %v736
    %824 = vmatprep.subr.mxu0 %v733
    %825 = vmatpush1.msra.mxu0 %v732
    %826 = vmatprep.subr.mxu0 %v729
    %827 = vmatpush1.msra.mxu0 %v728
    %828 = vmatprep.subr.mxu0 %v725
    %829 = vmatpush1.msra.mxu0 %v724
    %830 = vmatprep.subr.mxu0 %v721
    %831 = vmatpush1.msra.mxu0 %v720
    %832 = vmatprep.subr.mxu0 %v717
    %833 = vmatpush1.msra.mxu0 %v716
    %834 = vmatprep.subr.mxu0 %v713
    %835 = vmatpush1.msra.mxu0 %v712
    %836 = vmatprep.subr.mxu0 %v709
    %837 = vmatpush1.msra.mxu0 %v708
    %838 = vmatprep.subr.mxu0 %v705
    %839 = vmatpush1.msra.mxu0 %v704
    %840 = vmatprep.subr.mxu0 %v701
    %841 = vmatpush1.msra.mxu0 %v700
    %842 = vmatprep.subr.mxu0 %v697
    %843 = vmatpush1.msra.mxu0 %v696
    %844 = vmatprep.subr.mxu0 %v693
    %845 = vmatpush1.msra.mxu0 %v692
    %846 = vmatprep.subr.mxu0 %v689
    %847 = vmatpush1.msra.mxu0 %v688
    %848 = vmatprep.subr.mxu0 %v813
    %849 = vmatpush2.msra.mxu0 %v812
    %850 = vmatprep.subr.mxu0 %v809
    %851 = vmatpush2.msra.mxu0 %v808
    %852 = vmatprep.subr.mxu0 %v805
    %853 = vmatpush2.msra.mxu0 %v804
    %854 = vmatprep.subr.mxu0 %v801
    %855 = vmatpush2.msra.mxu0 %v800
    %856 = vmatprep.subr.mxu0 %v797
    %857 = vmatpush2.msra.mxu0 %v796
    %858 = vmatprep.subr.mxu0 %v793
    %859 = vmatpush2.msra.mxu0 %v792
    %860 = vmatprep.subr.mxu0 %v789
    %861 = vmatpush2.msra.mxu0 %v788
    %862 = vmatprep.subr.mxu0 %v785
    %863 = vmatpush2.msra.mxu0 %v784
    %864 = vmatprep.subr.mxu0 %v781
    %865 = vmatpush2.msra.mxu0 %v780
    %866 = vmatprep.subr.mxu0 %v777
    %867 = vmatpush2.msra.mxu0 %v776
    %868 = vmatprep.subr.mxu0 %v773
    %869 = vmatpush2.msra.mxu0 %v772
    %870 = vmatprep.subr.mxu0 %v769
    %871 = vmatpush2.msra.mxu0 %v768
    %872 = vmatprep.subr.mxu0 %v765
    %873 = vmatpush2.msra.mxu0 %v764
    %874 = vmatprep.subr.mxu0 %v761
    %875 = vmatpush2.msra.mxu0 %v760
    %876 = vmatprep.subr.mxu0 %v757
    %877 = vmatpush2.msra.mxu0 %v756
    %878 = vmatprep.subr.mxu0 %v753
    %879 = vmatpush2.msra.mxu0 %v752
    %880 = vmatprep.mubr.f32.mxu0 0.0
    %881 = vmatmul.mubr.f32.gmra.mxu0 %v687
    %v882 = vpop.f32.mrf.mxu0
    %v883 = vadd.f32 %v425, %v882
    %v884 = vpop.f32.mrf.mxu0
    %v885 = vadd.f32 %v429, %v884
    %886 = vdwg.mxu0
    %887 = vmatprep.subr.mxu0 %v751
    %888 = vmatpush1.msra.mxu0 %v750
    %889 = vmatprep.subr.mxu0 %v747
    %890 = vmatpush1.msra.mxu0 %v746
    %891 = vmatprep.subr.mxu0 %v743
    %892 = vmatpush1.msra.mxu0 %v742
    %893 = vmatprep.subr.mxu0 %v739
    %894 = vmatpush1.msra.mxu0 %v738
    %895 = vmatprep.subr.mxu0 %v735
    %896 = vmatpush1.msra.mxu0 %v734
    %897 = vmatprep.subr.mxu0 %v731
    %898 = vmatpush1.msra.mxu0 %v730
    %899 = vmatprep.subr.mxu0 %v727
    %900 = vmatpush1.msra.mxu0 %v726
    %901 = vmatprep.subr.mxu0 %v723
    %902 = vmatpush1.msra.mxu0 %v722
    %903 = vmatprep.subr.mxu0 %v719
    %904 = vmatpush1.msra.mxu0 %v718
    %905 = vmatprep.subr.mxu0 %v715
    %906 = vmatpush1.msra.mxu0 %v714
    %907 = vmatprep.subr.mxu0 %v711
    %908 = vmatpush1.msra.mxu0 %v710
    %909 = vmatprep.subr.mxu0 %v707
    %910 = vmatpush1.msra.mxu0 %v706
    %911 = vmatprep.subr.mxu0 %v703
    %912 = vmatpush1.msra.mxu0 %v702
    %913 = vmatprep.subr.mxu0 %v699
    %914 = vmatpush1.msra.mxu0 %v698
    %915 = vmatprep.subr.mxu0 %v695
    %916 = vmatpush1.msra.mxu0 %v694
    %917 = vmatprep.subr.mxu0 %v691
    %918 = vmatpush1.msra.mxu0 %v690
    %919 = vmatprep.subr.mxu0 %v815
    %920 = vmatpush2.msra.mxu0 %v814
    %921 = vmatprep.subr.mxu0 %v811
    %922 = vmatpush2.msra.mxu0 %v810
    %923 = vmatprep.subr.mxu0 %v807
    %924 = vmatpush2.msra.mxu0 %v806
    %925 = vmatprep.subr.mxu0 %v803
    %926 = vmatpush2.msra.mxu0 %v802
    %927 = vmatprep.subr.mxu0 %v799
    %928 = vmatpush2.msra.mxu0 %v798
    %929 = vmatprep.subr.mxu0 %v795
    %930 = vmatpush2.msra.mxu0 %v794
    %931 = vmatprep.subr.mxu0 %v791
    %932 = vmatpush2.msra.mxu0 %v790
    %933 = vmatprep.subr.mxu0 %v787
    %934 = vmatpush2.msra.mxu0 %v786
    %935 = vmatprep.subr.mxu0 %v783
    %936 = vmatpush2.msra.mxu0 %v782
    %937 = vmatprep.subr.mxu0 %v779
    %938 = vmatpush2.msra.mxu0 %v778
    %939 = vmatprep.subr.mxu0 %v775
    %940 = vmatpush2.msra.mxu0 %v774
    %941 = vmatprep.subr.mxu0 %v771
    %942 = vmatpush2.msra.mxu0 %v770
    %943 = vmatprep.subr.mxu0 %v767
    %944 = vmatpush2.msra.mxu0 %v766
    %945 = vmatprep.subr.mxu0 %v763
    %946 = vmatpush2.msra.mxu0 %v762
    %947 = vmatprep.subr.mxu0 %v759
    %948 = vmatpush2.msra.mxu0 %v758
    %949 = vmatprep.subr.mxu0 %v755
    %950 = vmatpush2.msra.mxu0 %v754
    %951 = vmatprep.mubr.f32.mxu0 0.0
    %952 = vmatmul.mubr.f32.gmra.mxu0 %v687
    %v953 = vpop.f32.mrf.mxu0
    %v954 = vadd.f32 %v433, %v953
    %v955 = vpop.f32.mrf.mxu0
    %v956 = vadd.f32 %v437, %v955
    %957 = vdwg.mxu0
    %v958 = vxor.u32 %v883, 2147483648
    %v959 = vmul.f32 %v958, 1.442695
    %v960 = vpow.pop %v959
    %v961 = vadd.f32 %v960, 1.0
    %v962 = vrcp.pop %v961
    %v963 = vmul.f32 1.0, %v962
    %v964 = vxor.u32 %v885, 2147483648
    %v965 = vmul.f32 %v964, 1.442695
    %v966 = vpow.pop %v965
    %v967 = vadd.f32 %v966, 1.0
    %v968 = vrcp.pop %v967
    %v969 = vmul.f32 1.0, %v968
    %v970 = vtanh.pop %v954
    %v971 = vxor.u32 %v956, 2147483648
    %v972 = vmul.f32 %v971, 1.442695
    %v973 = vpow.pop %v972
    %v974 = vadd.f32 %v973, 1.0
    %v975 = vrcp.pop %v974
    %v976 = vmul.f32 1.0, %v975
    %v977 = vmul.f32 %v969, 0.0
    %v978 = vmul.f32 %v963, %v970
    %v979 = vadd.f32 %v977, %v978
    %v980 = vtanh.pop %v979
    %v981 = vmul.f32 %v976, %v980
    %v982 = vsel %vm685, %v979, 0.0
    %v983 = vsel %vm685, %v981, 0.0
    %vm984 = vcmp.gt.s32.totalorder %v419, 1
    %s985 = scalar_lea.vmem [#allocation2], 32
    %v986 = vld [vmem:[%s985] sm:$0xff]
    %v987 = vld [vmem:[%s985 + $0x8] sm:$0xff]
    %v988 = vld [vmem:[%s985 + $0x10] sm:$0xff]
    %v989 = vld [vmem:[%s985 + $0x18] sm:$0xff]
    %990 = vmatprep.subr.mxu0 %v508
    %991 = vmatpush1.msra.mxu0 %v507
    %992 = vmatprep.subr.mxu0 %v504
    %993 = vmatpush1.msra.mxu0 %v503
    %994 = vmatprep.subr.mxu0 %v500
    %995 = vmatpush1.msra.mxu0 %v499
    %996 = vmatprep.subr.mxu0 %v496
    %997 = vmatpush1.msra.mxu0 %v495
    %998 = vmatprep.subr.mxu0 %v492
    %999 = vmatpush1.msra.mxu0 %v491
    %1000 = vmatprep.subr.mxu0 %v488
    %1001 = vmatpush1.msra.mxu0 %v487
    %1002 = vmatprep.subr.mxu0 %v484
    %1003 = vmatpush1.msra.mxu0 %v483
    %1004 = vmatprep.subr.mxu0 %v480
    %1005 = vmatpush1.msra.mxu0 %v479
    %1006 = vmatprep.subr.mxu0 %v476
    %1007 = vmatpush1.msra.mxu0 %v475
    %1008 = vmatprep.subr.mxu0 %v472
    %1009 = vmatpush1.msra.mxu0 %v471
    %1010 = vmatprep.subr.mxu0 %v468
    %1011 = vmatpush1.msra.mxu0 %v467
    %1012 = vmatprep.subr.mxu0 %v464
    %1013 = vmatpush1.msra.mxu0 %v463
    %1014 = vmatprep.subr.mxu0 %v460
    %1015 = vmatpush1.msra.mxu0 %v459
    %1016 = vmatprep.subr.mxu0 %v456
    %1017 = vmatpush1.msra.mxu0 %v455
    %1018 = vmatprep.subr.mxu0 %v452
    %1019 = vmatpush1.msra.mxu0 %v451
    %1020 = vmatprep.subr.mxu0 %v448
    %1021 = vmatpush1.msra.mxu0 %v447
    %1022 = vmatprep.subr.mxu0 0.0
    %1023 = vmatpush2.msra.mxu0 0.0
    %1024 = vmatprep.subr.mxu0 0.0
    %1025 = vmatpush2.msra.mxu0 0.0
    %1026 = vmatprep.subr.mxu0 0.0
    %1027 = vmatpush2.msra.mxu0 0.0
    %1028 = vmatprep.subr.mxu0 0.0
    %1029 = vmatpush2.msra.mxu0 0.0
    %1030 = vmatprep.subr.mxu0 0.0
    %1031 = vmatpush2.msra.mxu0 0.0
    %1032 = vmatprep.subr.mxu0 0.0
    %1033 = vmatpush2.msra.mxu0 0.0
    %1034 = vmatprep.subr.mxu0 0.0
    %1035 = vmatpush2.msra.mxu0 0.0
    %1036 = vmatprep.subr.mxu0 0.0
    %1037 = vmatpush2.msra.mxu0 0.0
    %1038 = vmatprep.subr.mxu0 0.0
    %1039 = vmatpush2.msra.mxu0 0.0
    %1040 = vmatprep.subr.mxu0 0.0
    %1041 = vmatpush2.msra.mxu0 0.0
    %1042 = vmatprep.subr.mxu0 0.0
    %1043 = vmatpush2.msra.mxu0 0.0
    %1044 = vmatprep.subr.mxu0 0.0
    %1045 = vmatpush2.msra.mxu0 0.0
    %1046 = vmatprep.subr.mxu0 0.0
    %1047 = vmatpush2.msra.mxu0 0.0
    %1048 = vmatprep.subr.mxu0 0.0
    %1049 = vmatpush2.msra.mxu0 0.0
    %1050 = vmatprep.subr.mxu0 0.0
    %1051 = vmatpush2.msra.mxu0 0.0
    %1052 = vmatprep.subr.mxu0 0.0
    %1053 = vmatpush2.msra.mxu0 0.0
    %1054 = vmatprep.mubr.f32.mxu0 0.0
    %1055 = vmatmul.mubr.f32.gmra.mxu0 %v687
    %v1056 = vpop.f32.mrf.mxu0
    %v1057 = vadd.f32 0.0, %v1056
    %v1058 = vpop.f32.mrf.mxu0
    %v1059 = vadd.f32 0.0, %v1058
    %1060 = vdwg.mxu0
    %1061 = vmatprep.subr.mxu0 %v510
    %1062 = vmatpush1.msra.mxu0 %v509
    %1063 = vmatprep.subr.mxu0 %v506
    %1064 = vmatpush1.msra.mxu0 %v505
    %1065 = vmatprep.subr.mxu0 %v502
    %1066 = vmatpush1.msra.mxu0 %v501
    %1067 = vmatprep.subr.mxu0 %v498
    %1068 = vmatpush1.msra.mxu0 %v497
    %1069 = vmatprep.subr.mxu0 %v494
    %1070 = vmatpush1.msra.mxu0 %v493
    %1071 = vmatprep.subr.mxu0 %v490
    %1072 = vmatpush1.msra.mxu0 %v489
    %1073 = vmatprep.subr.mxu0 %v486
    %1074 = vmatpush1.msra.mxu0 %v485
    %1075 = vmatprep.subr.mxu0 %v482
    %1076 = vmatpush1.msra.mxu0 %v481
    %1077 = vmatprep.subr.mxu0 %v478
    %1078 = vmatpush1.msra.mxu0 %v477
    %1079 = vmatprep.subr.mxu0 %v474
    %1080 = vmatpush1.msra.mxu0 %v473
    %1081 = vmatprep.subr.mxu0 %v470
    %1082 = vmatpush1.msra.mxu0 %v469
    %1083 = vmatprep.subr.mxu0 %v466
    %1084 = vmatpush1.msra.mxu0 %v465
    %1085 = vmatprep.subr.mxu0 %v462
    %1086 = vmatpush1.msra.mxu0 %v461
    %1087 = vmatprep.subr.mxu0 %v458
    %1088 = vmatpush1.msra.mxu0 %v457
    %1089 = vmatprep.subr.mxu0 %v454
    %1090 = vmatpush1.msra.mxu0 %v453
    %1091 = vmatprep.subr.mxu0 %v450
    %1092 = vmatpush1.msra.mxu0 %v449
    %1093 = vmatprep.subr.mxu0 0.0
    %1094 = vmatpush2.msra.mxu0 0.0
    %1095 = vmatprep.subr.mxu0 0.0
    %1096 = vmatpush2.msra.mxu0 0.0
    %1097 = vmatprep.subr.mxu0 0.0
    %1098 = vmatpush2.msra.mxu0 0.0
    %1099 = vmatprep.subr.mxu0 0.0
    %1100 = vmatpush2.msra.mxu0 0.0
    %1101 = vmatprep.subr.mxu0 0.0
    %1102 = vmatpush2.msra.mxu0 0.0
    %1103 = vmatprep.subr.mxu0 0.0
    %1104 = vmatpush2.msra.mxu0 0.0
    %1105 = vmatprep.subr.mxu0 0.0
    %1106 = vmatpush2.msra.mxu0 0.0
    %1107 = vmatprep.subr.mxu0 0.0
    %1108 = vmatpush2.msra.mxu0 0.0
    %1109 = vmatprep.subr.mxu0 0.0
    %1110 = vmatpush2.msra.mxu0 0.0
    %1111 = vmatprep.subr.mxu0 0.0
    %1112 = vmatpush2.msra.mxu0 0.0
    %1113 = vmatprep.subr.mxu0 0.0
    %1114 = vmatpush2.msra.mxu0 0.0
    %1115 = vmatprep.subr.mxu0 0.0
    %1116 = vmatpush2.msra.mxu0 0.0
    %1117 = vmatprep.subr.mxu0 0.0
    %1118 = vmatpush2.msra.mxu0 0.0
    %1119 = vmatprep.subr.mxu0 0.0
    %1120 = vmatpush2.msra.mxu0 0.0
    %1121 = vmatprep.subr.mxu0 0.0
    %1122 = vmatpush2.msra.mxu0 0.0
    %1123 = vmatprep.subr.mxu0 0.0
    %1124 = vmatpush2.msra.mxu0 0.0
    %1125 = vmatprep.mubr.f32.mxu0 0.0
    %1126 = vmatmul.mubr.f32.gmra.mxu0 %v687
    %v1127 = vpop.f32.mrf.mxu0
    %v1128 = vadd.f32 0.0, %v1127
    %v1129 = vpop.f32.mrf.mxu0
    %v1130 = vadd.f32 0.0, %v1129
    %1131 = vdwg.mxu0
    %v1132 = vadd.f32 %v986, %v1057
    %v1133 = vadd.f32 %v987, %v1059
    %v1134 = vadd.f32 %v988, %v1128
    %v1135 = vadd.f32 %v989, %v1130
    %v1136 = vxor.u32 %v1132, 2147483648
    %v1137 = vmul.f32 %v1136, 1.442695
    %v1138 = vpow.pop %v1137
    %v1139 = vadd.f32 %v1138, 1.0
    %v1140 = vrcp.pop %v1139
    %v1141 = vmul.f32 1.0, %v1140
    %v1142 = vxor.u32 %v1133, 2147483648
    %v1143 = vmul.f32 %v1142, 1.442695
    %v1144 = vpow.pop %v1143
    %v1145 = vadd.f32 %v1144, 1.0
    %v1146 = vrcp.pop %v1145
    %v1147 = vmul.f32 1.0, %v1146
    %v1148 = vtanh.pop %v1134
    %v1149 = vxor.u32 %v1135, 2147483648
    %v1150 = vmul.f32 %v1149, 1.442695
    %v1151 = vpow.pop %v1150
    %v1152 = vadd.f32 %v1151, 1.0
    %v1153 = vrcp.pop %v1152
    %v1154 = vmul.f32 1.0, %v1153
    %v1155 = vmul.f32 %v1147, %v686
    %v1156 = vmul.f32 %v1141, %v1148
    %v1157 = vadd.f32 %v1155, %v1156
    %v1158 = vtanh.pop %v1157
    %v1159 = vmul.f32 %v1154, %v1158
    %v1160 = vsel %vm984, 1, 0
    %1161 = vset.pattern.permute.xlu0 0
    %1162 = vperm.xlu0 %1161, %v1160
    %v1163 = vpop.permute.xlu0 %1162
    %vm1164 = vcmp.eq.s32.totalorder %v1163, 1
    %v1165 = vsel %vm1164, %v1157, %v686
    %v1166 = vsel %vm1164, %v1159, %v687
    %1167 = vmatprep.subr.mxu0 %v749
    %1168 = vmatpush1.msra.mxu0 %v748
    %1169 = vmatprep.subr.mxu0 %v745
    %1170 = vmatpush1.msra.mxu0 %v744
    %1171 = vmatprep.subr.mxu0 %v741
    %1172 = vmatpush1.msra.mxu0 %v740
    %1173 = vmatprep.subr.mxu0 %v737
    %1174 = vmatpush1.msra.mxu0 %v736
    %1175 = vmatprep.subr.mxu0 %v733
    %1176 = vmatpush1.msra.mxu0 %v732
    %1177 = vmatprep.subr.mxu0 %v729
    %1178 = vmatpush1.msra.mxu0 %v728
    %1179 = vmatprep.subr.mxu0 %v725
    %1180 = vmatpush1.msra.mxu0 %v724
    %1181 = vmatprep.subr.mxu0 %v721
    %1182 = vmatpush1.msra.mxu0 %v720
    %1183 = vmatprep.subr.mxu0 %v717
    %1184 = vmatpush1.msra.mxu0 %v716
    %1185 = vmatprep.subr.mxu0 %v713
    %1186 = vmatpush1.msra.mxu0 %v712
    %1187 = vmatprep.subr.mxu0 %v709
    %1188 = vmatpush1.msra.mxu0 %v708
    %1189 = vmatprep.subr.mxu0 %v705
    %1190 = vmatpush1.msra.mxu0 %v704
    %1191 = vmatprep.subr.mxu0 %v701
    %1192 = vmatpush1.msra.mxu0 %v700
    %1193 = vmatprep.subr.mxu0 %v697
    %1194 = vmatpush1.msra.mxu0 %v696
    %1195 = vmatprep.subr.mxu0 %v693
    %1196 = vmatpush1.msra.mxu0 %v692
    %1197 = vmatprep.subr.mxu0 %v689
    %1198 = vmatpush1.msra.mxu0 %v688
    %1199 = vmatprep.subr.mxu0 %v813
    %1200 = vmatpush2.msra.mxu0 %v812
    %1201 = vmatprep.subr.mxu0 %v809
    %1202 = vmatpush2.msra.mxu0 %v808
    %1203 = vmatprep.subr.mxu0 %v805
    %1204 = vmatpush2.msra.mxu0 %v804
    %1205 = vmatprep.subr.mxu0 %v801
    %1206 = vmatpush2.msra.mxu0 %v800
    %1207 = vmatprep.subr.mxu0 %v797
    %1208 = vmatpush2.msra.mxu0 %v796
    %1209 = vmatprep.subr.mxu0 %v793
    %1210 = vmatpush2.msra.mxu0 %v792
    %1211 = vmatprep.subr.mxu0 %v789
    %1212 = vmatpush2.msra.mxu0 %v788
    %1213 = vmatprep.subr.mxu0 %v785
    %1214 = vmatpush2.msra.mxu0 %v784
    %1215 = vmatprep.subr.mxu0 %v781
    %1216 = vmatpush2.msra.mxu0 %v780
    %1217 = vmatprep.subr.mxu0 %v777
    %1218 = vmatpush2.msra.mxu0 %v776
    %1219 = vmatprep.subr.mxu0 %v773
    %1220 = vmatpush2.msra.mxu0 %v772
    %1221 = vmatprep.subr.mxu0 %v769
    %1222 = vmatpush2.msra.mxu0 %v768
    %1223 = vmatprep.subr.mxu0 %v765
    %1224 = vmatpush2.msra.mxu0 %v764
    %1225 = vmatprep.subr.mxu0 %v761
    %1226 = vmatpush2.msra.mxu0 %v760
    %1227 = vmatprep.subr.mxu0 %v757
    %1228 = vmatpush2.msra.mxu0 %v756
    %1229 = vmatprep.subr.mxu0 %v753
    %1230 = vmatpush2.msra.mxu0 %v752
    %1231 = vmatprep.mubr.f32.mxu0 %v983
    %1232 = vmatmul.mubr.f32.gmra.mxu0 %v1166
    %v1233 = vpop.f32.mrf.mxu0
    %v1234 = vadd.f32 %v425, %v1233
    %v1235 = vpop.f32.mrf.mxu0
    %v1236 = vadd.f32 %v429, %v1235
    %1237 = vdwg.mxu0
    %1238 = vmatprep.subr.mxu0 %v751
    %1239 = vmatpush1.msra.mxu0 %v750
    %1240 = vmatprep.subr.mxu0 %v747
    %1241 = vmatpush1.msra.mxu0 %v746
    %1242 = vmatprep.subr.mxu0 %v743
    %1243 = vmatpush1.msra.mxu0 %v742
    %1244 = vmatprep.subr.mxu0 %v739
    %1245 = vmatpush1.msra.mxu0 %v738
    %1246 = vmatprep.subr.mxu0 %v735
    %1247 = vmatpush1.msra.mxu0 %v734
    %1248 = vmatprep.subr.mxu0 %v731
    %1249 = vmatpush1.msra.mxu0 %v730
    %1250 = vmatprep.subr.mxu0 %v727
    %1251 = vmatpush1.msra.mxu0 %v726
    %1252 = vmatprep.subr.mxu0 %v723
    %1253 = vmatpush1.msra.mxu0 %v722
    %1254 = vmatprep.subr.mxu0 %v719
    %1255 = vmatpush1.msra.mxu0 %v718
    %1256 = vmatprep.subr.mxu0 %v715
    %1257 = vmatpush1.msra.mxu0 %v714
    %1258 = vmatprep.subr.mxu0 %v711
    %1259 = vmatpush1.msra.mxu0 %v710
    %1260 = vmatprep.subr.mxu0 %v707
    %1261 = vmatpush1.msra.mxu0 %v706
    %1262 = vmatprep.subr.mxu0 %v703
    %1263 = vmatpush1.msra.mxu0 %v702
    %1264 = vmatprep.subr.mxu0 %v699
    %1265 = vmatpush1.msra.mxu0 %v698
    %1266 = vmatprep.subr.mxu0 %v695
    %1267 = vmatpush1.msra.mxu0 %v694
    %1268 = vmatprep.subr.mxu0 %v691
    %1269 = vmatpush1.msra.mxu0 %v690
    %1270 = vmatprep.subr.mxu0 %v815
    %1271 = vmatpush2.msra.mxu0 %v814
    %1272 = vmatprep.subr.mxu0 %v811
    %1273 = vmatpush2.msra.mxu0 %v810
    %1274 = vmatprep.subr.mxu0 %v807
    %1275 = vmatpush2.msra.mxu0 %v806
    %1276 = vmatprep.subr.mxu0 %v803
    %1277 = vmatpush2.msra.mxu0 %v802
    %1278 = vmatprep.subr.mxu0 %v799
    %1279 = vmatpush2.msra.mxu0 %v798
    %1280 = vmatprep.subr.mxu0 %v795
    %1281 = vmatpush2.msra.mxu0 %v794
    %1282 = vmatprep.subr.mxu0 %v791
    %1283 = vmatpush2.msra.mxu0 %v790
    %1284 = vmatprep.subr.mxu0 %v787
    %1285 = vmatpush2.msra.mxu0 %v786
    %1286 = vmatprep.subr.mxu0 %v783
    %1287 = vmatpush2.msra.mxu0 %v782
    %1288 = vmatprep.subr.mxu0 %v779
    %1289 = vmatpush2.msra.mxu0 %v778
    %1290 = vmatprep.subr.mxu0 %v775
    %1291 = vmatpush2.msra.mxu0 %v774
    %1292 = vmatprep.subr.mxu0 %v771
    %1293 = vmatpush2.msra.mxu0 %v770
    %1294 = vmatprep.subr.mxu0 %v767
    %1295 = vmatpush2.msra.mxu0 %v766
    %1296 = vmatprep.subr.mxu0 %v763
    %1297 = vmatpush2.msra.mxu0 %v762
    %1298 = vmatprep.subr.mxu0 %v759
    %1299 = vmatpush2.msra.mxu0 %v758
    %1300 = vmatprep.subr.mxu0 %v755
    %1301 = vmatpush2.msra.mxu0 %v754
    %1302 = vmatprep.mubr.f32.mxu0 %v983
    %1303 = vmatmul.mubr.f32.gmra.mxu0 %v1166
    %v1304 = vpop.f32.mrf.mxu0
    %v1305 = vadd.f32 %v433, %v1304
    %v1306 = vpop.f32.mrf.mxu0
    %v1307 = vadd.f32 %v437, %v1306
    %1308 = vdwg.mxu0
    %v1309 = vxor.u32 %v1234, 2147483648
    %v1310 = vmul.f32 %v1309, 1.442695
    %v1311 = vpow.pop %v1310
    %v1312 = vadd.f32 %v1311, 1.0
    %v1313 = vrcp.pop %v1312
    %v1314 = vmul.f32 1.0, %v1313
    %v1315 = vxor.u32 %v1236, 2147483648
    %v1316 = vmul.f32 %v1315, 1.442695
    %v1317 = vpow.pop %v1316
    %v1318 = vadd.f32 %v1317, 1.0
    %v1319 = vrcp.pop %v1318
    %v1320 = vmul.f32 1.0, %v1319
    %v1321 = vtanh.pop %v1305
    %v1322 = vxor.u32 %v1307, 2147483648
    %v1323 = vmul.f32 %v1322, 1.442695
    %v1324 = vpow.pop %v1323
    %v1325 = vadd.f32 %v1324, 1.0
    %v1326 = vrcp.pop %v1325
    %v1327 = vmul.f32 1.0, %v1326
    %v1328 = vmul.f32 %v1320, %v982
    %v1329 = vmul.f32 %v1314, %v1321
    %v1330 = vadd.f32 %v1328, %v1329
    %v1331 = vtanh.pop %v1330
    %v1332 = vmul.f32 %v1327, %v1331
    %v1333 = vsel %vm1164, %v1330, %v982
    %v1334 = vsel %vm1164, %v1332, %v983
    %vm1335 = vcmp.gt.s32.totalorder %v419, 2
    %s1336 = scalar_lea.vmem [#allocation2], 64
    %v1337 = vld [vmem:[%s1336] sm:$0xff]
    %v1338 = vld [vmem:[%s1336 + $0x8] sm:$0xff]
    %v1339 = vld [vmem:[%s1336 + $0x10] sm:$0xff]
    %v1340 = vld [vmem:[%s1336 + $0x18] sm:$0xff]
    %1341 = vmatprep.subr.mxu0 %v508
    %1342 = vmatpush1.msra.mxu0 %v507
    %1343 = vmatprep.subr.mxu0 %v504
    %1344 = vmatpush1.msra.mxu0 %v503
    %1345 = vmatprep.subr.mxu0 %v500
    %1346 = vmatpush1.msra.mxu0 %v499
    %1347 = vmatprep.subr.mxu0 %v496
    %1348 = vmatpush1.msra.mxu0 %v495
    %1349 = vmatprep.subr.mxu0 %v492
    %1350 = vmatpush1.msra.mxu0 %v491
    %1351 = vmatprep.subr.mxu0 %v488
    %1352 = vmatpush1.msra.mxu0 %v487
    %1353 = vmatprep.subr.mxu0 %v484
    %1354 = vmatpush1.msra.mxu0 %v483
    %1355 = vmatprep.subr.mxu0 %v480
    %1356 = vmatpush1.msra.mxu0 %v479
    %1357 = vmatprep.subr.mxu0 %v476
    %1358 = vmatpush1.msra.mxu0 %v475
    %1359 = vmatprep.subr.mxu0 %v472
    %1360 = vmatpush1.msra.mxu0 %v471
    %1361 = vmatprep.subr.mxu0 %v468
    %1362 = vmatpush1.msra.mxu0 %v467
    %1363 = vmatprep.subr.mxu0 %v464
    %1364 = vmatpush1.msra.mxu0 %v463
    %1365 = vmatprep.subr.mxu0 %v460
    %1366 = vmatpush1.msra.mxu0 %v459
    %1367 = vmatprep.subr.mxu0 %v456
    %1368 = vmatpush1.msra.mxu0 %v455
    %1369 = vmatprep.subr.mxu0 %v452
    %1370 = vmatpush1.msra.mxu0 %v451
    %1371 = vmatprep.subr.mxu0 %v448
    %1372 = vmatpush1.msra.mxu0 %v447
    %1373 = vmatprep.subr.mxu0 0.0
    %1374 = vmatpush2.msra.mxu0 0.0
    %1375 = vmatprep.subr.mxu0 0.0
    %1376 = vmatpush2.msra.mxu0 0.0
    %1377 = vmatprep.subr.mxu0 0.0
    %1378 = vmatpush2.msra.mxu0 0.0
    %1379 = vmatprep.subr.mxu0 0.0
    %1380 = vmatpush2.msra.mxu0 0.0
    %1381 = vmatprep.subr.mxu0 0.0
    %1382 = vmatpush2.msra.mxu0 0.0
    %1383 = vmatprep.subr.mxu0 0.0
    %1384 = vmatpush2.msra.mxu0 0.0
    %1385 = vmatprep.subr.mxu0 0.0
    %1386 = vmatpush2.msra.mxu0 0.0
    %1387 = vmatprep.subr.mxu0 0.0
    %1388 = vmatpush2.msra.mxu0 0.0
    %1389 = vmatprep.subr.mxu0 0.0
    %1390 = vmatpush2.msra.mxu0 0.0
    %1391 = vmatprep.subr.mxu0 0.0
    %1392 = vmatpush2.msra.mxu0 0.0
    %1393 = vmatprep.subr.mxu0 0.0
    %1394 = vmatpush2.msra.mxu0 0.0
    %1395 = vmatprep.subr.mxu0 0.0
    %1396 = vmatpush2.msra.mxu0 0.0
    %1397 = vmatprep.subr.mxu0 0.0
    %1398 = vmatpush2.msra.mxu0 0.0
    %1399 = vmatprep.subr.mxu0 0.0
    %1400 = vmatpush2.msra.mxu0 0.0
    %1401 = vmatprep.subr.mxu0 0.0
    %1402 = vmatpush2.msra.mxu0 0.0
    %1403 = vmatprep.subr.mxu0 0.0
    %1404 = vmatpush2.msra.mxu0 0.0
    %1405 = vmatprep.mubr.f32.mxu0 0.0
    %1406 = vmatmul.mubr.f32.gmra.mxu0 %v1166
    %v1407 = vpop.f32.mrf.mxu0
    %v1408 = vadd.f32 0.0, %v1407
    %v1409 = vpop.f32.mrf.mxu0
    %v1410 = vadd.f32 0.0, %v1409
    %1411 = vdwg.mxu0
    %1412 = vmatprep.subr.mxu0 %v510
    %1413 = vmatpush1.msra.mxu0 %v509
    %1414 = vmatprep.subr.mxu0 %v506
    %1415 = vmatpush1.msra.mxu0 %v505
    %1416 = vmatprep.subr.mxu0 %v502
    %1417 = vmatpush1.msra.mxu0 %v501
    %1418 = vmatprep.subr.mxu0 %v498
    %1419 = vmatpush1.msra.mxu0 %v497
    %1420 = vmatprep.subr.mxu0 %v494
    %1421 = vmatpush1.msra.mxu0 %v493
    %1422 = vmatprep.subr.mxu0 %v490
    %1423 = vmatpush1.msra.mxu0 %v489
    %1424 = vmatprep.subr.mxu0 %v486
    %1425 = vmatpush1.msra.mxu0 %v485
    %1426 = vmatprep.subr.mxu0 %v482
    %1427 = vmatpush1.msra.mxu0 %v481
    %1428 = vmatprep.subr.mxu0 %v478
    %1429 = vmatpush1.msra.mxu0 %v477
    %1430 = vmatprep.subr.mxu0 %v474
    %1431 = vmatpush1.msra.mxu0 %v473
    %1432 = vmatprep.subr.mxu0 %v470
    %1433 = vmatpush1.msra.mxu0 %v469
    %1434 = vmatprep.subr.mxu0 %v466
    %1435 = vmatpush1.msra.mxu0 %v465
    %1436 = vmatprep.subr.mxu0 %v462
    %1437 = vmatpush1.msra.mxu0 %v461
    %1438 = vmatprep.subr.mxu0 %v458
    %1439 = vmatpush1.msra.mxu0 %v457
    %1440 = vmatprep.subr.mxu0 %v454
    %1441 = vmatpush1.msra.mxu0 %v453
    %1442 = vmatprep.subr.mxu0 %v450
    %1443 = vmatpush1.msra.mxu0 %v449
    %1444 = vmatprep.subr.mxu0 0.0
    %1445 = vmatpush2.msra.mxu0 0.0
    %1446 = vmatprep.subr.mxu0 0.0
    %1447 = vmatpush2.msra.mxu0 0.0
    %1448 = vmatprep.subr.mxu0 0.0
    %1449 = vmatpush2.msra.mxu0 0.0
    %1450 = vmatprep.subr.mxu0 0.0
    %1451 = vmatpush2.msra.mxu0 0.0
    %1452 = vmatprep.subr.mxu0 0.0
    %1453 = vmatpush2.msra.mxu0 0.0
    %1454 = vmatprep.subr.mxu0 0.0
    %1455 = vmatpush2.msra.mxu0 0.0
    %1456 = vmatprep.subr.mxu0 0.0
    %1457 = vmatpush2.msra.mxu0 0.0
    %1458 = vmatprep.subr.mxu0 0.0
    %1459 = vmatpush2.msra.mxu0 0.0
    %1460 = vmatprep.subr.mxu0 0.0
    %1461 = vmatpush2.msra.mxu0 0.0
    %1462 = vmatprep.subr.mxu0 0.0
    %1463 = vmatpush2.msra.mxu0 0.0
    %1464 = vmatprep.subr.mxu0 0.0
    %1465 = vmatpush2.msra.mxu0 0.0
    %1466 = vmatprep.subr.mxu0 0.0
    %1467 = vmatpush2.msra.mxu0 0.0
    %1468 = vmatprep.subr.mxu0 0.0
    %1469 = vmatpush2.msra.mxu0 0.0
    %1470 = vmatprep.subr.mxu0 0.0
    %1471 = vmatpush2.msra.mxu0 0.0
    %1472 = vmatprep.subr.mxu0 0.0
    %1473 = vmatpush2.msra.mxu0 0.0
    %1474 = vmatprep.subr.mxu0 0.0
    %1475 = vmatpush2.msra.mxu0 0.0
    %1476 = vmatprep.mubr.f32.mxu0 0.0
    %1477 = vmatmul.mubr.f32.gmra.mxu0 %v1166
    %v1478 = vpop.f32.mrf.mxu0
    %v1479 = vadd.f32 0.0, %v1478
    %v1480 = vpop.f32.mrf.mxu0
    %v1481 = vadd.f32 0.0, %v1480
    %1482 = vdwg.mxu0
    %v1483 = vadd.f32 %v1337, %v1408
    %v1484 = vadd.f32 %v1338, %v1410
    %v1485 = vadd.f32 %v1339, %v1479
    %v1486 = vadd.f32 %v1340, %v1481
    %v1487 = vxor.u32 %v1483, 2147483648
    %v1488 = vmul.f32 %v1487, 1.442695
    %v1489 = vpow.pop %v1488
    %v1490 = vadd.f32 %v1489, 1.0
    %v1491 = vrcp.pop %v1490
    %v1492 = vmul.f32 1.0, %v1491
    %v1493 = vxor.u32 %v1484, 2147483648
    %v1494 = vmul.f32 %v1493, 1.442695
    %v1495 = vpow.pop %v1494
    %v1496 = vadd.f32 %v1495, 1.0
    %v1497 = vrcp.pop %v1496
    %v1498 = vmul.f32 1.0, %v1497
    %v1499 = vtanh.pop %v1485
    %v1500 = vxor.u32 %v1486, 2147483648
    %v1501 = vmul.f32 %v1500, 1.442695
    %v1502 = vpow.pop %v1501
    %v1503 = vadd.f32 %v1502, 1.0
    %v1504 = vrcp.pop %v1503
    %v1505 = vmul.f32 1.0, %v1504
    %v1506 = vmul.f32 %v1498, %v1165
    %v1507 = vmul.f32 %v1492, %v1499
    %v1508 = vadd.f32 %v1506, %v1507
    %v1509 = vtanh.pop %v1508
    %v1510 = vmul.f32 %v1505, %v1509
    %v1511 = vsel %vm1335, 1, 0
    %1512 = vset.pattern.permute.xlu0 0
    %1513 = vperm.xlu0 %1512, %v1511
    %v1514 = vpop.permute.xlu0 %1513
    %vm1515 = vcmp.eq.s32.totalorder %v1514, 1
    %v1516 = vsel %vm1515, %v1508, %v1165
    %v1517 = vsel %vm1515, %v1510, %v1166
    %1518 = vmatprep.subr.mxu0 %v749
    %1519 = vmatpush1.msra.mxu0 %v748
    %1520 = vmatprep.subr.mxu0 %v745
    %1521 = vmatpush1.msra.mxu0 %v744
    %1522 = vmatprep.subr.mxu0 %v741
    %1523 = vmatpush1.msra.mxu0 %v740
    %1524 = vmatprep.subr.mxu0 %v737
    %1525 = vmatpush1.msra.mxu0 %v736
    %1526 = vmatprep.subr.mxu0 %v733
    %1527 = vmatpush1.msra.mxu0 %v732
    %1528 = vmatprep.subr.mxu0 %v729
    %1529 = vmatpush1.msra.mxu0 %v728
    %1530 = vmatprep.subr.mxu0 %v725
    %1531 = vmatpush1.msra.mxu0 %v724
    %1532 = vmatprep.subr.mxu0 %v721
    %1533 = vmatpush1.msra.mxu0 %v720
    %1534 = vmatprep.subr.mxu0 %v717
    %1535 = vmatpush1.msra.mxu0 %v716
    %1536 = vmatprep.subr.mxu0 %v713
    %1537 = vmatpush1.msra.mxu0 %v712
    %1538 = vmatprep.subr.mxu0 %v709
    %1539 = vmatpush1.msra.mxu0 %v708
    %1540 = vmatprep.subr.mxu0 %v705
    %1541 = vmatpush1.msra.mxu0 %v704
    %1542 = vmatprep.subr.mxu0 %v701
    %1543 = vmatpush1.msra.mxu0 %v700
    %1544 = vmatprep.subr.mxu0 %v697
    %1545 = vmatpush1.msra.mxu0 %v696
    %1546 = vmatprep.subr.mxu0 %v693
    %1547 = vmatpush1.msra.mxu0 %v692
    %1548 = vmatprep.subr.mxu0 %v689
    %1549 = vmatpush1.msra.mxu0 %v688
    %1550 = vmatprep.subr.mxu0 %v813
    %1551 = vmatpush2.msra.mxu0 %v812
    %1552 = vmatprep.subr.mxu0 %v809
    %1553 = vmatpush2.msra.mxu0 %v808
    %1554 = vmatprep.subr.mxu0 %v805
    %1555 = vmatpush2.msra.mxu0 %v804
    %1556 = vmatprep.subr.mxu0 %v801
    %1557 = vmatpush2.msra.mxu0 %v800
    %1558 = vmatprep.subr.mxu0 %v797
    %1559 = vmatpush2.msra.mxu0 %v796
    %1560 = vmatprep.subr.mxu0 %v793
    %1561 = vmatpush2.msra.mxu0 %v792
    %1562 = vmatprep.subr.mxu0 %v789
    %1563 = vmatpush2.msra.mxu0 %v788
    %1564 = vmatprep.subr.mxu0 %v785
    %1565 = vmatpush2.msra.mxu0 %v784
    %1566 = vmatprep.subr.mxu0 %v781
    %1567 = vmatpush2.msra.mxu0 %v780
    %1568 = vmatprep.subr.mxu0 %v777
    %1569 = vmatpush2.msra.mxu0 %v776
    %1570 = vmatprep.subr.mxu0 %v773
    %1571 = vmatpush2.msra.mxu0 %v772
    %1572 = vmatprep.subr.mxu0 %v769
    %1573 = vmatpush2.msra.mxu0 %v768
    %1574 = vmatprep.subr.mxu0 %v765
    %1575 = vmatpush2.msra.mxu0 %v764
    %1576 = vmatprep.subr.mxu0 %v761
    %1577 = vmatpush2.msra.mxu0 %v760
    %1578 = vmatprep.subr.mxu0 %v757
    %1579 = vmatpush2.msra.mxu0 %v756
    %1580 = vmatprep.subr.mxu0 %v753
    %1581 = vmatpush2.msra.mxu0 %v752
    %1582 = vmatprep.mubr.f32.mxu0 %v1334
    %1583 = vmatmul.mubr.f32.gmra.mxu0 %v1517
    %v1584 = vpop.f32.mrf.mxu0
    %v1585 = vadd.f32 %v425, %v1584
    %v1586 = vpop.f32.mrf.mxu0
    %v1587 = vadd.f32 %v429, %v1586
    %1588 = vdwg.mxu0
    %1589 = vmatprep.subr.mxu0 %v751
    %1590 = vmatpush1.msra.mxu0 %v750
    %1591 = vmatprep.subr.mxu0 %v747
    %1592 = vmatpush1.msra.mxu0 %v746
    %1593 = vmatprep.subr.mxu0 %v743
    %1594 = vmatpush1.msra.mxu0 %v742
    %1595 = vmatprep.subr.mxu0 %v739
    %1596 = vmatpush1.msra.mxu0 %v738
    %1597 = vmatprep.subr.mxu0 %v735
    %1598 = vmatpush1.msra.mxu0 %v734
    %1599 = vmatprep.subr.mxu0 %v731
    %1600 = vmatpush1.msra.mxu0 %v730
    %1601 = vmatprep.subr.mxu0 %v727
    %1602 = vmatpush1.msra.mxu0 %v726
    %1603 = vmatprep.subr.mxu0 %v723
    %1604 = vmatpush1.msra.mxu0 %v722
    %1605 = vmatprep.subr.mxu0 %v719
    %1606 = vmatpush1.msra.mxu0 %v718
    %1607 = vmatprep.subr.mxu0 %v715
    %1608 = vmatpush1.msra.mxu0 %v714
    %1609 = vmatprep.subr.mxu0 %v711
    %1610 = vmatpush1.msra.mxu0 %v710
    %1611 = vmatprep.subr.mxu0 %v707
    %1612 = vmatpush1.msra.mxu0 %v706
    %1613 = vmatprep.subr.mxu0 %v703
    %1614 = vmatpush1.msra.mxu0 %v702
    %1615 = vmatprep.subr.mxu0 %v699
    %1616 = vmatpush1.msra.mxu0 %v698
    %1617 = vmatprep.subr.mxu0 %v695
    %1618 = vmatpush1.msra.mxu0 %v694
    %1619 = vmatprep.subr.mxu0 %v691
    %1620 = vmatpush1.msra.mxu0 %v690
    %1621 = vmatprep.subr.mxu0 %v815
    %1622 = vmatpush2.msra.mxu0 %v814
    %1623 = vmatprep.subr.mxu0 %v811
    %1624 = vmatpush2.msra.mxu0 %v810
    %1625 = vmatprep.subr.mxu0 %v807
    %1626 = vmatpush2.msra.mxu0 %v806
    %1627 = vmatprep.subr.mxu0 %v803
    %1628 = vmatpush2.msra.mxu0 %v802
    %1629 = vmatprep.subr.mxu0 %v799
    %1630 = vmatpush2.msra.mxu0 %v798
    %1631 = vmatprep.subr.mxu0 %v795
    %1632 = vmatpush2.msra.mxu0 %v794
    %1633 = vmatprep.subr.mxu0 %v791
    %1634 = vmatpush2.msra.mxu0 %v790
    %1635 = vmatprep.subr.mxu0 %v787
    %1636 = vmatpush2.msra.mxu0 %v786
    %1637 = vmatprep.subr.mxu0 %v783
    %1638 = vmatpush2.msra.mxu0 %v782
    %1639 = vmatprep.subr.mxu0 %v779
    %1640 = vmatpush2.msra.mxu0 %v778
    %1641 = vmatprep.subr.mxu0 %v775
    %1642 = vmatpush2.msra.mxu0 %v774
    %1643 = vmatprep.subr.mxu0 %v771
    %1644 = vmatpush2.msra.mxu0 %v770
    %1645 = vmatprep.subr.mxu0 %v767
    %1646 = vmatpush2.msra.mxu0 %v766
    %1647 = vmatprep.subr.mxu0 %v763
    %1648 = vmatpush2.msra.mxu0 %v762
    %1649 = vmatprep.subr.mxu0 %v759
    %1650 = vmatpush2.msra.mxu0 %v758
    %1651 = vmatprep.subr.mxu0 %v755
    %1652 = vmatpush2.msra.mxu0 %v754
    %1653 = vmatprep.mubr.f32.mxu0 %v1334
    %1654 = vmatmul.mubr.f32.gmra.mxu0 %v1517
    %v1655 = vpop.f32.mrf.mxu0
    %v1656 = vadd.f32 %v433, %v1655
    %v1657 = vpop.f32.mrf.mxu0
    %v1658 = vadd.f32 %v437, %v1657
    %1659 = vdwg.mxu0
    %v1660 = vxor.u32 %v1585, 2147483648
    %v1661 = vmul.f32 %v1660, 1.442695
    %v1662 = vpow.pop %v1661
    %v1663 = vadd.f32 %v1662, 1.0
    %v1664 = vrcp.pop %v1663
    %v1665 = vmul.f32 1.0, %v1664
    %v1666 = vxor.u32 %v1587, 2147483648
    %v1667 = vmul.f32 %v1666, 1.442695
    %v1668 = vpow.pop %v1667
    %v1669 = vadd.f32 %v1668, 1.0
    %v1670 = vrcp.pop %v1669
    %v1671 = vmul.f32 1.0, %v1670
    %v1672 = vtanh.pop %v1656
    %v1673 = vxor.u32 %v1658, 2147483648
    %v1674 = vmul.f32 %v1673, 1.442695
    %v1675 = vpow.pop %v1674
    %v1676 = vadd.f32 %v1675, 1.0
    %v1677 = vrcp.pop %v1676
    %v1678 = vmul.f32 1.0, %v1677
    %v1679 = vmul.f32 %v1671, %v1333
    %v1680 = vmul.f32 %v1665, %v1672
    %v1681 = vadd.f32 %v1679, %v1680
    %v1682 = vtanh.pop %v1681
    %v1683 = vmul.f32 %v1678, %v1682
    %v1684 = vsel %vm1515, %v1681, %v1333
    %v1685 = vsel %vm1515, %v1683, %v1334
    %vm1686 = vcmp.gt.s32.totalorder %v419, 3
    %s1687 = scalar_lea.vmem [#allocation2], 96
    %v1688 = vld [vmem:[%s1687] sm:$0xff]
    %v1689 = vld [vmem:[%s1687 + $0x8] sm:$0xff]
    %v1690 = vld [vmem:[%s1687 + $0x10] sm:$0xff]
    %v1691 = vld [vmem:[%s1687 + $0x18] sm:$0xff]
    %1692 = vmatprep.subr.mxu0 %v508
    %1693 = vmatpush1.msra.mxu0 %v507
    %1694 = vmatprep.subr.mxu0 %v504
    %1695 = vmatpush1.msra.mxu0 %v503
    %1696 = vmatprep.subr.mxu0 %v500
    %1697 = vmatpush1.msra.mxu0 %v499
    %1698 = vmatprep.subr.mxu0 %v496
    %1699 = vmatpush1.msra.mxu0 %v495
    %1700 = vmatprep.subr.mxu0 %v492
    %1701 = vmatpush1.msra.mxu0 %v491
    %1702 = vmatprep.subr.mxu0 %v488
    %1703 = vmatpush1.msra.mxu0 %v487
    %1704 = vmatprep.subr.mxu0 %v484
    %1705 = vmatpush1.msra.mxu0 %v483
    %1706 = vmatprep.subr.mxu0 %v480
    %1707 = vmatpush1.msra.mxu0 %v479
    %1708 = vmatprep.subr.mxu0 %v476
    %1709 = vmatpush1.msra.mxu0 %v475
    %1710 = vmatprep.subr.mxu0 %v472
    %1711 = vmatpush1.msra.mxu0 %v471
    %1712 = vmatprep.subr.mxu0 %v468
    %1713 = vmatpush1.msra.mxu0 %v467
    %1714 = vmatprep.subr.mxu0 %v464
    %1715 = vmatpush1.msra.mxu0 %v463
    %1716 = vmatprep.subr.mxu0 %v460
    %1717 = vmatpush1.msra.mxu0 %v459
    %1718 = vmatprep.subr.mxu0 %v456
    %1719 = vmatpush1.msra.mxu0 %v455
    %1720 = vmatprep.subr.mxu0 %v452
    %1721 = vmatpush1.msra.mxu0 %v451
    %1722 = vmatprep.subr.mxu0 %v448
    %1723 = vmatpush1.msra.mxu0 %v447
    %1724 = vmatprep.subr.mxu0 0.0
    %1725 = vmatpush2.msra.mxu0 0.0
    %1726 = vmatprep.subr.mxu0 0.0
    %1727 = vmatpush2.msra.mxu0 0.0
    %1728 = vmatprep.subr.mxu0 0.0
    %1729 = vmatpush2.msra.mxu0 0.0
    %1730 = vmatprep.subr.mxu0 0.0
    %1731 = vmatpush2.msra.mxu0 0.0
    %1732 = vmatprep.subr.mxu0 0.0
    %1733 = vmatpush2.msra.mxu0 0.0
    %1734 = vmatprep.subr.mxu0 0.0
    %1735 = vmatpush2.msra.mxu0 0.0
    %1736 = vmatprep.subr.mxu0 0.0
    %1737 = vmatpush2.msra.mxu0 0.0
    %1738 = vmatprep.subr.mxu0 0.0
    %1739 = vmatpush2.msra.mxu0 0.0
    %1740 = vmatprep.subr.mxu0 0.0
    %1741 = vmatpush2.msra.mxu0 0.0
    %1742 = vmatprep.subr.mxu0 0.0
    %1743 = vmatpush2.msra.mxu0 0.0
    %1744 = vmatprep.subr.mxu0 0.0
    %1745 = vmatpush2.msra.mxu0 0.0
    %1746 = vmatprep.subr.mxu0 0.0
    %1747 = vmatpush2.msra.mxu0 0.0
    %1748 = vmatprep.subr.mxu0 0.0
    %1749 = vmatpush2.msra.mxu0 0.0
    %1750 = vmatprep.subr.mxu0 0.0
    %1751 = vmatpush2.msra.mxu0 0.0
    %1752 = vmatprep.subr.mxu0 0.0
    %1753 = vmatpush2.msra.mxu0 0.0
    %1754 = vmatprep.subr.mxu0 0.0
    %1755 = vmatpush2.msra.mxu0 0.0
    %1756 = vmatprep.mubr.f32.mxu0 0.0
    %1757 = vmatmul.mubr.f32.gmra.mxu0 %v1517
    %v1758 = vpop.f32.mrf.mxu0
    %v1759 = vadd.f32 0.0, %v1758
    %v1760 = vpop.f32.mrf.mxu0
    %v1761 = vadd.f32 0.0, %v1760
    %1762 = vdwg.mxu0
    %1763 = vmatprep.subr.mxu0 %v510
    %1764 = vmatpush1.msra.mxu0 %v509
    %1765 = vmatprep.subr.mxu0 %v506
    %1766 = vmatpush1.msra.mxu0 %v505
    %1767 = vmatprep.subr.mxu0 %v502
    %1768 = vmatpush1.msra.mxu0 %v501
    %1769 = vmatprep.subr.mxu0 %v498
    %1770 = vmatpush1.msra.mxu0 %v497
    %1771 = vmatprep.subr.mxu0 %v494
    %1772 = vmatpush1.msra.mxu0 %v493
    %1773 = vmatprep.subr.mxu0 %v490
    %1774 = vmatpush1.msra.mxu0 %v489
    %1775 = vmatprep.subr.mxu0 %v486
    %1776 = vmatpush1.msra.mxu0 %v485
    %1777 = vmatprep.subr.mxu0 %v482
    %1778 = vmatpush1.msra.mxu0 %v481
    %1779 = vmatprep.subr.mxu0 %v478
    %1780 = vmatpush1.msra.mxu0 %v477
    %1781 = vmatprep.subr.mxu0 %v474
    %1782 = vmatpush1.msra.mxu0 %v473
    %1783 = vmatprep.subr.mxu0 %v470
    %1784 = vmatpush1.msra.mxu0 %v469
    %1785 = vmatprep.subr.mxu0 %v466
    %1786 = vmatpush1.msra.mxu0 %v465
    %1787 = vmatprep.subr.mxu0 %v462
    %1788 = vmatpush1.msra.mxu0 %v461
    %1789 = vmatprep.subr.mxu0 %v458
    %1790 = vmatpush1.msra.mxu0 %v457
    %1791 = vmatprep.subr.mxu0 %v454
    %1792 = vmatpush1.msra.mxu0 %v453
    %1793 = vmatprep.subr.mxu0 %v450
    %1794 = vmatpush1.msra.mxu0 %v449
    %1795 = vmatprep.subr.mxu0 0.0
    %1796 = vmatpush2.msra.mxu0 0.0
    %1797 = vmatprep.subr.mxu0 0.0
    %1798 = vmatpush2.msra.mxu0 0.0
    %1799 = vmatprep.subr.mxu0 0.0
    %1800 = vmatpush2.msra.mxu0 0.0
    %1801 = vmatprep.subr.mxu0 0.0
    %1802 = vmatpush2.msra.mxu0 0.0
    %1803 = vmatprep.subr.mxu0 0.0
    %1804 = vmatpush2.msra.mxu0 0.0
    %1805 = vmatprep.subr.mxu0 0.0
    %1806 = vmatpush2.msra.mxu0 0.0
    %1807 = vmatprep.subr.mxu0 0.0
    %1808 = vmatpush2.msra.mxu0 0.0
    %1809 = vmatprep.subr.mxu0 0.0
    %1810 = vmatpush2.msra.mxu0 0.0
    %1811 = vmatprep.subr.mxu0 0.0
    %1812 = vmatpush2.msra.mxu0 0.0
    %1813 = vmatprep.subr.mxu0 0.0
    %1814 = vmatpush2.msra.mxu0 0.0
    %1815 = vmatprep.subr.mxu0 0.0
    %1816 = vmatpush2.msra.mxu0 0.0
    %1817 = vmatprep.subr.mxu0 0.0
    %1818 = vmatpush2.msra.mxu0 0.0
    %1819 = vmatprep.subr.mxu0 0.0
    %1820 = vmatpush2.msra.mxu0 0.0
    %1821 = vmatprep.subr.mxu0 0.0
    %1822 = vmatpush2.msra.mxu0 0.0
    %1823 = vmatprep.subr.mxu0 0.0
    %1824 = vmatpush2.msra.mxu0 0.0
    %1825 = vmatprep.subr.mxu0 0.0
    %1826 = vmatpush2.msra.mxu0 0.0
    %1827 = vmatprep.mubr.f32.mxu0 0.0
    %1828 = vmatmul.mubr.f32.gmra.mxu0 %v1517
    %v1829 = vpop.f32.mrf.mxu0
    %v1830 = vadd.f32 0.0, %v1829
    %v1831 = vpop.f32.mrf.mxu0
    %v1832 = vadd.f32 0.0, %v1831
    %1833 = vdwg.mxu0
    %v1834 = vadd.f32 %v1688, %v1759
    %v1835 = vadd.f32 %v1689, %v1761
    %v1836 = vadd.f32 %v1690, %v1830
    %v1837 = vadd.f32 %v1691, %v1832
    %v1838 = vxor.u32 %v1834, 2147483648
    %v1839 = vmul.f32 %v1838, 1.442695
    %v1840 = vpow.pop %v1839
    %v1841 = vadd.f32 %v1840, 1.0
    %v1842 = vrcp.pop %v1841
    %v1843 = vmul.f32 1.0, %v1842
    %v1844 = vxor.u32 %v1835, 2147483648
    %v1845 = vmul.f32 %v1844, 1.442695
    %v1846 = vpow.pop %v1845
    %v1847 = vadd.f32 %v1846, 1.0
    %v1848 = vrcp.pop %v1847
    %v1849 = vmul.f32 1.0, %v1848
    %v1850 = vtanh.pop %v1836
    %v1851 = vxor.u32 %v1837, 2147483648
    %v1852 = vmul.f32 %v1851, 1.442695
    %v1853 = vpow.pop %v1852
    %v1854 = vadd.f32 %v1853, 1.0
    %v1855 = vrcp.pop %v1854
    %v1856 = vmul.f32 1.0, %v1855
    %v1857 = vmul.f32 %v1849, %v1516
    %v1858 = vmul.f32 %v1843, %v1850
    %v1859 = vadd.f32 %v1857, %v1858
    %v1860 = vtanh.pop %v1859
    %v1861 = vmul.f32 %v1856, %v1860
    %v1862 = vsel %vm1686, 1, 0
    %1863 = vset.pattern.permute.xlu0 0
    %1864 = vperm.xlu0 %1863, %v1862
    %v1865 = vpop.permute.xlu0 %1864
    %vm1866 = vcmp.eq.s32.totalorder %v1865, 1
    %v1867 = vsel %vm1866, %v1859, %v1516
    %v1868 = vsel %vm1866, %v1861, %v1517
    %1869 = vmatprep.subr.mxu0 %v749
    %1870 = vmatpush1.msra.mxu0 %v748
    %1871 = vmatprep.subr.mxu0 %v745
    %1872 = vmatpush1.msra.mxu0 %v744
    %1873 = vmatprep.subr.mxu0 %v741
    %1874 = vmatpush1.msra.mxu0 %v740
    %1875 = vmatprep.subr.mxu0 %v737
    %1876 = vmatpush1.msra.mxu0 %v736
    %1877 = vmatprep.subr.mxu0 %v733
    %1878 = vmatpush1.msra.mxu0 %v732
    %1879 = vmatprep.subr.mxu0 %v729
    %1880 = vmatpush1.msra.mxu0 %v728
    %1881 = vmatprep.subr.mxu0 %v725
    %1882 = vmatpush1.msra.mxu0 %v724
    %1883 = vmatprep.subr.mxu0 %v721
    %1884 = vmatpush1.msra.mxu0 %v720
    %1885 = vmatprep.subr.mxu0 %v717
    %1886 = vmatpush1.msra.mxu0 %v716
    %1887 = vmatprep.subr.mxu0 %v713
    %1888 = vmatpush1.msra.mxu0 %v712
    %1889 = vmatprep.subr.mxu0 %v709
    %1890 = vmatpush1.msra.mxu0 %v708
    %1891 = vmatprep.subr.mxu0 %v705
    %1892 = vmatpush1.msra.mxu0 %v704
    %1893 = vmatprep.subr.mxu0 %v701
    %1894 = vmatpush1.msra.mxu0 %v700
    %1895 = vmatprep.subr.mxu0 %v697
    %1896 = vmatpush1.msra.mxu0 %v696
    %1897 = vmatprep.subr.mxu0 %v693
    %1898 = vmatpush1.msra.mxu0 %v692
    %1899 = vmatprep.subr.mxu0 %v689
    %1900 = vmatpush1.msra.mxu0 %v688
    %1901 = vmatprep.subr.mxu0 %v813
    %1902 = vmatpush2.msra.mxu0 %v812
    %1903 = vmatprep.subr.mxu0 %v809
    %1904 = vmatpush2.msra.mxu0 %v808
    %1905 = vmatprep.subr.mxu0 %v805
    %1906 = vmatpush2.msra.mxu0 %v804
    %1907 = vmatprep.subr.mxu0 %v801
    %1908 = vmatpush2.msra.mxu0 %v800
    %1909 = vmatprep.subr.mxu0 %v797
    %1910 = vmatpush2.msra.mxu0 %v796
    %1911 = vmatprep.subr.mxu0 %v793
    %1912 = vmatpush2.msra.mxu0 %v792
    %1913 = vmatprep.subr.mxu0 %v789
    %1914 = vmatpush2.msra.mxu0 %v788
    %1915 = vmatprep.subr.mxu0 %v785
    %1916 = vmatpush2.msra.mxu0 %v784
    %1917 = vmatprep.subr.mxu0 %v781
    %1918 = vmatpush2.msra.mxu0 %v780
    %1919 = vmatprep.subr.mxu0 %v777
    %1920 = vmatpush2.msra.mxu0 %v776
    %1921 = vmatprep.subr.mxu0 %v773
    %1922 = vmatpush2.msra.mxu0 %v772
    %1923 = vmatprep.subr.mxu0 %v769
    %1924 = vmatpush2.msra.mxu0 %v768
    %1925 = vmatprep.subr.mxu0 %v765
    %1926 = vmatpush2.msra.mxu0 %v764
    %1927 = vmatprep.subr.mxu0 %v761
    %1928 = vmatpush2.msra.mxu0 %v760
    %1929 = vmatprep.subr.mxu0 %v757
    %1930 = vmatpush2.msra.mxu0 %v756
    %1931 = vmatprep.subr.mxu0 %v753
    %1932 = vmatpush2.msra.mxu0 %v752
    %1933 = vmatprep.mubr.f32.mxu0 %v1685
    %1934 = vmatmul.mubr.f32.gmra.mxu0 %v1868
    %v1935 = vpop.f32.mrf.mxu0
    %v1936 = vadd.f32 %v425, %v1935
    %v1937 = vpop.f32.mrf.mxu0
    %v1938 = vadd.f32 %v429, %v1937
    %1939 = vdwg.mxu0
    %1940 = vmatprep.subr.mxu0 %v751
    %1941 = vmatpush1.msra.mxu0 %v750
    %1942 = vmatprep.subr.mxu0 %v747
    %1943 = vmatpush1.msra.mxu0 %v746
    %1944 = vmatprep.subr.mxu0 %v743
    %1945 = vmatpush1.msra.mxu0 %v742
    %1946 = vmatprep.subr.mxu0 %v739
    %1947 = vmatpush1.msra.mxu0 %v738
    %1948 = vmatprep.subr.mxu0 %v735
    %1949 = vmatpush1.msra.mxu0 %v734
    %1950 = vmatprep.subr.mxu0 %v731
    %1951 = vmatpush1.msra.mxu0 %v730
    %1952 = vmatprep.subr.mxu0 %v727
    %1953 = vmatpush1.msra.mxu0 %v726
    %1954 = vmatprep.subr.mxu0 %v723
    %1955 = vmatpush1.msra.mxu0 %v722
    %1956 = vmatprep.subr.mxu0 %v719
    %1957 = vmatpush1.msra.mxu0 %v718
    %1958 = vmatprep.subr.mxu0 %v715
    %1959 = vmatpush1.msra.mxu0 %v714
    %1960 = vmatprep.subr.mxu0 %v711
    %1961 = vmatpush1.msra.mxu0 %v710
    %1962 = vmatprep.subr.mxu0 %v707
    %1963 = vmatpush1.msra.mxu0 %v706
    %1964 = vmatprep.subr.mxu0 %v703
    %1965 = vmatpush1.msra.mxu0 %v702
    %1966 = vmatprep.subr.mxu0 %v699
    %1967 = vmatpush1.msra.mxu0 %v698
    %1968 = vmatprep.subr.mxu0 %v695
    %1969 = vmatpush1.msra.mxu0 %v694
    %1970 = vmatprep.subr.mxu0 %v691
    %1971 = vmatpush1.msra.mxu0 %v690
    %1972 = vmatprep.subr.mxu0 %v815
    %1973 = vmatpush2.msra.mxu0 %v814
    %1974 = vmatprep.subr.mxu0 %v811
    %1975 = vmatpush2.msra.mxu0 %v810
    %1976 = vmatprep.subr.mxu0 %v807
    %1977 = vmatpush2.msra.mxu0 %v806
    %1978 = vmatprep.subr.mxu0 %v803
    %1979 = vmatpush2.msra.mxu0 %v802
    %1980 = vmatprep.subr.mxu0 %v799
    %1981 = vmatpush2.msra.mxu0 %v798
    %1982 = vmatprep.subr.mxu0 %v795
    %1983 = vmatpush2.msra.mxu0 %v794
    %1984 = vmatprep.subr.mxu0 %v791
    %1985 = vmatpush2.msra.mxu0 %v790
    %1986 = vmatprep.subr.mxu0 %v787
    %1987 = vmatpush2.msra.mxu0 %v786
    %1988 = vmatprep.subr.mxu0 %v783
    %1989 = vmatpush2.msra.mxu0 %v782
    %1990 = vmatprep.subr.mxu0 %v779
    %1991 = vmatpush2.msra.mxu0 %v778
    %1992 = vmatprep.subr.mxu0 %v775
    %1993 = vmatpush2.msra.mxu0 %v774
    %1994 = vmatprep.subr.mxu0 %v771
    %1995 = vmatpush2.msra.mxu0 %v770
    %1996 = vmatprep.subr.mxu0 %v767
    %1997 = vmatpush2.msra.mxu0 %v766
    %1998 = vmatprep.subr.mxu0 %v763
    %1999 = vmatpush2.msra.mxu0 %v762
    %2000 = vmatprep.subr.mxu0 %v759
    %2001 = vmatpush2.msra.mxu0 %v758
    %2002 = vmatprep.subr.mxu0 %v755
    %2003 = vmatpush2.msra.mxu0 %v754
    %2004 = vmatprep.mubr.f32.mxu0 %v1685
    %2005 = vmatmul.mubr.f32.gmra.mxu0 %v1868
    %v2006 = vpop.f32.mrf.mxu0
    %v2007 = vadd.f32 %v433, %v2006
    %v2008 = vpop.f32.mrf.mxu0
    %v2009 = vadd.f32 %v437, %v2008
    %2010 = vdwg.mxu0
    %v2011 = vxor.u32 %v1936, 2147483648
    %v2012 = vmul.f32 %v2011, 1.442695
    %v2013 = vpow.pop %v2012
    %v2014 = vadd.f32 %v2013, 1.0
    %v2015 = vrcp.pop %v2014
    %v2016 = vmul.f32 1.0, %v2015
    %v2017 = vxor.u32 %v1938, 2147483648
    %v2018 = vmul.f32 %v2017, 1.442695
    %v2019 = vpow.pop %v2018
    %v2020 = vadd.f32 %v2019, 1.0
    %v2021 = vrcp.pop %v2020
    %v2022 = vmul.f32 1.0, %v2021
    %v2023 = vtanh.pop %v2007
    %v2024 = vxor.u32 %v2009, 2147483648
    %v2025 = vmul.f32 %v2024, 1.442695
    %v2026 = vpow.pop %v2025
    %v2027 = vadd.f32 %v2026, 1.0
    %v2028 = vrcp.pop %v2027
    %v2029 = vmul.f32 1.0, %v2028
    %v2030 = vmul.f32 %v2022, %v1684
    %v2031 = vmul.f32 %v2016, %v2023
    %v2032 = vadd.f32 %v2030, %v2031
    %v2033 = vtanh.pop %v2032
    %v2034 = vmul.f32 %v2029, %v2033
    %v2035 = vsel %vm1866, %v2032, %v1684
    %v2036 = vsel %vm1866, %v2034, %v1685
    %vm2037 = vcmp.gt.s32.totalorder %v419, 4
    %s2038 = scalar_lea.vmem [#allocation2], 128
    %v2039 = vld [vmem:[%s2038] sm:$0xff]
    %v2040 = vld [vmem:[%s2038 + $0x8] sm:$0xff]
    %v2041 = vld [vmem:[%s2038 + $0x10] sm:$0xff]
    %v2042 = vld [vmem:[%s2038 + $0x18] sm:$0xff]
    %2043 = vmatprep.subr.mxu0 %v508
    %2044 = vmatpush1.msra.mxu0 %v507
    %2045 = vmatprep.subr.mxu0 %v504
    %2046 = vmatpush1.msra.mxu0 %v503
    %2047 = vmatprep.subr.mxu0 %v500
    %2048 = vmatpush1.msra.mxu0 %v499
    %2049 = vmatprep.subr.mxu0 %v496
    %2050 = vmatpush1.msra.mxu0 %v495
    %2051 = vmatprep.subr.mxu0 %v492
    %2052 = vmatpush1.msra.mxu0 %v491
    %2053 = vmatprep.subr.mxu0 %v488
    %2054 = vmatpush1.msra.mxu0 %v487
    %2055 = vmatprep.subr.mxu0 %v484
    %2056 = vmatpush1.msra.mxu0 %v483
    %2057 = vmatprep.subr.mxu0 %v480
    %2058 = vmatpush1.msra.mxu0 %v479
    %2059 = vmatprep.subr.mxu0 %v476
    %2060 = vmatpush1.msra.mxu0 %v475
    %2061 = vmatprep.subr.mxu0 %v472
    %2062 = vmatpush1.msra.mxu0 %v471
    %2063 = vmatprep.subr.mxu0 %v468
    %2064 = vmatpush1.msra.mxu0 %v467
    %2065 = vmatprep.subr.mxu0 %v464
    %2066 = vmatpush1.msra.mxu0 %v463
    %2067 = vmatprep.subr.mxu0 %v460
    %2068 = vmatpush1.msra.mxu0 %v459
    %2069 = vmatprep.subr.mxu0 %v456
    %2070 = vmatpush1.msra.mxu0 %v455
    %2071 = vmatprep.subr.mxu0 %v452
    %2072 = vmatpush1.msra.mxu0 %v451
    %2073 = vmatprep.subr.mxu0 %v448
    %2074 = vmatpush1.msra.mxu0 %v447
    %2075 = vmatprep.subr.mxu0 0.0
    %2076 = vmatpush2.msra.mxu0 0.0
    %2077 = vmatprep.subr.mxu0 0.0
    %2078 = vmatpush2.msra.mxu0 0.0
    %2079 = vmatprep.subr.mxu0 0.0
    %2080 = vmatpush2.msra.mxu0 0.0
    %2081 = vmatprep.subr.mxu0 0.0
    %2082 = vmatpush2.msra.mxu0 0.0
    %2083 = vmatprep.subr.mxu0 0.0
    %2084 = vmatpush2.msra.mxu0 0.0
    %2085 = vmatprep.subr.mxu0 0.0
    %2086 = vmatpush2.msra.mxu0 0.0
    %2087 = vmatprep.subr.mxu0 0.0
    %2088 = vmatpush2.msra.mxu0 0.0
    %2089 = vmatprep.subr.mxu0 0.0
    %2090 = vmatpush2.msra.mxu0 0.0
    %2091 = vmatprep.subr.mxu0 0.0
    %2092 = vmatpush2.msra.mxu0 0.0
    %2093 = vmatprep.subr.mxu0 0.0
    %2094 = vmatpush2.msra.mxu0 0.0
    %2095 = vmatprep.subr.mxu0 0.0
    %2096 = vmatpush2.msra.mxu0 0.0
    %2097 = vmatprep.subr.mxu0 0.0
    %2098 = vmatpush2.msra.mxu0 0.0
    %2099 = vmatprep.subr.mxu0 0.0
    %2100 = vmatpush2.msra.mxu0 0.0
    %2101 = vmatprep.subr.mxu0 0.0
    %2102 = vmatpush2.msra.mxu0 0.0
    %2103 = vmatprep.subr.mxu0 0.0
    %2104 = vmatpush2.msra.mxu0 0.0
    %2105 = vmatprep.subr.mxu0 0.0
    %2106 = vmatpush2.msra.mxu0 0.0
    %2107 = vmatprep.mubr.f32.mxu0 0.0
    %2108 = vmatmul.mubr.f32.gmra.mxu0 %v1868
    %v2109 = vpop.f32.mrf.mxu0
    %v2110 = vadd.f32 0.0, %v2109
    %v2111 = vpop.f32.mrf.mxu0
    %v2112 = vadd.f32 0.0, %v2111
    %2113 = vdwg.mxu0
    %2114 = vmatprep.subr.mxu0 %v510
    %2115 = vmatpush1.msra.mxu0 %v509
    %2116 = vmatprep.subr.mxu0 %v506
    %2117 = vmatpush1.msra.mxu0 %v505
    %2118 = vmatprep.subr.mxu0 %v502
    %2119 = vmatpush1.msra.mxu0 %v501
    %2120 = vmatprep.subr.mxu0 %v498
    %2121 = vmatpush1.msra.mxu0 %v497
    %2122 = vmatprep.subr.mxu0 %v494
    %2123 = vmatpush1.msra.mxu0 %v493
    %2124 = vmatprep.subr.mxu0 %v490
    %2125 = vmatpush1.msra.mxu0 %v489
    %2126 = vmatprep.subr.mxu0 %v486
    %2127 = vmatpush1.msra.mxu0 %v485
    %2128 = vmatprep.subr.mxu0 %v482
    %2129 = vmatpush1.msra.mxu0 %v481
    %2130 = vmatprep.subr.mxu0 %v478
    %2131 = vmatpush1.msra.mxu0 %v477
    %2132 = vmatprep.subr.mxu0 %v474
    %2133 = vmatpush1.msra.mxu0 %v473
    %2134 = vmatprep.subr.mxu0 %v470
    %2135 = vmatpush1.msra.mxu0 %v469
    %2136 = vmatprep.subr.mxu0 %v466
    %2137 = vmatpush1.msra.mxu0 %v465
    %2138 = vmatprep.subr.mxu0 %v462
    %2139 = vmatpush1.msra.mxu0 %v461
    %2140 = vmatprep.subr.mxu0 %v458
    %2141 = vmatpush1.msra.mxu0 %v457
    %2142 = vmatprep.subr.mxu0 %v454
    %2143 = vmatpush1.msra.mxu0 %v453
    %2144 = vmatprep.subr.mxu0 %v450
    %2145 = vmatpush1.msra.mxu0 %v449
    %2146 = vmatprep.subr.mxu0 0.0
    %2147 = vmatpush2.msra.mxu0 0.0
    %2148 = vmatprep.subr.mxu0 0.0
    %2149 = vmatpush2.msra.mxu0 0.0
    %2150 = vmatprep.subr.mxu0 0.0
    %2151 = vmatpush2.msra.mxu0 0.0
    %2152 = vmatprep.subr.mxu0 0.0
    %2153 = vmatpush2.msra.mxu0 0.0
    %2154 = vmatprep.subr.mxu0 0.0
    %2155 = vmatpush2.msra.mxu0 0.0
    %2156 = vmatprep.subr.mxu0 0.0
    %2157 = vmatpush2.msra.mxu0 0.0
    %2158 = vmatprep.subr.mxu0 0.0
    %2159 = vmatpush2.msra.mxu0 0.0
    %2160 = vmatprep.subr.mxu0 0.0
    %2161 = vmatpush2.msra.mxu0 0.0
    %2162 = vmatprep.subr.mxu0 0.0
    %2163 = vmatpush2.msra.mxu0 0.0
    %2164 = vmatprep.subr.mxu0 0.0
    %2165 = vmatpush2.msra.mxu0 0.0
    %2166 = vmatprep.subr.mxu0 0.0
    %2167 = vmatpush2.msra.mxu0 0.0
    %2168 = vmatprep.subr.mxu0 0.0
    %2169 = vmatpush2.msra.mxu0 0.0
    %2170 = vmatprep.subr.mxu0 0.0
    %2171 = vmatpush2.msra.mxu0 0.0
    %2172 = vmatprep.subr.mxu0 0.0
    %2173 = vmatpush2.msra.mxu0 0.0
    %2174 = vmatprep.subr.mxu0 0.0
    %2175 = vmatpush2.msra.mxu0 0.0
    %2176 = vmatprep.subr.mxu0 0.0
    %2177 = vmatpush2.msra.mxu0 0.0
    %2178 = vmatprep.mubr.f32.mxu0 0.0
    %2179 = vmatmul.mubr.f32.gmra.mxu0 %v1868
    %v2180 = vpop.f32.mrf.mxu0
    %v2181 = vadd.f32 0.0, %v2180
    %v2182 = vpop.f32.mrf.mxu0
    %v2183 = vadd.f32 0.0, %v2182
    %2184 = vdwg.mxu0
    %v2185 = vadd.f32 %v2039, %v2110
    %v2186 = vadd.f32 %v2040, %v2112
    %v2187 = vadd.f32 %v2041, %v2181
    %v2188 = vadd.f32 %v2042, %v2183
    %v2189 = vxor.u32 %v2185, 2147483648
    %v2190 = vmul.f32 %v2189, 1.442695
    %v2191 = vpow.pop %v2190
    %v2192 = vadd.f32 %v2191, 1.0
    %v2193 = vrcp.pop %v2192
    %v2194 = vmul.f32 1.0, %v2193
    %v2195 = vxor.u32 %v2186, 2147483648
    %v2196 = vmul.f32 %v2195, 1.442695
    %v2197 = vpow.pop %v2196
    %v2198 = vadd.f32 %v2197, 1.0
    %v2199 = vrcp.pop %v2198
    %v2200 = vmul.f32 1.0, %v2199
    %v2201 = vtanh.pop %v2187
    %v2202 = vxor.u32 %v2188, 2147483648
    %v2203 = vmul.f32 %v2202, 1.442695
    %v2204 = vpow.pop %v2203
    %v2205 = vadd.f32 %v2204, 1.0
    %v2206 = vrcp.pop %v2205
    %v2207 = vmul.f32 1.0, %v2206
    %v2208 = vmul.f32 %v2200, %v1867
    %v2209 = vmul.f32 %v2194, %v2201
    %v2210 = vadd.f32 %v2208, %v2209
    %v2211 = vtanh.pop %v2210
    %v2212 = vmul.f32 %v2207, %v2211
    %v2213 = vsel %vm2037, 1, 0
    %2214 = vset.pattern.permute.xlu0 0
    %2215 = vperm.xlu0 %2214, %v2213
    %v2216 = vpop.permute.xlu0 %2215
    %vm2217 = vcmp.eq.s32.totalorder %v2216, 1
    %v2218 = vsel %vm2217, %v2210, %v1867
    %v2219 = vsel %vm2217, %v2212, %v1868
    %2220 = vmatprep.subr.mxu0 %v749
    %2221 = vmatpush1.msra.mxu0 %v748
    %2222 = vmatprep.subr.mxu0 %v745
    %2223 = vmatpush1.msra.mxu0 %v744
    %2224 = vmatprep.subr.mxu0 %v741
    %2225 = vmatpush1.msra.mxu0 %v740
    %2226 = vmatprep.subr.mxu0 %v737
    %2227 = vmatpush1.msra.mxu0 %v736
    %2228 = vmatprep.subr.mxu0 %v733
    %2229 = vmatpush1.msra.mxu0 %v732
    %2230 = vmatprep.subr.mxu0 %v729
    %2231 = vmatpush1.msra.mxu0 %v728
    %2232 = vmatprep.subr.mxu0 %v725
    %2233 = vmatpush1.msra.mxu0 %v724
    %2234 = vmatprep.subr.mxu0 %v721
    %2235 = vmatpush1.msra.mxu0 %v720
    %2236 = vmatprep.subr.mxu0 %v717
    %2237 = vmatpush1.msra.mxu0 %v716
    %2238 = vmatprep.subr.mxu0 %v713
    %2239 = vmatpush1.msra.mxu0 %v712
    %2240 = vmatprep.subr.mxu0 %v709
    %2241 = vmatpush1.msra.mxu0 %v708
    %2242 = vmatprep.subr.mxu0 %v705
    %2243 = vmatpush1.msra.mxu0 %v704
    %2244 = vmatprep.subr.mxu0 %v701
    %2245 = vmatpush1.msra.mxu0 %v700
    %2246 = vmatprep.subr.mxu0 %v697
    %2247 = vmatpush1.msra.mxu0 %v696
    %2248 = vmatprep.subr.mxu0 %v693
    %2249 = vmatpush1.msra.mxu0 %v692
    %2250 = vmatprep.subr.mxu0 %v689
    %2251 = vmatpush1.msra.mxu0 %v688
    %2252 = vmatprep.subr.mxu0 %v813
    %2253 = vmatpush2.msra.mxu0 %v812
    %2254 = vmatprep.subr.mxu0 %v809
    %2255 = vmatpush2.msra.mxu0 %v808
    %2256 = vmatprep.subr.mxu0 %v805
    %2257 = vmatpush2.msra.mxu0 %v804
    %2258 = vmatprep.subr.mxu0 %v801
    %2259 = vmatpush2.msra.mxu0 %v800
    %2260 = vmatprep.subr.mxu0 %v797
    %2261 = vmatpush2.msra.mxu0 %v796
    %2262 = vmatprep.subr.mxu0 %v793
    %2263 = vmatpush2.msra.mxu0 %v792
    %2264 = vmatprep.subr.mxu0 %v789
    %2265 = vmatpush2.msra.mxu0 %v788
    %2266 = vmatprep.subr.mxu0 %v785
    %2267 = vmatpush2.msra.mxu0 %v784
    %2268 = vmatprep.subr.mxu0 %v781
    %2269 = vmatpush2.msra.mxu0 %v780
    %2270 = vmatprep.subr.mxu0 %v777
    %2271 = vmatpush2.msra.mxu0 %v776
    %2272 = vmatprep.subr.mxu0 %v773
    %2273 = vmatpush2.msra.mxu0 %v772
    %2274 = vmatprep.subr.mxu0 %v769
    %2275 = vmatpush2.msra.mxu0 %v768
    %2276 = vmatprep.subr.mxu0 %v765
    %2277 = vmatpush2.msra.mxu0 %v764
    %2278 = vmatprep.subr.mxu0 %v761
    %2279 = vmatpush2.msra.mxu0 %v760
    %2280 = vmatprep.subr.mxu0 %v757
    %2281 = vmatpush2.msra.mxu0 %v756
    %2282 = vmatprep.subr.mxu0 %v753
    %2283 = vmatpush2.msra.mxu0 %v752
    %2284 = vmatprep.mubr.f32.mxu0 %v2036
    %2285 = vmatmul.mubr.f32.gmra.mxu0 %v2219
    %v2286 = vpop.f32.mrf.mxu0
    %v2287 = vadd.f32 %v425, %v2286
    %v2288 = vpop.f32.mrf.mxu0
    %v2289 = vadd.f32 %v429, %v2288
    %2290 = vdwg.mxu0
    %2291 = vmatprep.subr.mxu0 %v751
    %2292 = vmatpush1.msra.mxu0 %v750
    %2293 = vmatprep.subr.mxu0 %v747
    %2294 = vmatpush1.msra.mxu0 %v746
    %2295 = vmatprep.subr.mxu0 %v743
    %2296 = vmatpush1.msra.mxu0 %v742
    %2297 = vmatprep.subr.mxu0 %v739
    %2298 = vmatpush1.msra.mxu0 %v738
    %2299 = vmatprep.subr.mxu0 %v735
    %2300 = vmatpush1.msra.mxu0 %v734
    %2301 = vmatprep.subr.mxu0 %v731
    %2302 = vmatpush1.msra.mxu0 %v730
    %2303 = vmatprep.subr.mxu0 %v727
    %2304 = vmatpush1.msra.mxu0 %v726
    %2305 = vmatprep.subr.mxu0 %v723
    %2306 = vmatpush1.msra.mxu0 %v722
    %2307 = vmatprep.subr.mxu0 %v719
    %2308 = vmatpush1.msra.mxu0 %v718
    %2309 = vmatprep.subr.mxu0 %v715
    %2310 = vmatpush1.msra.mxu0 %v714
    %2311 = vmatprep.subr.mxu0 %v711
    %2312 = vmatpush1.msra.mxu0 %v710
    %2313 = vmatprep.subr.mxu0 %v707
    %2314 = vmatpush1.msra.mxu0 %v706
    %2315 = vmatprep.subr.mxu0 %v703
    %2316 = vmatpush1.msra.mxu0 %v702
    %2317 = vmatprep.subr.mxu0 %v699
    %2318 = vmatpush1.msra.mxu0 %v698
    %2319 = vmatprep.subr.mxu0 %v695
    %2320 = vmatpush1.msra.mxu0 %v694
    %2321 = vmatprep.subr.mxu0 %v691
    %2322 = vmatpush1.msra.mxu0 %v690
    %2323 = vmatprep.subr.mxu0 %v815
    %2324 = vmatpush2.msra.mxu0 %v814
    %2325 = vmatprep.subr.mxu0 %v811
    %2326 = vmatpush2.msra.mxu0 %v810
    %2327 = vmatprep.subr.mxu0 %v807
    %2328 = vmatpush2.msra.mxu0 %v806
    %2329 = vmatprep.subr.mxu0 %v803
    %2330 = vmatpush2.msra.mxu0 %v802
    %2331 = vmatprep.subr.mxu0 %v799
    %2332 = vmatpush2.msra.mxu0 %v798
    %2333 = vmatprep.subr.mxu0 %v795
    %2334 = vmatpush2.msra.mxu0 %v794
    %2335 = vmatprep.subr.mxu0 %v791
    %2336 = vmatpush2.msra.mxu0 %v790
    %2337 = vmatprep.subr.mxu0 %v787
    %2338 = vmatpush2.msra.mxu0 %v786
    %2339 = vmatprep.subr.mxu0 %v783
    %2340 = vmatpush2.msra.mxu0 %v782
    %2341 = vmatprep.subr.mxu0 %v779
    %2342 = vmatpush2.msra.mxu0 %v778
    %2343 = vmatprep.subr.mxu0 %v775
    %2344 = vmatpush2.msra.mxu0 %v774
    %2345 = vmatprep.subr.mxu0 %v771
    %2346 = vmatpush2.msra.mxu0 %v770
    %2347 = vmatprep.subr.mxu0 %v767
    %2348 = vmatpush2.msra.mxu0 %v766
    %2349 = vmatprep.subr.mxu0 %v763
    %2350 = vmatpush2.msra.mxu0 %v762
    %2351 = vmatprep.subr.mxu0 %v759
    %2352 = vmatpush2.msra.mxu0 %v758
    %2353 = vmatprep.subr.mxu0 %v755
    %2354 = vmatpush2.msra.mxu0 %v754
    %2355 = vmatprep.mubr.f32.mxu0 %v2036
    %2356 = vmatmul.mubr.f32.gmra.mxu0 %v2219
    %v2357 = vpop.f32.mrf.mxu0
    %v2358 = vadd.f32 %v433, %v2357
    %v2359 = vpop.f32.mrf.mxu0
    %v2360 = vadd.f32 %v437, %v2359
    %2361 = vdwg.mxu0
    %v2362 = vxor.u32 %v2287, 2147483648
    %v2363 = vmul.f32 %v2362, 1.442695
    %v2364 = vpow.pop %v2363
    %v2365 = vadd.f32 %v2364, 1.0
    %v2366 = vrcp.pop %v2365
    %v2367 = vmul.f32 1.0, %v2366
    %v2368 = vxor.u32 %v2289, 2147483648
    %v2369 = vmul.f32 %v2368, 1.442695
    %v2370 = vpow.pop %v2369
    %v2371 = vadd.f32 %v2370, 1.0
    %v2372 = vrcp.pop %v2371
    %v2373 = vmul.f32 1.0, %v2372
    %v2374 = vtanh.pop %v2358
    %v2375 = vxor.u32 %v2360, 2147483648
    %v2376 = vmul.f32 %v2375, 1.442695
    %v2377 = vpow.pop %v2376
    %v2378 = vadd.f32 %v2377, 1.0
    %v2379 = vrcp.pop %v2378
    %v2380 = vmul.f32 1.0, %v2379
    %v2381 = vmul.f32 %v2373, %v2035
    %v2382 = vmul.f32 %v2367, %v2374
    %v2383 = vadd.f32 %v2381, %v2382
    %v2384 = vtanh.pop %v2383
    %v2385 = vmul.f32 %v2380, %v2384
    %v2386 = vsel %vm2217, %v2383, %v2035
    %v2387 = vsel %vm2217, %v2385, %v2036
    %vm2388 = vcmp.gt.s32.totalorder %v419, 5
    %s2389 = scalar_lea.vmem [#allocation2], 160
    %v2390 = vld [vmem:[%s2389] sm:$0xff]
    %v2391 = vld [vmem:[%s2389 + $0x8] sm:$0xff]
    %v2392 = vld [vmem:[%s2389 + $0x10] sm:$0xff]
    %v2393 = vld [vmem:[%s2389 + $0x18] sm:$0xff]
    %2394 = vmatprep.subr.mxu0 %v508
    %2395 = vmatpush1.msra.mxu0 %v507
    %2396 = vmatprep.subr.mxu0 %v504
    %2397 = vmatpush1.msra.mxu0 %v503
    %2398 = vmatprep.subr.mxu0 %v500
    %2399 = vmatpush1.msra.mxu0 %v499
    %2400 = vmatprep.subr.mxu0 %v496
    %2401 = vmatpush1.msra.mxu0 %v495
    %2402 = vmatprep.subr.mxu0 %v492
    %2403 = vmatpush1.msra.mxu0 %v491
    %2404 = vmatprep.subr.mxu0 %v488
    %2405 = vmatpush1.msra.mxu0 %v487
    %2406 = vmatprep.subr.mxu0 %v484
    %2407 = vmatpush1.msra.mxu0 %v483
    %2408 = vmatprep.subr.mxu0 %v480
    %2409 = vmatpush1.msra.mxu0 %v479
    %2410 = vmatprep.subr.mxu0 %v476
    %2411 = vmatpush1.msra.mxu0 %v475
    %2412 = vmatprep.subr.mxu0 %v472
    %2413 = vmatpush1.msra.mxu0 %v471
    %2414 = vmatprep.subr.mxu0 %v468
    %2415 = vmatpush1.msra.mxu0 %v467
    %2416 = vmatprep.subr.mxu0 %v464
    %2417 = vmatpush1.msra.mxu0 %v463
    %2418 = vmatprep.subr.mxu0 %v460
    %2419 = vmatpush1.msra.mxu0 %v459
    %2420 = vmatprep.subr.mxu0 %v456
    %2421 = vmatpush1.msra.mxu0 %v455
    %2422 = vmatprep.subr.mxu0 %v452
    %2423 = vmatpush1.msra.mxu0 %v451
    %2424 = vmatprep.subr.mxu0 %v448
    %2425 = vmatpush1.msra.mxu0 %v447
    %2426 = vmatprep.subr.mxu0 0.0
    %2427 = vmatpush2.msra.mxu0 0.0
    %2428 = vmatprep.subr.mxu0 0.0
    %2429 = vmatpush2.msra.mxu0 0.0
    %2430 = vmatprep.subr.mxu0 0.0
    %2431 = vmatpush2.msra.mxu0 0.0
    %2432 = vmatprep.subr.mxu0 0.0
    %2433 = vmatpush2.msra.mxu0 0.0
    %2434 = vmatprep.subr.mxu0 0.0
    %2435 = vmatpush2.msra.mxu0 0.0
    %2436 = vmatprep.subr.mxu0 0.0
    %2437 = vmatpush2.msra.mxu0 0.0
    %2438 = vmatprep.subr.mxu0 0.0
    %2439 = vmatpush2.msra.mxu0 0.0
    %2440 = vmatprep.subr.mxu0 0.0
    %2441 = vmatpush2.msra.mxu0 0.0
    %2442 = vmatprep.subr.mxu0 0.0
    %2443 = vmatpush2.msra.mxu0 0.0
    %2444 = vmatprep.subr.mxu0 0.0
    %2445 = vmatpush2.msra.mxu0 0.0
    %2446 = vmatprep.subr.mxu0 0.0
    %2447 = vmatpush2.msra.mxu0 0.0
    %2448 = vmatprep.subr.mxu0 0.0
    %2449 = vmatpush2.msra.mxu0 0.0
    %2450 = vmatprep.subr.mxu0 0.0
    %2451 = vmatpush2.msra.mxu0 0.0
    %2452 = vmatprep.subr.mxu0 0.0
    %2453 = vmatpush2.msra.mxu0 0.0
    %2454 = vmatprep.subr.mxu0 0.0
    %2455 = vmatpush2.msra.mxu0 0.0
    %2456 = vmatprep.subr.mxu0 0.0
    %2457 = vmatpush2.msra.mxu0 0.0
    %2458 = vmatprep.mubr.f32.mxu0 0.0
    %2459 = vmatmul.mubr.f32.gmra.mxu0 %v2219
    %v2460 = vpop.f32.mrf.mxu0
    %v2461 = vadd.f32 0.0, %v2460
    %v2462 = vpop.f32.mrf.mxu0
    %v2463 = vadd.f32 0.0, %v2462
    %2464 = vdwg.mxu0
    %2465 = vmatprep.subr.mxu0 %v510
    %2466 = vmatpush1.msra.mxu0 %v509
    %2467 = vmatprep.subr.mxu0 %v506
    %2468 = vmatpush1.msra.mxu0 %v505
    %2469 = vmatprep.subr.mxu0 %v502
    %2470 = vmatpush1.msra.mxu0 %v501
    %2471 = vmatprep.subr.mxu0 %v498
    %2472 = vmatpush1.msra.mxu0 %v497
    %2473 = vmatprep.subr.mxu0 %v494
    %2474 = vmatpush1.msra.mxu0 %v493
    %2475 = vmatprep.subr.mxu0 %v490
    %2476 = vmatpush1.msra.mxu0 %v489
    %2477 = vmatprep.subr.mxu0 %v486
    %2478 = vmatpush1.msra.mxu0 %v485
    %2479 = vmatprep.subr.mxu0 %v482
    %2480 = vmatpush1.msra.mxu0 %v481
    %2481 = vmatprep.subr.mxu0 %v478
    %2482 = vmatpush1.msra.mxu0 %v477
    %2483 = vmatprep.subr.mxu0 %v474
    %2484 = vmatpush1.msra.mxu0 %v473
    %2485 = vmatprep.subr.mxu0 %v470
    %2486 = vmatpush1.msra.mxu0 %v469
    %2487 = vmatprep.subr.mxu0 %v466
    %2488 = vmatpush1.msra.mxu0 %v465
    %2489 = vmatprep.subr.mxu0 %v462
    %2490 = vmatpush1.msra.mxu0 %v461
    %2491 = vmatprep.subr.mxu0 %v458
    %2492 = vmatpush1.msra.mxu0 %v457
    %2493 = vmatprep.subr.mxu0 %v454
    %2494 = vmatpush1.msra.mxu0 %v453
    %2495 = vmatprep.subr.mxu0 %v450
    %2496 = vmatpush1.msra.mxu0 %v449
    %2497 = vmatprep.subr.mxu0 0.0
    %2498 = vmatpush2.msra.mxu0 0.0
    %2499 = vmatprep.subr.mxu0 0.0
    %2500 = vmatpush2.msra.mxu0 0.0
    %2501 = vmatprep.subr.mxu0 0.0
    %2502 = vmatpush2.msra.mxu0 0.0
    %2503 = vmatprep.subr.mxu0 0.0
    %2504 = vmatpush2.msra.mxu0 0.0
    %2505 = vmatprep.subr.mxu0 0.0
    %2506 = vmatpush2.msra.mxu0 0.0
    %2507 = vmatprep.subr.mxu0 0.0
    %2508 = vmatpush2.msra.mxu0 0.0
    %2509 = vmatprep.subr.mxu0 0.0
    %2510 = vmatpush2.msra.mxu0 0.0
    %2511 = vmatprep.subr.mxu0 0.0
    %2512 = vmatpush2.msra.mxu0 0.0
    %2513 = vmatprep.subr.mxu0 0.0
    %2514 = vmatpush2.msra.mxu0 0.0
    %2515 = vmatprep.subr.mxu0 0.0
    %2516 = vmatpush2.msra.mxu0 0.0
    %2517 = vmatprep.subr.mxu0 0.0
    %2518 = vmatpush2.msra.mxu0 0.0
    %2519 = vmatprep.subr.mxu0 0.0
    %2520 = vmatpush2.msra.mxu0 0.0
    %2521 = vmatprep.subr.mxu0 0.0
    %2522 = vmatpush2.msra.mxu0 0.0
    %2523 = vmatprep.subr.mxu0 0.0
    %2524 = vmatpush2.msra.mxu0 0.0
    %2525 = vmatprep.subr.mxu0 0.0
    %2526 = vmatpush2.msra.mxu0 0.0
    %2527 = vmatprep.subr.mxu0 0.0
    %2528 = vmatpush2.msra.mxu0 0.0
    %2529 = vmatprep.mubr.f32.mxu0 0.0
    %2530 = vmatmul.mubr.f32.gmra.mxu0 %v2219
    %v2531 = vpop.f32.mrf.mxu0
    %v2532 = vadd.f32 0.0, %v2531
    %v2533 = vpop.f32.mrf.mxu0
    %v2534 = vadd.f32 0.0, %v2533
    %2535 = vdwg.mxu0
    %v2536 = vadd.f32 %v2390, %v2461
    %v2537 = vadd.f32 %v2391, %v2463
    %v2538 = vadd.f32 %v2392, %v2532
    %v2539 = vadd.f32 %v2393, %v2534
    %v2540 = vxor.u32 %v2536, 2147483648
    %v2541 = vmul.f32 %v2540, 1.442695
    %v2542 = vpow.pop %v2541
    %v2543 = vadd.f32 %v2542, 1.0
    %v2544 = vrcp.pop %v2543
    %v2545 = vmul.f32 1.0, %v2544
    %v2546 = vxor.u32 %v2537, 2147483648
    %v2547 = vmul.f32 %v2546, 1.442695
    %v2548 = vpow.pop %v2547
    %v2549 = vadd.f32 %v2548, 1.0
    %v2550 = vrcp.pop %v2549
    %v2551 = vmul.f32 1.0, %v2550
    %v2552 = vtanh.pop %v2538
    %v2553 = vxor.u32 %v2539, 2147483648
    %v2554 = vmul.f32 %v2553, 1.442695
    %v2555 = vpow.pop %v2554
    %v2556 = vadd.f32 %v2555, 1.0
    %v2557 = vrcp.pop %v2556
    %v2558 = vmul.f32 1.0, %v2557
    %v2559 = vmul.f32 %v2551, %v2218
    %v2560 = vmul.f32 %v2545, %v2552
    %v2561 = vadd.f32 %v2559, %v2560
    %v2562 = vtanh.pop %v2561
    %v2563 = vmul.f32 %v2558, %v2562
    %v2564 = vsel %vm2388, 1, 0
    %2565 = vset.pattern.permute.xlu0 0
    %2566 = vperm.xlu0 %2565, %v2564
    %v2567 = vpop.permute.xlu0 %2566
    %vm2568 = vcmp.eq.s32.totalorder %v2567, 1
    %v2569 = vsel %vm2568, %v2563, %v2219
    %2570 = vmatprep.subr.mxu0 %v749
    %2571 = vmatpush1.msra.mxu0 %v748
    %2572 = vmatprep.subr.mxu0 %v745
    %2573 = vmatpush1.msra.mxu0 %v744
    %2574 = vmatprep.subr.mxu0 %v741
    %2575 = vmatpush1.msra.mxu0 %v740
    %2576 = vmatprep.subr.mxu0 %v737
    %2577 = vmatpush1.msra.mxu0 %v736
    %2578 = vmatprep.subr.mxu0 %v733
    %2579 = vmatpush1.msra.mxu0 %v732
    %2580 = vmatprep.subr.mxu0 %v729
    %2581 = vmatpush1.msra.mxu0 %v728
    %2582 = vmatprep.subr.mxu0 %v725
    %2583 = vmatpush1.msra.mxu0 %v724
    %2584 = vmatprep.subr.mxu0 %v721
    %2585 = vmatpush1.msra.mxu0 %v720
    %2586 = vmatprep.subr.mxu0 %v717
    %2587 = vmatpush1.msra.mxu0 %v716
    %2588 = vmatprep.subr.mxu0 %v713
    %2589 = vmatpush1.msra.mxu0 %v712
    %2590 = vmatprep.subr.mxu0 %v709
    %2591 = vmatpush1.msra.mxu0 %v708
    %2592 = vmatprep.subr.mxu0 %v705
    %2593 = vmatpush1.msra.mxu0 %v704
    %2594 = vmatprep.subr.mxu0 %v701
    %2595 = vmatpush1.msra.mxu0 %v700
    %2596 = vmatprep.subr.mxu0 %v697
    %2597 = vmatpush1.msra.mxu0 %v696
    %2598 = vmatprep.subr.mxu0 %v693
    %2599 = vmatpush1.msra.mxu0 %v692
    %2600 = vmatprep.subr.mxu0 %v689
    %2601 = vmatpush1.msra.mxu0 %v688
    %2602 = vmatprep.subr.mxu0 %v813
    %2603 = vmatpush2.msra.mxu0 %v812
    %2604 = vmatprep.subr.mxu0 %v809
    %2605 = vmatpush2.msra.mxu0 %v808
    %2606 = vmatprep.subr.mxu0 %v805
    %2607 = vmatpush2.msra.mxu0 %v804
    %2608 = vmatprep.subr.mxu0 %v801
    %2609 = vmatpush2.msra.mxu0 %v800
    %2610 = vmatprep.subr.mxu0 %v797
    %2611 = vmatpush2.msra.mxu0 %v796
    %2612 = vmatprep.subr.mxu0 %v793
    %2613 = vmatpush2.msra.mxu0 %v792
    %2614 = vmatprep.subr.mxu0 %v789
    %2615 = vmatpush2.msra.mxu0 %v788
    %2616 = vmatprep.subr.mxu0 %v785
    %2617 = vmatpush2.msra.mxu0 %v784
    %2618 = vmatprep.subr.mxu0 %v781
    %2619 = vmatpush2.msra.mxu0 %v780
    %2620 = vmatprep.subr.mxu0 %v777
    %2621 = vmatpush2.msra.mxu0 %v776
    %2622 = vmatprep.subr.mxu0 %v773
    %2623 = vmatpush2.msra.mxu0 %v772
    %2624 = vmatprep.subr.mxu0 %v769
    %2625 = vmatpush2.msra.mxu0 %v768
    %2626 = vmatprep.subr.mxu0 %v765
    %2627 = vmatpush2.msra.mxu0 %v764
    %2628 = vmatprep.subr.mxu0 %v761
    %2629 = vmatpush2.msra.mxu0 %v760
    %2630 = vmatprep.subr.mxu0 %v757
    %2631 = vmatpush2.msra.mxu0 %v756
    %2632 = vmatprep.subr.mxu0 %v753
    %2633 = vmatpush2.msra.mxu0 %v752
    %2634 = vmatprep.mubr.f32.mxu0 %v2387
    %2635 = vmatmul.mubr.f32.gmra.mxu0 %v2569
    %v2636 = vpop.f32.mrf.mxu0
    %v2637 = vadd.f32 %v425, %v2636
    %v2638 = vpop.f32.mrf.mxu0
    %v2639 = vadd.f32 %v429, %v2638
    %2640 = vdwg.mxu0
    %2641 = vmatprep.subr.mxu0 %v751
    %2642 = vmatpush1.msra.mxu0 %v750
    %2643 = vmatprep.subr.mxu0 %v747
    %2644 = vmatpush1.msra.mxu0 %v746
    %2645 = vmatprep.subr.mxu0 %v743
    %2646 = vmatpush1.msra.mxu0 %v742
    %2647 = vmatprep.subr.mxu0 %v739
    %2648 = vmatpush1.msra.mxu0 %v738
    %2649 = vmatprep.subr.mxu0 %v735
    %2650 = vmatpush1.msra.mxu0 %v734
    %2651 = vmatprep.subr.mxu0 %v731
    %2652 = vmatpush1.msra.mxu0 %v730
    %2653 = vmatprep.subr.mxu0 %v727
    %2654 = vmatpush1.msra.mxu0 %v726
    %2655 = vmatprep.subr.mxu0 %v723
    %2656 = vmatpush1.msra.mxu0 %v722
    %2657 = vmatprep.subr.mxu0 %v719
    %2658 = vmatpush1.msra.mxu0 %v718
    %2659 = vmatprep.subr.mxu0 %v715
    %2660 = vmatpush1.msra.mxu0 %v714
    %2661 = vmatprep.subr.mxu0 %v711
    %2662 = vmatpush1.msra.mxu0 %v710
    %2663 = vmatprep.subr.mxu0 %v707
    %2664 = vmatpush1.msra.mxu0 %v706
    %2665 = vmatprep.subr.mxu0 %v703
    %2666 = vmatpush1.msra.mxu0 %v702
    %2667 = vmatprep.subr.mxu0 %v699
    %2668 = vmatpush1.msra.mxu0 %v698
    %2669 = vmatprep.subr.mxu0 %v695
    %2670 = vmatpush1.msra.mxu0 %v694
    %2671 = vmatprep.subr.mxu0 %v691
    %2672 = vmatpush1.msra.mxu0 %v690
    %2673 = vmatprep.subr.mxu0 %v815
    %2674 = vmatpush2.msra.mxu0 %v814
    %2675 = vmatprep.subr.mxu0 %v811
    %2676 = vmatpush2.msra.mxu0 %v810
    %2677 = vmatprep.subr.mxu0 %v807
    %2678 = vmatpush2.msra.mxu0 %v806
    %2679 = vmatprep.subr.mxu0 %v803
    %2680 = vmatpush2.msra.mxu0 %v802
    %2681 = vmatprep.subr.mxu0 %v799
    %2682 = vmatpush2.msra.mxu0 %v798
    %2683 = vmatprep.subr.mxu0 %v795
    %2684 = vmatpush2.msra.mxu0 %v794
    %2685 = vmatprep.subr.mxu0 %v791
    %2686 = vmatpush2.msra.mxu0 %v790
    %2687 = vmatprep.subr.mxu0 %v787
    %2688 = vmatpush2.msra.mxu0 %v786
    %2689 = vmatprep.subr.mxu0 %v783
    %2690 = vmatpush2.msra.mxu0 %v782
    %2691 = vmatprep.subr.mxu0 %v779
    %2692 = vmatpush2.msra.mxu0 %v778
    %2693 = vmatprep.subr.mxu0 %v775
    %2694 = vmatpush2.msra.mxu0 %v774
    %2695 = vmatprep.subr.mxu0 %v771
    %2696 = vmatpush2.msra.mxu0 %v770
    %2697 = vmatprep.subr.mxu0 %v767
    %2698 = vmatpush2.msra.mxu0 %v766
    %2699 = vmatprep.subr.mxu0 %v763
    %2700 = vmatpush2.msra.mxu0 %v762
    %2701 = vmatprep.subr.mxu0 %v759
    %2702 = vmatpush2.msra.mxu0 %v758
    %2703 = vmatprep.subr.mxu0 %v755
    %2704 = vmatpush2.msra.mxu0 %v754
    %2705 = vmatprep.mubr.f32.mxu0 %v2387
    %2706 = vmatmul.mubr.f32.gmra.mxu0 %v2569
    %v2707 = vpop.f32.mrf.mxu0
    %v2708 = vadd.f32 %v433, %v2707
    %v2709 = vpop.f32.mrf.mxu0
    %v2710 = vadd.f32 %v437, %v2709
    %2711 = vdwg.mxu0
    %v2712 = vxor.u32 %v2637, 2147483648
    %v2713 = vmul.f32 %v2712, 1.442695
    %v2714 = vpow.pop %v2713
    %v2715 = vadd.f32 %v2714, 1.0
    %v2716 = vrcp.pop %v2715
    %v2717 = vmul.f32 1.0, %v2716
    %v2718 = vxor.u32 %v2639, 2147483648
    %v2719 = vmul.f32 %v2718, 1.442695
    %v2720 = vpow.pop %v2719
    %v2721 = vadd.f32 %v2720, 1.0
    %v2722 = vrcp.pop %v2721
    %v2723 = vmul.f32 1.0, %v2722
    %v2724 = vtanh.pop %v2708
    %v2725 = vxor.u32 %v2710, 2147483648
    %v2726 = vmul.f32 %v2725, 1.442695
    %v2727 = vpow.pop %v2726
    %v2728 = vadd.f32 %v2727, 1.0
    %v2729 = vrcp.pop %v2728
    %v2730 = vmul.f32 1.0, %v2729
    %v2731 = vmul.f32 %v2723, %v2386
    %v2732 = vmul.f32 %v2717, %v2724
    %v2733 = vadd.f32 %v2731, %v2732
    %v2734 = vtanh.pop %v2733
    %v2735 = vmul.f32 %v2730, %v2734
    %v2736 = vsel %vm2568, %v2735, %v2387
    %v2737 = vld [vmem:[#allocation11] sm:$0xff]
    %v2738 = vld [vmem:[#allocation11 + $0x8] sm:$0xff]
    %v2739 = vld [vmem:[#allocation11 + $0x10] sm:$0xff]
    %v2740 = vld [vmem:[#allocation11 + $0x18] sm:$0xff]
    %v2741 = vld [vmem:[#allocation11 + $0x20] sm:$0xff]
    %v2742 = vld [vmem:[#allocation11 + $0x28] sm:$0xff]
    %v2743 = vld [vmem:[#allocation11 + $0x30] sm:$0xff]
    %v2744 = vld [vmem:[#allocation11 + $0x38] sm:$0xff]
    %v2745 = vld [vmem:[#allocation11 + $0x40] sm:$0xff]
    %v2746 = vld [vmem:[#allocation11 + $0x48] sm:$0xff]
    %v2747 = vld [vmem:[#allocation11 + $0x50] sm:$0xff]
    %v2748 = vld [vmem:[#allocation11 + $0x58] sm:$0xff]
    %v2749 = vld [vmem:[#allocation11 + $0x60] sm:$0xff]
    %v2750 = vld [vmem:[#allocation11 + $0x68] sm:$0xff]
    %v2751 = vld [vmem:[#allocation11 + $0x70] sm:$0xff]
    %v2752 = vld [vmem:[#allocation11 + $0x78] sm:$0xff]
    %v2753 = vld [vmem:[%s8] sm:$0x1]
    %v2755 = vlaneseq
    %v2756 = vshrl.u32 %v2755, 7
    %v2757 = vsub.s32 0, %v2756
    %v2758 = vrot.slane %v2753, %v2757
    %2760 = vmatprep.subr.mxu0 0.0
    %2761 = vmatpush1.msra.mxu0 %v2752
    %2762 = vmatprep.subr.mxu0 0.0
    %2763 = vmatpush1.msra.mxu0 %v2751
    %2764 = vmatprep.subr.mxu0 0.0
    %2765 = vmatpush1.msra.mxu0 %v2750
    %2766 = vmatprep.subr.mxu0 0.0
    %2767 = vmatpush1.msra.mxu0 %v2749
    %2768 = vmatprep.subr.mxu0 0.0
    %2769 = vmatpush1.msra.mxu0 %v2748
    %2770 = vmatprep.subr.mxu0 0.0
    %2771 = vmatpush1.msra.mxu0 %v2747
    %2772 = vmatprep.subr.mxu0 0.0
    %2773 = vmatpush1.msra.mxu0 %v2746
    %2774 = vmatprep.subr.mxu0 0.0
    %2775 = vmatpush1.msra.mxu0 %v2745
    %2776 = vmatprep.subr.mxu0 0.0
    %2777 = vmatpush1.msra.mxu0 %v2744
    %2778 = vmatprep.subr.mxu0 0.0
    %2779 = vmatpush1.msra.mxu0 %v2743
    %2780 = vmatprep.subr.mxu0 0.0
    %2781 = vmatpush1.msra.mxu0 %v2742
    %2782 = vmatprep.subr.mxu0 0.0
    %2783 = vmatpush1.msra.mxu0 %v2741
    %2784 = vmatprep.subr.mxu0 0.0
    %2785 = vmatpush1.msra.mxu0 %v2740
    %2786 = vmatprep.subr.mxu0 0.0
    %2787 = vmatpush1.msra.mxu0 %v2739
    %2788 = vmatprep.subr.mxu0 0.0
    %2789 = vmatpush1.msra.mxu0 %v2738
    %2790 = vmatprep.subr.mxu0 0.0
    %2791 = vmatpush1.msra.mxu0 %v2737
    %2792 = vmatprep.subr.mxu0 0.0
    %2793 = vmatpush2.msra.mxu0 0.0
    %2794 = vmatprep.subr.mxu0 0.0
    %2795 = vmatpush2.msra.mxu0 0.0
    %2796 = vmatprep.subr.mxu0 0.0
    %2797 = vmatpush2.msra.mxu0 0.0
    %2798 = vmatprep.subr.mxu0 0.0
    %2799 = vmatpush2.msra.mxu0 0.0
    %2800 = vmatprep.subr.mxu0 0.0
    %2801 = vmatpush2.msra.mxu0 0.0
    %2802 = vmatprep.subr.mxu0 0.0
    %2803 = vmatpush2.msra.mxu0 0.0
    %2804 = vmatprep.subr.mxu0 0.0
    %2805 = vmatpush2.msra.mxu0 0.0
    %2806 = vmatprep.subr.mxu0 0.0
    %2807 = vmatpush2.msra.mxu0 0.0
    %2808 = vmatprep.subr.mxu0 0.0
    %2809 = vmatpush2.msra.mxu0 0.0
    %2810 = vmatprep.subr.mxu0 0.0
    %2811 = vmatpush2.msra.mxu0 0.0
    %2812 = vmatprep.subr.mxu0 0.0
    %2813 = vmatpush2.msra.mxu0 0.0
    %2814 = vmatprep.subr.mxu0 0.0
    %2815 = vmatpush2.msra.mxu0 0.0
    %2816 = vmatprep.subr.mxu0 0.0
    %2817 = vmatpush2.msra.mxu0 0.0
    %2818 = vmatprep.subr.mxu0 0.0
    %2819 = vmatpush2.msra.mxu0 0.0
    %2820 = vmatprep.subr.mxu0 0.0
    %2821 = vmatpush2.msra.mxu0 0.0
    %2822 = vmatprep.subr.mxu0 0.0
    %2823 = vmatpush2.msra.mxu0 0.0
    %2824 = vmatprep.mubr.f32.mxu0 0.0
    %2825 = vmatmul.mubr.f32.gmra.mxu0 %v2736
    %v2826 = vpop.f32.mrf.mxu0
    %v2827 = vadd.f32 %v2758, %v2826
    %v2828 = vpop.f32.mrf.mxu0
    %2829 = vdwg.mxu0
    %2830 = vst [vmem:[#allocation12] sm:$0xff] %v2827
    // Predicated region
    $region58: #{tpu_custom_call.1} parent=1 // pred_check
      _
    $region59: #{tpu_custom_call.1} parent=1 // pred_check_branch
      %2832 = sbr.rel (0) target = $region61
    $region60: #{tpu_custom_call.1} parent=1 // pred_region
      %s2834 = ssub.s32 128, 128
      %2835 = vsyncadd [#allocation5], %s2834
      %s2837 = sshll.u32 [#allocation12], 4
      %s2838 = int_to_ptr.vmem [resolvable:$true] %s2837
      %2840 = dma.vmem_to_hbm [thread:$0]  %s2838, 128, %s9, [#allocation5]
    $region61: #{tpu_custom_call.1} parent=1 // pred_fallthru
      _
    // Predicated region
    $region62: #{tpu_custom_call.1} parent=1 // pred_check
      _
    $region63: #{tpu_custom_call.1} parent=1 // pred_check_branch
      %2842 = sbr.rel (0) target = $region65
    $region64: #{tpu_custom_call.1} parent=1 // pred_region
      %2843 = dma.done [#allocation5], 128
    $region65: #{tpu_custom_call.1} parent=1 // pred_fallthru
      _
    %2844 = vsyncpa [#allocation4], 1
    %2845 = vsyncpa [#allocation7], 1
    %2846 = vsyncpa [#allocation10], 1
    %2847 = vsyncpa [#allocation5], 1

</llo_original>
